<compile_context>
chip_gen: v6e
topology: v6e:2x2x1
jax: 0.10.0
libtpu: 0.0.40
codegen_flags: <defaults>
</compile_context>

<pallas_src>
import functools

import jax
import jax.numpy as jnp
import numpy as np
from jax.experimental import pallas as pl
from jax.experimental.pallas import tpu as pltpu

IN_FEATURES = 201 * 2 * 18          # 7236, fixed by the module
HID = 128
ACTION_HEAD = 8                     # config['action_head']
WITH_SPEED = True                   # config['with_speed']
N_HEADS = ACTION_HEAD + 1           # fused [advantage | value]


def _round_up(x, m):
    return (x + m - 1) // m * m


def _dueling_mlp_kernel(x_ref, speed_ref, w1_ref, b1_ref,
                        wh_ref, ws_ref, bh_ref, out_ref):
    # In-kernel cast: x arrives in HBM dtype (f32 or bf16); cast to bf16 so the
    # big K=7236 matmul runs at native bf16 MXU throughput (f32 accumulation).
    x = x_ref[...].astype(jnp.bfloat16)
    h = jnp.dot(x, w1_ref[...], preferred_element_type=jnp.float32) + b1_ref[...]
    h = jnp.maximum(h, 0.0)                                   # (tb, 128) f32

    # Fused advantage+value head (one small matmul); with_speed concat applied
    # as an exact rank-1 speed term.
    y = jnp.dot(h, wh_ref[...], preferred_element_type=jnp.float32)
    out_ref[...] = y + speed_ref[...] * ws_ref[...] + bh_ref[...]


def prepare_params(params):
    """One-time conversion of module params to kernel-ready arrays.

    Call once (outside the hot path); reuse the result for every forward call.
    """
    w_heads = jnp.concatenate([params["wa"], params["wv"]], axis=1)     # (129, 9)
    return {
        "w1": params["w1"].astype(jnp.bfloat16),                        # (7236, 128)
        "b1": params["b1"].reshape(1, HID).astype(jnp.float32),         # (1, 128)
        "wh": w_heads[:HID].astype(jnp.float32),                        # (128, 9)
        "ws": w_heads[HID:].astype(jnp.float32),                        # (1, 9)  speed row
        "bh": jnp.concatenate([params["ba"], params["bv"]],
                              axis=1).astype(jnp.float32),              # (1, 9)
    }


@functools.partial(jax.jit, static_argnames=("tile_b",))
def multi_input_mlp(x_image, x_speed, kparams, tile_b=512):
    """Pallas forward. x_image: (B, 7236) f32/bf16, x_speed: (B, 1) f32.

    kparams must come from prepare_params(params).
    """
    B = x_image.shape[0]
    # shrink the tile for small batches (keep 8-row sublane alignment)
    tb = min(tile_b, _round_up(max(B, 1), 8))
    grid = (pl.cdiv(B, tb),)        # trailing partial block handled by Pallas

    const = lambda i: (0, 0)
    resident = dict(pipeline_mode=pl.Buffered(1))   # fetched once, stay in VMEM

    y = pl.pallas_call(
        _dueling_mlp_kernel,
        out_shape=jax.ShapeDtypeStruct((B, N_HEADS), jnp.float32),
        grid_spec=pltpu.PrefetchScalarGridSpec(
            num_scalar_prefetch=0,
            grid=grid,
            in_specs=[
                pl.BlockSpec((tb, IN_FEATURES), lambda i: (i, 0)),   # x tile (full K)
                pl.BlockSpec((tb, 1), lambda i: (i, 0)),             # speed tile
                pl.BlockSpec((IN_FEATURES, HID), const, **resident), # w1 (resident)
                pl.BlockSpec((1, HID), const, **resident),           # b1
                pl.BlockSpec((HID, N_HEADS), const, **resident),     # fused head W
                pl.BlockSpec((1, N_HEADS), const, **resident),       # speed row
                pl.BlockSpec((1, N_HEADS), const, **resident),       # fused bias
            ],
            out_specs=pl.BlockSpec((tb, N_HEADS), lambda i: (i, 0)),
        ),
        compiler_params=pltpu.CompilerParams(
            dimension_semantics=("parallel",),
            vmem_limit_bytes=48 * 1024 * 1024,
        ),
    )(x_image, x_speed, kparams["w1"], kparams["b1"],
      kparams["wh"], kparams["ws"], kparams["bh"])

    adv = y[:, :ACTION_HEAD]
    val = y[:, ACTION_HEAD:]
    # global scalar mean (matches torch `advantage.mean()` over batch AND actions);
    # it couples all batch tiles so it stays outside the batch-tiled kernel.
    return val + adv - jnp.mean(adv)


def init_params(key):
    ks = jax.random.split(key, 6)
    hid_full = HID + (1 if WITH_SPEED else 0)   # 129
    return {
        "w1": jax.random.normal(ks[0], (IN_FEATURES, HID), jnp.float32) * 0.02,
        "b1": jax.random.normal(ks[1], (1, HID), jnp.float32) * 0.02,
        "wa": jax.random.normal(ks[2], (hid_full, ACTION_HEAD), jnp.float32) * 0.05,
        "ba": jax.random.normal(ks[3], (1, ACTION_HEAD), jnp.float32) * 0.05,
        "wv": jax.random.normal(ks[4], (hid_full, 1), jnp.float32) * 0.05,
        "bv": jax.random.normal(ks[5], (1, 1), jnp.float32) * 0.05,
    }


def reference(x_image, x_speed, params):
    """Pure-JAX f32 reference matching the torch forward exactly."""
    h = jax.nn.relu(x_image @ params["w1"] + params["b1"])
    f = jnp.concatenate([h, x_speed], axis=1)          # torch.cat(..., dim=1)
    adv = f @ params["wa"] + params["ba"]
    val = f @ params["wv"] + params["bv"]
    return val + adv - jnp.mean(adv)


if __name__ == "__main__":
    key = jax.random.PRNGKey(0)
    k_img, k_spd, k_par = jax.random.split(key, 3)

    B = 2
    x_image = jax.random.normal(k_img, (B, IN_FEATURES), jnp.float32)
    x_speed = jax.random.normal(k_spd, (B, 1), jnp.float32)
    params = init_params(k_par)

    # one-time weight preparation, hoisted out of the per-call path
    kparams = prepare_params(params)
    kparams = jax.tree_util.tree_map(jax.block_until_ready, kparams)

    out = multi_input_mlp(x_image, x_speed, kparams)
    out = jax.block_until_ready(out)

    ref = reference(x_image, x_speed, params)
    # tolerance loosened vs. the f32 reference because the 7236-length dot is
    # done in bf16 (f32 accumulation)
    np.testing.assert_allclose(np.asarray(out), np.asarray(ref),
                               rtol=3e-2, atol=3e-2)
    print("KERNEL_OK")
</pallas_src>

<mosaic_0001>
module attributes {stable_mosaic.version = 11 : i64} {
  func.func @_dueling_mlp_kernel(%arg0: i32, %arg1: memref<8x7236xf32, #tpu.memory_space<vmem>>, %arg2: memref<8x1xf32, #tpu.memory_space<vmem>>, %arg3: memref<7236x128xbf16, #tpu.memory_space<vmem>>, %arg4: memref<1x128xf32, #tpu.memory_space<vmem>>, %arg5: memref<128x9xf32, #tpu.memory_space<vmem>>, %arg6: memref<1x9xf32, #tpu.memory_space<vmem>>, %arg7: memref<1x9xf32, #tpu.memory_space<vmem>>, %arg8: memref<8x9xf32, #tpu.memory_space<vmem>>) attributes {dimension_semantics = [#tpu.dimension_semantics<parallel>], iteration_bounds = array<i64: 1>, scalar_prefetch = 0 : i64, scratch_operands = 0 : i64, tpu.core_type = #tpu.core_type<tc>, window_params = [{transform_indices = @transform_0, window_bounds = array<i64: 8, 7236>}, {transform_indices = @transform_1, window_bounds = array<i64: 8, 1>}, {pipeline_mode = #tpu.pipeline_mode<synchronous>, transform_indices = @transform_2, window_bounds = array<i64: 7236, 128>}, {pipeline_mode = #tpu.pipeline_mode<synchronous>, transform_indices = @transform_3, window_bounds = array<i64: 1, 128>}, {pipeline_mode = #tpu.pipeline_mode<synchronous>, transform_indices = @transform_4, window_bounds = array<i64: 128, 9>}, {pipeline_mode = #tpu.pipeline_mode<synchronous>, transform_indices = @transform_5, window_bounds = array<i64: 1, 9>}, {pipeline_mode = #tpu.pipeline_mode<synchronous>, transform_indices = @transform_6, window_bounds = array<i64: 1, 9>}, {transform_indices = @transform_7, window_bounds = array<i64: 8, 9>}]} {
    %c0 = arith.constant 0 : index
    %c0_0 = arith.constant 0 : index
    %0 = vector.load %arg1[%c0, %c0_0] : memref<8x7236xf32, #tpu.memory_space<vmem>>, vector<8x7236xf32>
    %1 = arith.truncf %0 : vector<8x7236xf32> to vector<8x7236xbf16>
    %c0_1 = arith.constant 0 : index
    %c0_2 = arith.constant 0 : index
    %2 = vector.load %arg3[%c0_1, %c0_2] : memref<7236x128xbf16, #tpu.memory_space<vmem>>, vector<7236x128xbf16>
    %cst = arith.constant dense<0.000000e+00> : vector<8x128xf32>
    %3 = tpu.matmul %1, %2, %cst {dimension_numbers = #tpu.dot_dimension_numbers<[1], [0], [0], [1], [0, 0, 1, 1], [], []>} : vector<8x7236xbf16>, vector<7236x128xbf16>, vector<8x128xf32> -> vector<8x128xf32>
    %c0_3 = arith.constant 0 : index
    %c0_4 = arith.constant 0 : index
    %4 = vector.load %arg4[%c0_3, %c0_4] : memref<1x128xf32, #tpu.memory_space<vmem>>, vector<1x128xf32>
    %5 = vector.broadcast %4 : vector<1x128xf32> to vector<8x128xf32>
    %6 = arith.addf %3, %5 : vector<8x128xf32>
    %cst_5 = arith.constant 0.000000e+00 : f32
    %7 = vector.broadcast %cst_5 : f32 to vector<8x128xf32>
    %8 = arith.maximumf %6, %7 : vector<8x128xf32>
    %c0_6 = arith.constant 0 : index
    %c0_7 = arith.constant 0 : index
    %9 = vector.load %arg5[%c0_6, %c0_7] : memref<128x9xf32, #tpu.memory_space<vmem>>, vector<128x9xf32>
    %cst_8 = arith.constant dense<0.000000e+00> : vector<8x9xf32>
    %10 = tpu.matmul %8, %9, %cst_8 {dimension_numbers = #tpu.dot_dimension_numbers<[1], [0], [0], [1], [0, 0, 1, 1], [], []>} : vector<8x128xf32>, vector<128x9xf32>, vector<8x9xf32> -> vector<8x9xf32>
    %c0_9 = arith.constant 0 : index
    %c0_10 = arith.constant 0 : index
    %11 = vector.load %arg2[%c0_9, %c0_10] : memref<8x1xf32, #tpu.memory_space<vmem>>, vector<8x1xf32>
    %c0_11 = arith.constant 0 : index
    %c0_12 = arith.constant 0 : index
    %12 = vector.load %arg6[%c0_11, %c0_12] : memref<1x9xf32, #tpu.memory_space<vmem>>, vector<1x9xf32>
    %13 = vector.broadcast %11 : vector<8x1xf32> to vector<8x9xf32>
    %14 = vector.broadcast %12 : vector<1x9xf32> to vector<8x9xf32>
    %15 = arith.mulf %13, %14 : vector<8x9xf32>
    %16 = arith.addf %10, %15 : vector<8x9xf32>
    %c0_13 = arith.constant 0 : index
    %c0_14 = arith.constant 0 : index
    %17 = vector.load %arg7[%c0_13, %c0_14] : memref<1x9xf32, #tpu.memory_space<vmem>>, vector<1x9xf32>
    %18 = vector.broadcast %17 : vector<1x9xf32> to vector<8x9xf32>
    %19 = arith.addf %16, %18 : vector<8x9xf32>
    %c0_15 = arith.constant 0 : index
    %c0_16 = arith.constant 0 : index
    %20 = vector.load %arg8[%c0_15, %c0_16] : memref<8x9xf32, #tpu.memory_space<vmem>>, vector<8x9xf32>
    tpu.vector_store %arg8[%c0_15, %c0_16], %19 {strides = array<i32>} : memref<8x9xf32, #tpu.memory_space<vmem>>, vector<8x9xf32>,
    return
  }
  func.func @transform_0(%arg0: i32) -> (i32, i32) {
    %c0_i32 = arith.constant 0 : i32
    %c0_i32_0 = arith.constant 0 : i32
    return %arg0, %c0_i32 : i32, i32
  }
  func.func @transform_1(%arg0: i32) -> (i32, i32) {
    %c0_i32 = arith.constant 0 : i32
    %c0_i32_0 = arith.constant 0 : i32
    return %arg0, %c0_i32 : i32, i32
  }
  func.func @transform_2(%arg0: i32) -> (i32, i32) {
    %c0_i32 = arith.constant 0 : i32
    %c0_i32_0 = arith.constant 0 : i32
    %c0_i32_1 = arith.constant 0 : i32
    return %c0_i32, %c0_i32_0 : i32, i32
  }
  func.func @transform_3(%arg0: i32) -> (i32, i32) {
    %c0_i32 = arith.constant 0 : i32
    %c0_i32_0 = arith.constant 0 : i32
    %c0_i32_1 = arith.constant 0 : i32
    return %c0_i32, %c0_i32_0 : i32, i32
  }
  func.func @transform_4(%arg0: i32) -> (i32, i32) {
    %c0_i32 = arith.constant 0 : i32
    %c0_i32_0 = arith.constant 0 : i32
    %c0_i32_1 = arith.constant 0 : i32
    return %c0_i32, %c0_i32_0 : i32, i32
  }
  func.func @transform_5(%arg0: i32) -> (i32, i32) {
    %c0_i32 = arith.constant 0 : i32
    %c0_i32_0 = arith.constant 0 : i32
    %c0_i32_1 = arith.constant 0 : i32
    return %c0_i32, %c0_i32_0 : i32, i32
  }
  func.func @transform_6(%arg0: i32) -> (i32, i32) {
    %c0_i32 = arith.constant 0 : i32
    %c0_i32_0 = arith.constant 0 : i32
    %c0_i32_1 = arith.constant 0 : i32
    return %c0_i32, %c0_i32_0 : i32, i32
  }
  func.func @transform_7(%arg0: i32) -> (i32, i32) {
    %c0_i32 = arith.constant 0 : i32
    %c0_i32_0 = arith.constant 0 : i32
    return %arg0, %c0_i32 : i32, i32
  }
}

</mosaic_0001>

<llo_original>
// kernel: multi_input_mlp.1
$region0: #{multi_input_mlp.1}
  #allocation0 [shape = 'u32[]', space=smem, size = 0x4, offset = 0x4, fixed_abs, tag = 'smem constant byte address 0x4 - core index']
  #allocation1 [shape = 'u32[144,128]{1,0:T(1,128)}', space=vmem, size = 0x12000, scoped, tag = 'internal scratch']
  %s0 = inlined_call_operand.hbm [shape: f32[2,7236], index: 0, kind: input, shape index: {}]
  %s1 = inlined_call_operand.vmem [shape: f32[2,1], index: 1, kind: input, shape index: {}]
  %s2 = inlined_call_operand.hbm [shape: bf16[7236,128], index: 2, kind: input, shape index: {}]
  %s3 = inlined_call_operand.hbm [shape: f32[1,128], index: 3, kind: input, shape index: {}]
  %s4 = inlined_call_operand.vmem [shape: f32[128,9], index: 4, kind: input, shape index: {}]
  %s5 = inlined_call_operand.hbm [shape: f32[1,9], index: 5, kind: input, shape index: {}]
  %s6 = inlined_call_operand.hbm [shape: f32[1,9], index: 6, kind: input, shape index: {}]
  %s7 = inlined_call_operand.vmem [shape: f32[2,9], index: 7, kind: output, shape index: {}]
  %s8 = sld [smem:[#allocation0]]
  $region88: #{multi_input_mlp.1} parent=0
    _
  %s10 = ssub.s32 1, %s8
  %s11 = scalar_select 0, %s10, %s8
  $region1: #{multi_input_mlp.1} parent=0
    #allocation2 [shape = 'u8[233472]{0}', space=vmem, size = 0x39000, scoped, tag = 'input window, operand 0, single buffered']
    #allocation3 [shape = 's32[1]{0}', space=sflag, size = 0x4, scoped, tag = 'scoped memory for multi_input_mlp.1']
    #allocation4 [shape = 'u8[1853440]{0}', space=vmem, size = 0x1c4800, scoped, tag = 'input window, operand 2, single buffered']
    #allocation5 [shape = 's32[1]{0}', space=sflag, size = 0x4, scoped, tag = 'scoped memory for multi_input_mlp.1']
    #allocation6 [shape = 'u8[512]{0}', space=vmem, size = 0x400, scoped, tag = 'input window, operand 3, single buffered']
    #allocation7 [shape = 'u8[512]{0}', space=vmem, size = 0x400, scoped, tag = 'input window, operand 5, single buffered']
    #allocation8 [shape = 's32[1]{0}', space=sflag, size = 0x4, scoped, tag = 'scoped memory for multi_input_mlp.1']
    #allocation9 [shape = 'u8[512]{0}', space=vmem, size = 0x400, scoped, tag = 'input window, operand 6, single buffered']
    #allocation10 [shape = 'u8[4096]{0}', space=vmem, size = 0x1000, scoped, tag = 'output window, operand 0, single buffered']
    %12 = vsyncpa [#allocation3], 0
    %13 = vsyncpa [#allocation5], 0
    %14 = vsyncpa [#allocation8], 0
    // Predicated region
    $region2: #{multi_input_mlp.1} parent=1 // pred_check
      _
    $region3: #{multi_input_mlp.1} parent=1 // pred_check_branch
      %16 = sbr.rel (0) target = $region5
    $region4: #{multi_input_mlp.1} parent=1 // pred_region
      %s18 = ssub.s32 7296, 1824
      %19 = vsyncadd [#allocation3], %s18
      %s20 = sshll.u32 [#allocation2], 4
      %s21 = int_to_ptr.vmem [resolvable:$true] %s20
      %26 = dma.hbm_to_vmem [thread:$0]  %s0, 1824, %s21, [#allocation3], 1824, 1824, 114
    $region5: #{multi_input_mlp.1} parent=1 // pred_fallthru
      _
    // Predicated region
    $region6: #{multi_input_mlp.1} parent=1 // pred_check
      _
    $region7: #{multi_input_mlp.1} parent=1 // pred_check_branch
      %28 = sbr.rel (0) target = $region9
    $region8: #{multi_input_mlp.1} parent=1 // pred_region
      _
    $region9: #{multi_input_mlp.1} parent=1 // pred_fallthru
      _
    // Predicated region
    $region10: #{multi_input_mlp.1} parent=1 // pred_check
      _
    $region11: #{multi_input_mlp.1} parent=1 // pred_check_branch
      %30 = sbr.rel (0) target = $region13
    $region12: #{multi_input_mlp.1} parent=1 // pred_region
      %s32 = ssub.s32 57920, 57920
      %33 = vsyncadd [#allocation5], %s32
      %s34 = sshll.u32 [#allocation4], 4
      %s35 = int_to_ptr.vmem [resolvable:$true] %s34
      %40 = dma.hbm_to_vmem [thread:$0]  %s2, 57920, %s35, [#allocation5], 64, 64, 4
    $region13: #{multi_input_mlp.1} parent=1 // pred_fallthru
      _
    // Predicated region
    $region14: #{multi_input_mlp.1} parent=1 // pred_check
      _
    $region15: #{multi_input_mlp.1} parent=1 // pred_check_branch
      %42 = sbr.rel (0) target = $region17
    $region16: #{multi_input_mlp.1} parent=1 // pred_region
      %s44 = ssub.s32 16, 16
      %45 = vsyncadd [#allocation5], %s44
      %s47 = sshll.u32 [#allocation6], 4
      %s48 = int_to_ptr.vmem [resolvable:$true] %s47
      %50 = dma.hbm_to_vmem [thread:$0]  %s3, 16, %s48, [#allocation5]
    $region17: #{multi_input_mlp.1} parent=1 // pred_fallthru
      _
    // Predicated region
    $region18: #{multi_input_mlp.1} parent=1 // pred_check
      _
    $region19: #{multi_input_mlp.1} parent=1 // pred_check_branch
      %52 = sbr.rel (0) target = $region21
    $region20: #{multi_input_mlp.1} parent=1 // pred_region
      _
    $region21: #{multi_input_mlp.1} parent=1 // pred_fallthru
      _
    // Predicated region
    $region22: #{multi_input_mlp.1} parent=1 // pred_check
      _
    $region23: #{multi_input_mlp.1} parent=1 // pred_check_branch
      %54 = sbr.rel (0) target = $region25
    $region24: #{multi_input_mlp.1} parent=1 // pred_region
      %s56 = ssub.s32 16, 16
      %57 = vsyncadd [#allocation8], %s56
      %s59 = sshll.u32 [#allocation7], 4
      %s60 = int_to_ptr.vmem [resolvable:$true] %s59
      %62 = dma.hbm_to_vmem [thread:$0]  %s5, 16, %s60, [#allocation8]
    $region25: #{multi_input_mlp.1} parent=1 // pred_fallthru
      _
    // Predicated region
    $region26: #{multi_input_mlp.1} parent=1 // pred_check
      _
    $region27: #{multi_input_mlp.1} parent=1 // pred_check_branch
      %64 = sbr.rel (0) target = $region29
    $region28: #{multi_input_mlp.1} parent=1 // pred_region
      %s66 = ssub.s32 16, 16
      %67 = vsyncadd [#allocation8], %s66
      %s69 = sshll.u32 [#allocation9], 4
      %s70 = int_to_ptr.vmem [resolvable:$true] %s69
      %72 = dma.hbm_to_vmem [thread:$0]  %s6, 16, %s70, [#allocation8]
    $region29: #{multi_input_mlp.1} parent=1 // pred_fallthru
      _
    // Predicated region
    $region30: #{multi_input_mlp.1} parent=1 // pred_check
      _
    $region31: #{multi_input_mlp.1} parent=1 // pred_check_branch
      %74 = sbr.rel (0) target = $region33
    $region32: #{multi_input_mlp.1} parent=1 // pred_region
      %75 = dma.done [#allocation3], 7296
    $region33: #{multi_input_mlp.1} parent=1 // pred_fallthru
      _
    // Predicated region
    $region34: #{multi_input_mlp.1} parent=1 // pred_check
      _
    $region35: #{multi_input_mlp.1} parent=1 // pred_check_branch
      %77 = sbr.rel (0) target = $region37
    $region36: #{multi_input_mlp.1} parent=1 // pred_region
      %78 = dma.done [#allocation5], 57920
    $region37: #{multi_input_mlp.1} parent=1 // pred_fallthru
      _
    // Predicated region
    $region38: #{multi_input_mlp.1} parent=1 // pred_check
      _
    $region39: #{multi_input_mlp.1} parent=1 // pred_check_branch
      %80 = sbr.rel (0) target = $region41
    $region40: #{multi_input_mlp.1} parent=1 // pred_region
      %81 = dma.done [#allocation5], 16
    $region41: #{multi_input_mlp.1} parent=1 // pred_fallthru
      _
    // Predicated region
    $region42: #{multi_input_mlp.1} parent=1 // pred_check
      _
    $region43: #{multi_input_mlp.1} parent=1 // pred_check_branch
      %83 = sbr.rel (0) target = $region45
    $region44: #{multi_input_mlp.1} parent=1 // pred_region
      %84 = dma.done [#allocation8], 16
    $region45: #{multi_input_mlp.1} parent=1 // pred_fallthru
      _
    // Predicated region
    $region46: #{multi_input_mlp.1} parent=1 // pred_check
      _
    $region47: #{multi_input_mlp.1} parent=1 // pred_check_branch
      %86 = sbr.rel (0) target = $region49
    $region48: #{multi_input_mlp.1} parent=1 // pred_region
      %87 = dma.done [#allocation8], 16
    $region49: #{multi_input_mlp.1} parent=1 // pred_fallthru
      _
    %v89 = vld [vmem:[#allocation2] sm:$0xff]
    %v90 = vld [vmem:[#allocation2 + $0x8] sm:$0xff]
    %v91 = vld [vmem:[#allocation2 + $0x10] sm:$0xff]
    %v92 = vld [vmem:[#allocation2 + $0x18] sm:$0xff]
    %v93 = vld [vmem:[#allocation2 + $0x20] sm:$0xff]
    %v94 = vld [vmem:[#allocation2 + $0x28] sm:$0xff]
    %v95 = vld [vmem:[#allocation2 + $0x30] sm:$0xff]
    %v96 = vld [vmem:[#allocation2 + $0x38] sm:$0xff]
    %v97 = vld [vmem:[#allocation2 + $0x40] sm:$0xff]
    %v98 = vld [vmem:[#allocation2 + $0x48] sm:$0xff]
    %v99 = vld [vmem:[#allocation2 + $0x50] sm:$0xff]
    %v100 = vld [vmem:[#allocation2 + $0x58] sm:$0xff]
    %v101 = vld [vmem:[#allocation2 + $0x60] sm:$0xff]
    %v102 = vld [vmem:[#allocation2 + $0x68] sm:$0xff]
    %v103 = vld [vmem:[#allocation2 + $0x70] sm:$0x3]
    %v104 = vld [vmem:[#allocation2 + $0x72] sm:$0xff]
    %v105 = vld [vmem:[#allocation2 + $0x7a] sm:$0xff]
    %v106 = vld [vmem:[#allocation2 + $0x82] sm:$0xff]
    %v107 = vld [vmem:[#allocation2 + $0x8a] sm:$0xff]
    %v108 = vld [vmem:[#allocation2 + $0x92] sm:$0xff]
    %v109 = vld [vmem:[#allocation2 + $0x9a] sm:$0xff]
    %v110 = vld [vmem:[#allocation2 + $0xa2] sm:$0xff]
    %v111 = vld [vmem:[#allocation2 + $0xaa] sm:$0xff]
    %v112 = vld [vmem:[#allocation2 + $0xb2] sm:$0xff]
    %v113 = vld [vmem:[#allocation2 + $0xba] sm:$0xff]
    %v114 = vld [vmem:[#allocation2 + $0xc2] sm:$0xff]
    %v115 = vld [vmem:[#allocation2 + $0xca] sm:$0xff]
    %v116 = vld [vmem:[#allocation2 + $0xd2] sm:$0xff]
    %v117 = vld [vmem:[#allocation2 + $0xda] sm:$0xff]
    %v118 = vld [vmem:[#allocation2 + $0xe2] sm:$0x3]
    %v119 = vld [vmem:[#allocation2 + $0xe4] sm:$0xff]
    %v120 = vld [vmem:[#allocation2 + $0xec] sm:$0xff]
    %v121 = vld [vmem:[#allocation2 + $0xf4] sm:$0xff]
    %v122 = vld [vmem:[#allocation2 + $0xfc] sm:$0xff]
    %v123 = vld [vmem:[#allocation2 + $0x104] sm:$0xff]
    %v124 = vld [vmem:[#allocation2 + $0x10c] sm:$0xff]
    %v125 = vld [vmem:[#allocation2 + $0x114] sm:$0xff]
    %v126 = vld [vmem:[#allocation2 + $0x11c] sm:$0xff]
    %v127 = vld [vmem:[#allocation2 + $0x124] sm:$0xff]
    %v128 = vld [vmem:[#allocation2 + $0x12c] sm:$0xff]
    %v129 = vld [vmem:[#allocation2 + $0x134] sm:$0xff]
    %v130 = vld [vmem:[#allocation2 + $0x13c] sm:$0xff]
    %v131 = vld [vmem:[#allocation2 + $0x144] sm:$0xff]
    %v132 = vld [vmem:[#allocation2 + $0x14c] sm:$0xff]
    %v133 = vld [vmem:[#allocation2 + $0x154] sm:$0x3]
    %v134 = vld [vmem:[#allocation2 + $0x156] sm:$0xff]
    %v135 = vld [vmem:[#allocation2 + $0x15e] sm:$0xff]
    %v136 = vld [vmem:[#allocation2 + $0x166] sm:$0xff]
    %v137 = vld [vmem:[#allocation2 + $0x16e] sm:$0xff]
    %v138 = vld [vmem:[#allocation2 + $0x176] sm:$0xff]
    %v139 = vld [vmem:[#allocation2 + $0x17e] sm:$0xff]
    %v140 = vld [vmem:[#allocation2 + $0x186] sm:$0xff]
    %v141 = vld [vmem:[#allocation2 + $0x18e] sm:$0xff]
    %v142 = vld [vmem:[#allocation2 + $0x196] sm:$0xff]
    %v143 = vld [vmem:[#allocation2 + $0x19e] sm:$0xff]
    %v144 = vld [vmem:[#allocation2 + $0x1a6] sm:$0xff]
    %v145 = vld [vmem:[#allocation2 + $0x1ae] sm:$0xff]
    %v146 = vld [vmem:[#allocation2 + $0x1b6] sm:$0xff]
    %v147 = vld [vmem:[#allocation2 + $0x1be] sm:$0xff]
    %v148 = vld [vmem:[#allocation2 + $0x1c6] sm:$0x3]
    %v209 = vcombine.low %v89, %v104
    %v210 = vcombine.high %v89, %v104
    %v211 = vcombine.low %v119, %v134
    %v212 = vcombine.high %v119, %v134
    %v214 = vunpack.c.l.s4 1983009808
    %v215 = vunpack.c.0.s8 %v214
    %v216 = vlaneseq
    %v217 = vshrl.u32 %v216, 7
    %v218 = vsub.s32 %v215, %v217
    %v219 = vrot.slane %v209, %v218
    %v221 = vunpack.c.l.s4 1983009808
    %v222 = vunpack.c.0.s8 %v221
    %v223 = vlaneseq
    %v224 = vshrl.u32 %v223, 7
    %v225 = vsub.s32 %v222, %v224
    %v226 = vrot.slane %v210, %v225
    %v228 = vunpack.c.l.s4 1983009808
    %v229 = vunpack.c.0.s8 %v228
    %v230 = vlaneseq
    %v231 = vshrl.u32 %v230, 7
    %v232 = vsub.s32 %v229, %v231
    %v233 = vrot.slane %v211, %v232
    %v235 = vunpack.c.l.s4 1983009808
    %v236 = vunpack.c.0.s8 %v235
    %v237 = vlaneseq
    %v238 = vshrl.u32 %v237, 7
    %v239 = vsub.s32 %v236, %v238
    %v240 = vrot.slane %v212, %v239
    %v241 = vcombine.low %v219, %v233
    %v242 = vcombine.high %v219, %v233
    %v243 = vcombine.low %v226, %v240
    %v244 = vcombine.high %v226, %v240
    %v245 = vcombine.low %v90, %v105
    %v246 = vcombine.high %v90, %v105
    %v247 = vcombine.low %v120, %v135
    %v248 = vcombine.high %v120, %v135
    %v250 = vunpack.c.l.s4 1983009808
    %v251 = vunpack.c.0.s8 %v250
    %v252 = vlaneseq
    %v253 = vshrl.u32 %v252, 7
    %v254 = vsub.s32 %v251, %v253
    %v255 = vrot.slane %v245, %v254
    %v257 = vunpack.c.l.s4 1983009808
    %v258 = vunpack.c.0.s8 %v257
    %v259 = vlaneseq
    %v260 = vshrl.u32 %v259, 7
    %v261 = vsub.s32 %v258, %v260
    %v262 = vrot.slane %v246, %v261
    %v264 = vunpack.c.l.s4 1983009808
    %v265 = vunpack.c.0.s8 %v264
    %v266 = vlaneseq
    %v267 = vshrl.u32 %v266, 7
    %v268 = vsub.s32 %v265, %v267
    %v269 = vrot.slane %v247, %v268
    %v271 = vunpack.c.l.s4 1983009808
    %v272 = vunpack.c.0.s8 %v271
    %v273 = vlaneseq
    %v274 = vshrl.u32 %v273, 7
    %v275 = vsub.s32 %v272, %v274
    %v276 = vrot.slane %v248, %v275
    %v277 = vcombine.low %v255, %v269
    %v278 = vcombine.high %v255, %v269
    %v279 = vcombine.low %v262, %v276
    %v280 = vcombine.high %v262, %v276
    %v281 = vcombine.low %v91, %v106
    %v282 = vcombine.high %v91, %v106
    %v283 = vcombine.low %v121, %v136
    %v284 = vcombine.high %v121, %v136
    %v286 = vunpack.c.l.s4 1983009808
    %v287 = vunpack.c.0.s8 %v286
    %v288 = vlaneseq
    %v289 = vshrl.u32 %v288, 7
    %v290 = vsub.s32 %v287, %v289
    %v291 = vrot.slane %v281, %v290
    %v293 = vunpack.c.l.s4 1983009808
    %v294 = vunpack.c.0.s8 %v293
    %v295 = vlaneseq
    %v296 = vshrl.u32 %v295, 7
    %v297 = vsub.s32 %v294, %v296
    %v298 = vrot.slane %v282, %v297
    %v300 = vunpack.c.l.s4 1983009808
    %v301 = vunpack.c.0.s8 %v300
    %v302 = vlaneseq
    %v303 = vshrl.u32 %v302, 7
    %v304 = vsub.s32 %v301, %v303
    %v305 = vrot.slane %v283, %v304
    %v307 = vunpack.c.l.s4 1983009808
    %v308 = vunpack.c.0.s8 %v307
    %v309 = vlaneseq
    %v310 = vshrl.u32 %v309, 7
    %v311 = vsub.s32 %v308, %v310
    %v312 = vrot.slane %v284, %v311
    %v313 = vcombine.low %v291, %v305
    %v314 = vcombine.high %v291, %v305
    %v315 = vcombine.low %v298, %v312
    %v316 = vcombine.high %v298, %v312
    %v317 = vcombine.low %v92, %v107
    %v318 = vcombine.high %v92, %v107
    %v319 = vcombine.low %v122, %v137
    %v320 = vcombine.high %v122, %v137
    %v322 = vunpack.c.l.s4 1983009808
    %v323 = vunpack.c.0.s8 %v322
    %v324 = vlaneseq
    %v325 = vshrl.u32 %v324, 7
    %v326 = vsub.s32 %v323, %v325
    %v327 = vrot.slane %v317, %v326
    %v329 = vunpack.c.l.s4 1983009808
    %v330 = vunpack.c.0.s8 %v329
    %v331 = vlaneseq
    %v332 = vshrl.u32 %v331, 7
    %v333 = vsub.s32 %v330, %v332
    %v334 = vrot.slane %v318, %v333
    %v336 = vunpack.c.l.s4 1983009808
    %v337 = vunpack.c.0.s8 %v336
    %v338 = vlaneseq
    %v339 = vshrl.u32 %v338, 7
    %v340 = vsub.s32 %v337, %v339
    %v341 = vrot.slane %v319, %v340
    %v343 = vunpack.c.l.s4 1983009808
    %v344 = vunpack.c.0.s8 %v343
    %v345 = vlaneseq
    %v346 = vshrl.u32 %v345, 7
    %v347 = vsub.s32 %v344, %v346
    %v348 = vrot.slane %v320, %v347
    %v349 = vcombine.low %v327, %v341
    %v350 = vcombine.high %v327, %v341
    %v351 = vcombine.low %v334, %v348
    %v352 = vcombine.high %v334, %v348
    %v353 = vcombine.low %v93, %v108
    %v354 = vcombine.high %v93, %v108
    %v355 = vcombine.low %v123, %v138
    %v356 = vcombine.high %v123, %v138
    %v358 = vunpack.c.l.s4 1983009808
    %v359 = vunpack.c.0.s8 %v358
    %v360 = vlaneseq
    %v361 = vshrl.u32 %v360, 7
    %v362 = vsub.s32 %v359, %v361
    %v363 = vrot.slane %v353, %v362
    %v365 = vunpack.c.l.s4 1983009808
    %v366 = vunpack.c.0.s8 %v365
    %v367 = vlaneseq
    %v368 = vshrl.u32 %v367, 7
    %v369 = vsub.s32 %v366, %v368
    %v370 = vrot.slane %v354, %v369
    %v372 = vunpack.c.l.s4 1983009808
    %v373 = vunpack.c.0.s8 %v372
    %v374 = vlaneseq
    %v375 = vshrl.u32 %v374, 7
    %v376 = vsub.s32 %v373, %v375
    %v377 = vrot.slane %v355, %v376
    %v379 = vunpack.c.l.s4 1983009808
    %v380 = vunpack.c.0.s8 %v379
    %v381 = vlaneseq
    %v382 = vshrl.u32 %v381, 7
    %v383 = vsub.s32 %v380, %v382
    %v384 = vrot.slane %v356, %v383
    %v385 = vcombine.low %v363, %v377
    %v386 = vcombine.high %v363, %v377
    %v387 = vcombine.low %v370, %v384
    %v388 = vcombine.high %v370, %v384
    %v389 = vcombine.low %v94, %v109
    %v390 = vcombine.high %v94, %v109
    %v391 = vcombine.low %v124, %v139
    %v392 = vcombine.high %v124, %v139
    %v394 = vunpack.c.l.s4 1983009808
    %v395 = vunpack.c.0.s8 %v394
    %v396 = vlaneseq
    %v397 = vshrl.u32 %v396, 7
    %v398 = vsub.s32 %v395, %v397
    %v399 = vrot.slane %v389, %v398
    %v401 = vunpack.c.l.s4 1983009808
    %v402 = vunpack.c.0.s8 %v401
    %v403 = vlaneseq
    %v404 = vshrl.u32 %v403, 7
    %v405 = vsub.s32 %v402, %v404
    %v406 = vrot.slane %v390, %v405
    %v408 = vunpack.c.l.s4 1983009808
    %v409 = vunpack.c.0.s8 %v408
    %v410 = vlaneseq
    %v411 = vshrl.u32 %v410, 7
    %v412 = vsub.s32 %v409, %v411
    %v413 = vrot.slane %v391, %v412
    %v415 = vunpack.c.l.s4 1983009808
    %v416 = vunpack.c.0.s8 %v415
    %v417 = vlaneseq
    %v418 = vshrl.u32 %v417, 7
    %v419 = vsub.s32 %v416, %v418
    %v420 = vrot.slane %v392, %v419
    %v421 = vcombine.low %v399, %v413
    %v422 = vcombine.high %v399, %v413
    %v423 = vcombine.low %v406, %v420
    %v424 = vcombine.high %v406, %v420
    %v425 = vcombine.low %v95, %v110
    %v426 = vcombine.high %v95, %v110
    %v427 = vcombine.low %v125, %v140
    %v428 = vcombine.high %v125, %v140
    %v430 = vunpack.c.l.s4 1983009808
    %v431 = vunpack.c.0.s8 %v430
    %v432 = vlaneseq
    %v433 = vshrl.u32 %v432, 7
    %v434 = vsub.s32 %v431, %v433
    %v435 = vrot.slane %v425, %v434
    %v437 = vunpack.c.l.s4 1983009808
    %v438 = vunpack.c.0.s8 %v437
    %v439 = vlaneseq
    %v440 = vshrl.u32 %v439, 7
    %v441 = vsub.s32 %v438, %v440
    %v442 = vrot.slane %v426, %v441
    %v444 = vunpack.c.l.s4 1983009808
    %v445 = vunpack.c.0.s8 %v444
    %v446 = vlaneseq
    %v447 = vshrl.u32 %v446, 7
    %v448 = vsub.s32 %v445, %v447
    %v449 = vrot.slane %v427, %v448
    %v451 = vunpack.c.l.s4 1983009808
    %v452 = vunpack.c.0.s8 %v451
    %v453 = vlaneseq
    %v454 = vshrl.u32 %v453, 7
    %v455 = vsub.s32 %v452, %v454
    %v456 = vrot.slane %v428, %v455
    %v457 = vcombine.low %v435, %v449
    %v458 = vcombine.high %v435, %v449
    %v459 = vcombine.low %v442, %v456
    %v460 = vcombine.high %v442, %v456
    %v461 = vcombine.low %v96, %v111
    %v462 = vcombine.high %v96, %v111
    %v463 = vcombine.low %v126, %v141
    %v464 = vcombine.high %v126, %v141
    %v466 = vunpack.c.l.s4 1983009808
    %v467 = vunpack.c.0.s8 %v466
    %v468 = vlaneseq
    %v469 = vshrl.u32 %v468, 7
    %v470 = vsub.s32 %v467, %v469
    %v471 = vrot.slane %v461, %v470
    %v473 = vunpack.c.l.s4 1983009808
    %v474 = vunpack.c.0.s8 %v473
    %v475 = vlaneseq
    %v476 = vshrl.u32 %v475, 7
    %v477 = vsub.s32 %v474, %v476
    %v478 = vrot.slane %v462, %v477
    %v480 = vunpack.c.l.s4 1983009808
    %v481 = vunpack.c.0.s8 %v480
    %v482 = vlaneseq
    %v483 = vshrl.u32 %v482, 7
    %v484 = vsub.s32 %v481, %v483
    %v485 = vrot.slane %v463, %v484
    %v487 = vunpack.c.l.s4 1983009808
    %v488 = vunpack.c.0.s8 %v487
    %v489 = vlaneseq
    %v490 = vshrl.u32 %v489, 7
    %v491 = vsub.s32 %v488, %v490
    %v492 = vrot.slane %v464, %v491
    %v493 = vcombine.low %v471, %v485
    %v494 = vcombine.high %v471, %v485
    %v495 = vcombine.low %v478, %v492
    %v496 = vcombine.high %v478, %v492
    %v497 = vcombine.low %v97, %v112
    %v498 = vcombine.high %v97, %v112
    %v499 = vcombine.low %v127, %v142
    %v500 = vcombine.high %v127, %v142
    %v502 = vunpack.c.l.s4 1983009808
    %v503 = vunpack.c.0.s8 %v502
    %v504 = vlaneseq
    %v505 = vshrl.u32 %v504, 7
    %v506 = vsub.s32 %v503, %v505
    %v507 = vrot.slane %v497, %v506
    %v509 = vunpack.c.l.s4 1983009808
    %v510 = vunpack.c.0.s8 %v509
    %v511 = vlaneseq
    %v512 = vshrl.u32 %v511, 7
    %v513 = vsub.s32 %v510, %v512
    %v514 = vrot.slane %v498, %v513
    %v516 = vunpack.c.l.s4 1983009808
    %v517 = vunpack.c.0.s8 %v516
    %v518 = vlaneseq
    %v519 = vshrl.u32 %v518, 7
    %v520 = vsub.s32 %v517, %v519
    %v521 = vrot.slane %v499, %v520
    %v523 = vunpack.c.l.s4 1983009808
    %v524 = vunpack.c.0.s8 %v523
    %v525 = vlaneseq
    %v526 = vshrl.u32 %v525, 7
    %v527 = vsub.s32 %v524, %v526
    %v528 = vrot.slane %v500, %v527
    %v529 = vcombine.low %v507, %v521
    %v530 = vcombine.high %v507, %v521
    %v531 = vcombine.low %v514, %v528
    %v532 = vcombine.high %v514, %v528
    %v533 = vcombine.low %v98, %v113
    %v534 = vcombine.high %v98, %v113
    %v535 = vcombine.low %v128, %v143
    %v536 = vcombine.high %v128, %v143
    %v538 = vunpack.c.l.s4 1983009808
    %v539 = vunpack.c.0.s8 %v538
    %v540 = vlaneseq
    %v541 = vshrl.u32 %v540, 7
    %v542 = vsub.s32 %v539, %v541
    %v543 = vrot.slane %v533, %v542
    %v545 = vunpack.c.l.s4 1983009808
    %v546 = vunpack.c.0.s8 %v545
    %v547 = vlaneseq
    %v548 = vshrl.u32 %v547, 7
    %v549 = vsub.s32 %v546, %v548
    %v550 = vrot.slane %v534, %v549
    %v552 = vunpack.c.l.s4 1983009808
    %v553 = vunpack.c.0.s8 %v552
    %v554 = vlaneseq
    %v555 = vshrl.u32 %v554, 7
    %v556 = vsub.s32 %v553, %v555
    %v557 = vrot.slane %v535, %v556
    %v559 = vunpack.c.l.s4 1983009808
    %v560 = vunpack.c.0.s8 %v559
    %v561 = vlaneseq
    %v562 = vshrl.u32 %v561, 7
    %v563 = vsub.s32 %v560, %v562
    %v564 = vrot.slane %v536, %v563
    %v565 = vcombine.low %v543, %v557
    %v566 = vcombine.high %v543, %v557
    %v567 = vcombine.low %v550, %v564
    %v568 = vcombine.high %v550, %v564
    %v569 = vcombine.low %v99, %v114
    %v570 = vcombine.high %v99, %v114
    %v571 = vcombine.low %v129, %v144
    %v572 = vcombine.high %v129, %v144
    %v574 = vunpack.c.l.s4 1983009808
    %v575 = vunpack.c.0.s8 %v574
    %v576 = vlaneseq
    %v577 = vshrl.u32 %v576, 7
    %v578 = vsub.s32 %v575, %v577
    %v579 = vrot.slane %v569, %v578
    %v581 = vunpack.c.l.s4 1983009808
    %v582 = vunpack.c.0.s8 %v581
    %v583 = vlaneseq
    %v584 = vshrl.u32 %v583, 7
    %v585 = vsub.s32 %v582, %v584
    %v586 = vrot.slane %v570, %v585
    %v588 = vunpack.c.l.s4 1983009808
    %v589 = vunpack.c.0.s8 %v588
    %v590 = vlaneseq
    %v591 = vshrl.u32 %v590, 7
    %v592 = vsub.s32 %v589, %v591
    %v593 = vrot.slane %v571, %v592
    %v595 = vunpack.c.l.s4 1983009808
    %v596 = vunpack.c.0.s8 %v595
    %v597 = vlaneseq
    %v598 = vshrl.u32 %v597, 7
    %v599 = vsub.s32 %v596, %v598
    %v600 = vrot.slane %v572, %v599
    %v601 = vcombine.low %v579, %v593
    %v602 = vcombine.high %v579, %v593
    %v603 = vcombine.low %v586, %v600
    %v604 = vcombine.high %v586, %v600
    %v605 = vcombine.low %v100, %v115
    %v606 = vcombine.high %v100, %v115
    %v607 = vcombine.low %v130, %v145
    %v608 = vcombine.high %v130, %v145
    %v610 = vunpack.c.l.s4 1983009808
    %v611 = vunpack.c.0.s8 %v610
    %v612 = vlaneseq
    %v613 = vshrl.u32 %v612, 7
    %v614 = vsub.s32 %v611, %v613
    %v615 = vrot.slane %v605, %v614
    %v617 = vunpack.c.l.s4 1983009808
    %v618 = vunpack.c.0.s8 %v617
    %v619 = vlaneseq
    %v620 = vshrl.u32 %v619, 7
    %v621 = vsub.s32 %v618, %v620
    %v622 = vrot.slane %v606, %v621
    %v624 = vunpack.c.l.s4 1983009808
    %v625 = vunpack.c.0.s8 %v624
    %v626 = vlaneseq
    %v627 = vshrl.u32 %v626, 7
    %v628 = vsub.s32 %v625, %v627
    %v629 = vrot.slane %v607, %v628
    %v631 = vunpack.c.l.s4 1983009808
    %v632 = vunpack.c.0.s8 %v631
    %v633 = vlaneseq
    %v634 = vshrl.u32 %v633, 7
    %v635 = vsub.s32 %v632, %v634
    %v636 = vrot.slane %v608, %v635
    %v637 = vcombine.low %v615, %v629
    %v638 = vcombine.high %v615, %v629
    %v639 = vcombine.low %v622, %v636
    %v640 = vcombine.high %v622, %v636
    %v641 = vcombine.low %v101, %v116
    %v642 = vcombine.high %v101, %v116
    %v643 = vcombine.low %v131, %v146
    %v644 = vcombine.high %v131, %v146
    %v646 = vunpack.c.l.s4 1983009808
    %v647 = vunpack.c.0.s8 %v646
    %v648 = vlaneseq
    %v649 = vshrl.u32 %v648, 7
    %v650 = vsub.s32 %v647, %v649
    %v651 = vrot.slane %v641, %v650
    %v653 = vunpack.c.l.s4 1983009808
    %v654 = vunpack.c.0.s8 %v653
    %v655 = vlaneseq
    %v656 = vshrl.u32 %v655, 7
    %v657 = vsub.s32 %v654, %v656
    %v658 = vrot.slane %v642, %v657
    %v660 = vunpack.c.l.s4 1983009808
    %v661 = vunpack.c.0.s8 %v660
    %v662 = vlaneseq
    %v663 = vshrl.u32 %v662, 7
    %v664 = vsub.s32 %v661, %v663
    %v665 = vrot.slane %v643, %v664
    %v667 = vunpack.c.l.s4 1983009808
    %v668 = vunpack.c.0.s8 %v667
    %v669 = vlaneseq
    %v670 = vshrl.u32 %v669, 7
    %v671 = vsub.s32 %v668, %v670
    %v672 = vrot.slane %v644, %v671
    %v673 = vcombine.low %v651, %v665
    %v674 = vcombine.high %v651, %v665
    %v675 = vcombine.low %v658, %v672
    %v676 = vcombine.high %v658, %v672
    %v677 = vcombine.low %v102, %v117
    %v678 = vcombine.high %v102, %v117
    %v679 = vcombine.low %v132, %v147
    %v680 = vcombine.high %v132, %v147
    %v682 = vunpack.c.l.s4 1983009808
    %v683 = vunpack.c.0.s8 %v682
    %v684 = vlaneseq
    %v685 = vshrl.u32 %v684, 7
    %v686 = vsub.s32 %v683, %v685
    %v687 = vrot.slane %v677, %v686
    %v689 = vunpack.c.l.s4 1983009808
    %v690 = vunpack.c.0.s8 %v689
    %v691 = vlaneseq
    %v692 = vshrl.u32 %v691, 7
    %v693 = vsub.s32 %v690, %v692
    %v694 = vrot.slane %v678, %v693
    %v696 = vunpack.c.l.s4 1983009808
    %v697 = vunpack.c.0.s8 %v696
    %v698 = vlaneseq
    %v699 = vshrl.u32 %v698, 7
    %v700 = vsub.s32 %v697, %v699
    %v701 = vrot.slane %v679, %v700
    %v703 = vunpack.c.l.s4 1983009808
    %v704 = vunpack.c.0.s8 %v703
    %v705 = vlaneseq
    %v706 = vshrl.u32 %v705, 7
    %v707 = vsub.s32 %v704, %v706
    %v708 = vrot.slane %v680, %v707
    %v709 = vcombine.low %v687, %v701
    %v710 = vcombine.high %v687, %v701
    %v711 = vcombine.low %v694, %v708
    %v712 = vcombine.high %v694, %v708
    %v713 = vcombine.low %v103, %v118
    %v714 = vcombine.low %v133, %v148
    %v716 = vunpack.c.l.s4 1983009808
    %v717 = vunpack.c.0.s8 %v716
    %v718 = vlaneseq
    %v719 = vshrl.u32 %v718, 7
    %v720 = vsub.s32 %v717, %v719
    %v721 = vrot.slane %v713, %v720
    %v723 = vunpack.c.l.s4 1983009808
    %v724 = vunpack.c.0.s8 %v723
    %v725 = vlaneseq
    %v726 = vshrl.u32 %v725, 7
    %v727 = vsub.s32 %v724, %v726
    %v728 = vrot.slane %v714, %v727
    %v729 = vcombine.low %v721, %v728
    %v787 = vpack.c.bf16 %v241, %v241
    %v788 = vpack.c.bf16 %v242, %v242
    %v789 = vpack.c.bf16 %v243, %v243
    %v790 = vpack.c.bf16 %v244, %v244
    %v791 = vpack.c.bf16 %v277, %v277
    %v792 = vpack.c.bf16 %v278, %v278
    %v793 = vpack.c.bf16 %v279, %v279
    %v794 = vpack.c.bf16 %v280, %v280
    %v795 = vpack.c.bf16 %v313, %v313
    %v796 = vpack.c.bf16 %v314, %v314
    %v797 = vpack.c.bf16 %v315, %v315
    %v798 = vpack.c.bf16 %v316, %v316
    %v799 = vpack.c.bf16 %v349, %v349
    %v800 = vpack.c.bf16 %v350, %v350
    %v801 = vpack.c.bf16 %v351, %v351
    %v802 = vpack.c.bf16 %v352, %v352
    %v803 = vpack.c.bf16 %v385, %v385
    %v804 = vpack.c.bf16 %v386, %v386
    %v805 = vpack.c.bf16 %v387, %v387
    %v806 = vpack.c.bf16 %v388, %v388
    %v807 = vpack.c.bf16 %v421, %v421
    %v808 = vpack.c.bf16 %v422, %v422
    %v809 = vpack.c.bf16 %v423, %v423
    %v810 = vpack.c.bf16 %v424, %v424
    %v811 = vpack.c.bf16 %v457, %v457
    %v812 = vpack.c.bf16 %v458, %v458
    %v813 = vpack.c.bf16 %v459, %v459
    %v814 = vpack.c.bf16 %v460, %v460
    %v815 = vpack.c.bf16 %v493, %v493
    %v816 = vpack.c.bf16 %v494, %v494
    %v817 = vpack.c.bf16 %v495, %v495
    %v818 = vpack.c.bf16 %v496, %v496
    %v819 = vpack.c.bf16 %v529, %v529
    %v820 = vpack.c.bf16 %v530, %v530
    %v821 = vpack.c.bf16 %v531, %v531
    %v822 = vpack.c.bf16 %v532, %v532
    %v823 = vpack.c.bf16 %v565, %v565
    %v824 = vpack.c.bf16 %v566, %v566
    %v825 = vpack.c.bf16 %v567, %v567
    %v826 = vpack.c.bf16 %v568, %v568
    %v827 = vpack.c.bf16 %v601, %v601
    %v828 = vpack.c.bf16 %v602, %v602
    %v829 = vpack.c.bf16 %v603, %v603
    %v830 = vpack.c.bf16 %v604, %v604
    %v831 = vpack.c.bf16 %v637, %v637
    %v832 = vpack.c.bf16 %v638, %v638
    %v833 = vpack.c.bf16 %v639, %v639
    %v834 = vpack.c.bf16 %v640, %v640
    %v835 = vpack.c.bf16 %v673, %v673
    %v836 = vpack.c.bf16 %v674, %v674
    %v837 = vpack.c.bf16 %v675, %v675
    %v838 = vpack.c.bf16 %v676, %v676
    %v839 = vpack.c.bf16 %v709, %v709
    %v840 = vpack.c.bf16 %v710, %v710
    %v841 = vpack.c.bf16 %v711, %v711
    %v842 = vpack.c.bf16 %v712, %v712
    %v843 = vpack.c.bf16 %v729, %v729
    %v844 = vld [vmem:[#allocation4] sm:$0xf]
    %v845 = vld [vmem:[#allocation4 + $0x4] sm:$0xf]
    %v846 = vld [vmem:[#allocation4 + $0x8] sm:$0xf]
    %v847 = vld [vmem:[#allocation4 + $0xc] sm:$0xf]
    %v848 = vld [vmem:[#allocation4 + $0x10] sm:$0xf]
    %v849 = vld [vmem:[#allocation4 + $0x14] sm:$0xf]
    %v850 = vld [vmem:[#allocation4 + $0x18] sm:$0xf]
    %v851 = vld [vmem:[#allocation4 + $0x1c] sm:$0xf]
    %v852 = vld [vmem:[#allocation4 + $0x20] sm:$0xf]
    %v853 = vld [vmem:[#allocation4 + $0x24] sm:$0xf]
    %v854 = vld [vmem:[#allocation4 + $0x28] sm:$0xf]
    %v855 = vld [vmem:[#allocation4 + $0x2c] sm:$0xf]
    %v856 = vld [vmem:[#allocation4 + $0x30] sm:$0xf]
    %v857 = vld [vmem:[#allocation4 + $0x34] sm:$0xf]
    %v858 = vld [vmem:[#allocation4 + $0x38] sm:$0xf]
    %v859 = vld [vmem:[#allocation4 + $0x3c] sm:$0xf]
    %v860 = vld [vmem:[#allocation4 + $0x40] sm:$0xf]
    %v861 = vld [vmem:[#allocation4 + $0x44] sm:$0xf]
    %v862 = vld [vmem:[#allocation4 + $0x48] sm:$0xf]
    %v863 = vld [vmem:[#allocation4 + $0x4c] sm:$0xf]
    %v864 = vld [vmem:[#allocation4 + $0x50] sm:$0xf]
    %v865 = vld [vmem:[#allocation4 + $0x54] sm:$0xf]
    %v866 = vld [vmem:[#allocation4 + $0x58] sm:$0xf]
    %v867 = vld [vmem:[#allocation4 + $0x5c] sm:$0xf]
    %v868 = vld [vmem:[#allocation4 + $0x60] sm:$0xf]
    %v869 = vld [vmem:[#allocation4 + $0x64] sm:$0xf]
    %v870 = vld [vmem:[#allocation4 + $0x68] sm:$0xf]
    %v871 = vld [vmem:[#allocation4 + $0x6c] sm:$0xf]
    %v872 = vld [vmem:[#allocation4 + $0x70] sm:$0xf]
    %v873 = vld [vmem:[#allocation4 + $0x74] sm:$0xf]
    %v874 = vld [vmem:[#allocation4 + $0x78] sm:$0xf]
    %v875 = vld [vmem:[#allocation4 + $0x7c] sm:$0xf]
    %v876 = vld [vmem:[#allocation4 + $0x80] sm:$0xf]
    %v877 = vld [vmem:[#allocation4 + $0x84] sm:$0xf]
    %v878 = vld [vmem:[#allocation4 + $0x88] sm:$0xf]
    %v879 = vld [vmem:[#allocation4 + $0x8c] sm:$0xf]
    %v880 = vld [vmem:[#allocation4 + $0x90] sm:$0xf]
    %v881 = vld [vmem:[#allocation4 + $0x94] sm:$0xf]
    %v882 = vld [vmem:[#allocation4 + $0x98] sm:$0xf]
    %v883 = vld [vmem:[#allocation4 + $0x9c] sm:$0xf]
    %v884 = vld [vmem:[#allocation4 + $0xa0] sm:$0xf]
    %v885 = vld [vmem:[#allocation4 + $0xa4] sm:$0xf]
    %v886 = vld [vmem:[#allocation4 + $0xa8] sm:$0xf]
    %v887 = vld [vmem:[#allocation4 + $0xac] sm:$0xf]
    %v888 = vld [vmem:[#allocation4 + $0xb0] sm:$0xf]
    %v889 = vld [vmem:[#allocation4 + $0xb4] sm:$0xf]
    %v890 = vld [vmem:[#allocation4 + $0xb8] sm:$0xf]
    %v891 = vld [vmem:[#allocation4 + $0xbc] sm:$0xf]
    %v892 = vld [vmem:[#allocation4 + $0xc0] sm:$0xf]
    %v893 = vld [vmem:[#allocation4 + $0xc4] sm:$0xf]
    %v894 = vld [vmem:[#allocation4 + $0xc8] sm:$0xf]
    %v895 = vld [vmem:[#allocation4 + $0xcc] sm:$0xf]
    %v896 = vld [vmem:[#allocation4 + $0xd0] sm:$0xf]
    %v897 = vld [vmem:[#allocation4 + $0xd4] sm:$0xf]
    %v898 = vld [vmem:[#allocation4 + $0xd8] sm:$0xf]
    %v899 = vld [vmem:[#allocation4 + $0xdc] sm:$0xf]
    %v900 = vld [vmem:[#allocation4 + $0xe0] sm:$0xf]
    %v901 = vld [vmem:[#allocation4 + $0xe4] sm:$0xf]
    %v902 = vld [vmem:[#allocation4 + $0xe8] sm:$0xf]
    %v903 = vld [vmem:[#allocation4 + $0xec] sm:$0xf]
    %v904 = vld [vmem:[#allocation4 + $0xf0] sm:$0xf]
    %v905 = vld [vmem:[#allocation4 + $0xf4] sm:$0xf]
    %v906 = vld [vmem:[#allocation4 + $0xf8] sm:$0xf]
    %v907 = vld [vmem:[#allocation4 + $0xfc] sm:$0xf]
    %v908 = vld [vmem:[#allocation4 + $0x100] sm:$0xf]
    %v909 = vld [vmem:[#allocation4 + $0x104] sm:$0xf]
    %v910 = vld [vmem:[#allocation4 + $0x108] sm:$0xf]
    %v911 = vld [vmem:[#allocation4 + $0x10c] sm:$0xf]
    %v912 = vld [vmem:[#allocation4 + $0x110] sm:$0xf]
    %v913 = vld [vmem:[#allocation4 + $0x114] sm:$0xf]
    %v914 = vld [vmem:[#allocation4 + $0x118] sm:$0xf]
    %v915 = vld [vmem:[#allocation4 + $0x11c] sm:$0xf]
    %v916 = vld [vmem:[#allocation4 + $0x120] sm:$0xf]
    %v917 = vld [vmem:[#allocation4 + $0x124] sm:$0xf]
    %v918 = vld [vmem:[#allocation4 + $0x128] sm:$0xf]
    %v919 = vld [vmem:[#allocation4 + $0x12c] sm:$0xf]
    %v920 = vld [vmem:[#allocation4 + $0x130] sm:$0xf]
    %v921 = vld [vmem:[#allocation4 + $0x134] sm:$0xf]
    %v922 = vld [vmem:[#allocation4 + $0x138] sm:$0xf]
    %v923 = vld [vmem:[#allocation4 + $0x13c] sm:$0xf]
    %v924 = vld [vmem:[#allocation4 + $0x140] sm:$0xf]
    %v925 = vld [vmem:[#allocation4 + $0x144] sm:$0xf]
    %v926 = vld [vmem:[#allocation4 + $0x148] sm:$0xf]
    %v927 = vld [vmem:[#allocation4 + $0x14c] sm:$0xf]
    %v928 = vld [vmem:[#allocation4 + $0x150] sm:$0xf]
    %v929 = vld [vmem:[#allocation4 + $0x154] sm:$0xf]
    %v930 = vld [vmem:[#allocation4 + $0x158] sm:$0xf]
    %v931 = vld [vmem:[#allocation4 + $0x15c] sm:$0xf]
    %v932 = vld [vmem:[#allocation4 + $0x160] sm:$0xf]
    %v933 = vld [vmem:[#allocation4 + $0x164] sm:$0xf]
    %v934 = vld [vmem:[#allocation4 + $0x168] sm:$0xf]
    %v935 = vld [vmem:[#allocation4 + $0x16c] sm:$0xf]
    %v936 = vld [vmem:[#allocation4 + $0x170] sm:$0xf]
    %v937 = vld [vmem:[#allocation4 + $0x174] sm:$0xf]
    %v938 = vld [vmem:[#allocation4 + $0x178] sm:$0xf]
    %v939 = vld [vmem:[#allocation4 + $0x17c] sm:$0xf]
    %v940 = vld [vmem:[#allocation4 + $0x180] sm:$0xf]
    %v941 = vld [vmem:[#allocation4 + $0x184] sm:$0xf]
    %v942 = vld [vmem:[#allocation4 + $0x188] sm:$0xf]
    %v943 = vld [vmem:[#allocation4 + $0x18c] sm:$0xf]
    %v944 = vld [vmem:[#allocation4 + $0x190] sm:$0xf]
    %v945 = vld [vmem:[#allocation4 + $0x194] sm:$0xf]
    %v946 = vld [vmem:[#allocation4 + $0x198] sm:$0xf]
    %v947 = vld [vmem:[#allocation4 + $0x19c] sm:$0xf]
    %v948 = vld [vmem:[#allocation4 + $0x1a0] sm:$0xf]
    %v949 = vld [vmem:[#allocation4 + $0x1a4] sm:$0xf]
    %v950 = vld [vmem:[#allocation4 + $0x1a8] sm:$0xf]
    %v951 = vld [vmem:[#allocation4 + $0x1ac] sm:$0xf]
    %v952 = vld [vmem:[#allocation4 + $0x1b0] sm:$0xf]
    %v953 = vld [vmem:[#allocation4 + $0x1b4] sm:$0xf]
    %v954 = vld [vmem:[#allocation4 + $0x1b8] sm:$0xf]
    %v955 = vld [vmem:[#allocation4 + $0x1bc] sm:$0xf]
    %v956 = vld [vmem:[#allocation4 + $0x1c0] sm:$0xf]
    %v957 = vld [vmem:[#allocation4 + $0x1c4] sm:$0xf]
    %v958 = vld [vmem:[#allocation4 + $0x1c8] sm:$0xf]
    %v959 = vld [vmem:[#allocation4 + $0x1cc] sm:$0xf]
    %v960 = vld [vmem:[#allocation4 + $0x1d0] sm:$0xf]
    %v961 = vld [vmem:[#allocation4 + $0x1d4] sm:$0xf]
    %v962 = vld [vmem:[#allocation4 + $0x1d8] sm:$0xf]
    %v963 = vld [vmem:[#allocation4 + $0x1dc] sm:$0xf]
    %v964 = vld [vmem:[#allocation4 + $0x1e0] sm:$0xf]
    %v965 = vld [vmem:[#allocation4 + $0x1e4] sm:$0xf]
    %v966 = vld [vmem:[#allocation4 + $0x1e8] sm:$0xf]
    %v967 = vld [vmem:[#allocation4 + $0x1ec] sm:$0xf]
    %v968 = vld [vmem:[#allocation4 + $0x1f0] sm:$0xf]
    %v969 = vld [vmem:[#allocation4 + $0x1f4] sm:$0xf]
    %v970 = vld [vmem:[#allocation4 + $0x1f8] sm:$0xf]
    %v971 = vld [vmem:[#allocation4 + $0x1fc] sm:$0xf]
    %v972 = vld [vmem:[#allocation4 + $0x200] sm:$0xf]
    %v973 = vld [vmem:[#allocation4 + $0x204] sm:$0xf]
    %v974 = vld [vmem:[#allocation4 + $0x208] sm:$0xf]
    %v975 = vld [vmem:[#allocation4 + $0x20c] sm:$0xf]
    %v976 = vld [vmem:[#allocation4 + $0x210] sm:$0xf]
    %v977 = vld [vmem:[#allocation4 + $0x214] sm:$0xf]
    %v978 = vld [vmem:[#allocation4 + $0x218] sm:$0xf]
    %v979 = vld [vmem:[#allocation4 + $0x21c] sm:$0xf]
    %v980 = vld [vmem:[#allocation4 + $0x220] sm:$0xf]
    %v981 = vld [vmem:[#allocation4 + $0x224] sm:$0xf]
    %v982 = vld [vmem:[#allocation4 + $0x228] sm:$0xf]
    %v983 = vld [vmem:[#allocation4 + $0x22c] sm:$0xf]
    %v984 = vld [vmem:[#allocation4 + $0x230] sm:$0xf]
    %v985 = vld [vmem:[#allocation4 + $0x234] sm:$0xf]
    %v986 = vld [vmem:[#allocation4 + $0x238] sm:$0xf]
    %v987 = vld [vmem:[#allocation4 + $0x23c] sm:$0xf]
    %v988 = vld [vmem:[#allocation4 + $0x240] sm:$0xf]
    %v989 = vld [vmem:[#allocation4 + $0x244] sm:$0xf]
    %v990 = vld [vmem:[#allocation4 + $0x248] sm:$0xf]
    %v991 = vld [vmem:[#allocation4 + $0x24c] sm:$0xf]
    %v992 = vld [vmem:[#allocation4 + $0x250] sm:$0xf]
    %v993 = vld [vmem:[#allocation4 + $0x254] sm:$0xf]
    %v994 = vld [vmem:[#allocation4 + $0x258] sm:$0xf]
    %v995 = vld [vmem:[#allocation4 + $0x25c] sm:$0xf]
    %v996 = vld [vmem:[#allocation4 + $0x260] sm:$0xf]
    %v997 = vld [vmem:[#allocation4 + $0x264] sm:$0xf]
    %v998 = vld [vmem:[#allocation4 + $0x268] sm:$0xf]
    %v999 = vld [vmem:[#allocation4 + $0x26c] sm:$0xf]
    %v1000 = vld [vmem:[#allocation4 + $0x270] sm:$0xf]
    %v1001 = vld [vmem:[#allocation4 + $0x274] sm:$0xf]
    %v1002 = vld [vmem:[#allocation4 + $0x278] sm:$0xf]
    %v1003 = vld [vmem:[#allocation4 + $0x27c] sm:$0xf]
    %v1004 = vld [vmem:[#allocation4 + $0x280] sm:$0xf]
    %v1005 = vld [vmem:[#allocation4 + $0x284] sm:$0xf]
    %v1006 = vld [vmem:[#allocation4 + $0x288] sm:$0xf]
    %v1007 = vld [vmem:[#allocation4 + $0x28c] sm:$0xf]
    %v1008 = vld [vmem:[#allocation4 + $0x290] sm:$0xf]
    %v1009 = vld [vmem:[#allocation4 + $0x294] sm:$0xf]
    %v1010 = vld [vmem:[#allocation4 + $0x298] sm:$0xf]
    %v1011 = vld [vmem:[#allocation4 + $0x29c] sm:$0xf]
    %v1012 = vld [vmem:[#allocation4 + $0x2a0] sm:$0xf]
    %v1013 = vld [vmem:[#allocation4 + $0x2a4] sm:$0xf]
    %v1014 = vld [vmem:[#allocation4 + $0x2a8] sm:$0xf]
    %v1015 = vld [vmem:[#allocation4 + $0x2ac] sm:$0xf]
    %v1016 = vld [vmem:[#allocation4 + $0x2b0] sm:$0xf]
    %v1017 = vld [vmem:[#allocation4 + $0x2b4] sm:$0xf]
    %v1018 = vld [vmem:[#allocation4 + $0x2b8] sm:$0xf]
    %v1019 = vld [vmem:[#allocation4 + $0x2bc] sm:$0xf]
    %v1020 = vld [vmem:[#allocation4 + $0x2c0] sm:$0xf]
    %v1021 = vld [vmem:[#allocation4 + $0x2c4] sm:$0xf]
    %v1022 = vld [vmem:[#allocation4 + $0x2c8] sm:$0xf]
    %v1023 = vld [vmem:[#allocation4 + $0x2cc] sm:$0xf]
    %v1024 = vld [vmem:[#allocation4 + $0x2d0] sm:$0xf]
    %v1025 = vld [vmem:[#allocation4 + $0x2d4] sm:$0xf]
    %v1026 = vld [vmem:[#allocation4 + $0x2d8] sm:$0xf]
    %v1027 = vld [vmem:[#allocation4 + $0x2dc] sm:$0xf]
    %v1028 = vld [vmem:[#allocation4 + $0x2e0] sm:$0xf]
    %v1029 = vld [vmem:[#allocation4 + $0x2e4] sm:$0xf]
    %v1030 = vld [vmem:[#allocation4 + $0x2e8] sm:$0xf]
    %v1031 = vld [vmem:[#allocation4 + $0x2ec] sm:$0xf]
    %v1032 = vld [vmem:[#allocation4 + $0x2f0] sm:$0xf]
    %v1033 = vld [vmem:[#allocation4 + $0x2f4] sm:$0xf]
    %v1034 = vld [vmem:[#allocation4 + $0x2f8] sm:$0xf]
    %v1035 = vld [vmem:[#allocation4 + $0x2fc] sm:$0xf]
    %v1036 = vld [vmem:[#allocation4 + $0x300] sm:$0xf]
    %v1037 = vld [vmem:[#allocation4 + $0x304] sm:$0xf]
    %v1038 = vld [vmem:[#allocation4 + $0x308] sm:$0xf]
    %v1039 = vld [vmem:[#allocation4 + $0x30c] sm:$0xf]
    %v1040 = vld [vmem:[#allocation4 + $0x310] sm:$0xf]
    %v1041 = vld [vmem:[#allocation4 + $0x314] sm:$0xf]
    %v1042 = vld [vmem:[#allocation4 + $0x318] sm:$0xf]
    %v1043 = vld [vmem:[#allocation4 + $0x31c] sm:$0xf]
    %v1044 = vld [vmem:[#allocation4 + $0x320] sm:$0xf]
    %v1045 = vld [vmem:[#allocation4 + $0x324] sm:$0xf]
    %v1046 = vld [vmem:[#allocation4 + $0x328] sm:$0xf]
    %v1047 = vld [vmem:[#allocation4 + $0x32c] sm:$0xf]
    %v1048 = vld [vmem:[#allocation4 + $0x330] sm:$0xf]
    %v1049 = vld [vmem:[#allocation4 + $0x334] sm:$0xf]
    %v1050 = vld [vmem:[#allocation4 + $0x338] sm:$0xf]
    %v1051 = vld [vmem:[#allocation4 + $0x33c] sm:$0xf]
    %v1052 = vld [vmem:[#allocation4 + $0x340] sm:$0xf]
    %v1053 = vld [vmem:[#allocation4 + $0x344] sm:$0xf]
    %v1054 = vld [vmem:[#allocation4 + $0x348] sm:$0xf]
    %v1055 = vld [vmem:[#allocation4 + $0x34c] sm:$0xf]
    %v1056 = vld [vmem:[#allocation4 + $0x350] sm:$0xf]
    %v1057 = vld [vmem:[#allocation4 + $0x354] sm:$0xf]
    %v1058 = vld [vmem:[#allocation4 + $0x358] sm:$0xf]
    %v1059 = vld [vmem:[#allocation4 + $0x35c] sm:$0xf]
    %v1060 = vld [vmem:[#allocation4 + $0x360] sm:$0xf]
    %v1061 = vld [vmem:[#allocation4 + $0x364] sm:$0xf]
    %v1062 = vld [vmem:[#allocation4 + $0x368] sm:$0xf]
    %v1063 = vld [vmem:[#allocation4 + $0x36c] sm:$0xf]
    %v1064 = vld [vmem:[#allocation4 + $0x370] sm:$0xf]
    %v1065 = vld [vmem:[#allocation4 + $0x374] sm:$0xf]
    %v1066 = vld [vmem:[#allocation4 + $0x378] sm:$0xf]
    %v1067 = vld [vmem:[#allocation4 + $0x37c] sm:$0xf]
    %v1068 = vld [vmem:[#allocation4 + $0x380] sm:$0xf]
    %v1069 = vld [vmem:[#allocation4 + $0x384] sm:$0xf]
    %v1070 = vld [vmem:[#allocation4 + $0x388] sm:$0xf]
    %v1071 = vld [vmem:[#allocation4 + $0x38c] sm:$0xf]
    %v1072 = vld [vmem:[#allocation4 + $0x390] sm:$0xf]
    %v1073 = vld [vmem:[#allocation4 + $0x394] sm:$0xf]
    %v1074 = vld [vmem:[#allocation4 + $0x398] sm:$0xf]
    %v1075 = vld [vmem:[#allocation4 + $0x39c] sm:$0xf]
    %v1076 = vld [vmem:[#allocation4 + $0x3a0] sm:$0xf]
    %v1077 = vld [vmem:[#allocation4 + $0x3a4] sm:$0xf]
    %v1078 = vld [vmem:[#allocation4 + $0x3a8] sm:$0xf]
    %v1079 = vld [vmem:[#allocation4 + $0x3ac] sm:$0xf]
    %v1080 = vld [vmem:[#allocation4 + $0x3b0] sm:$0xf]
    %v1081 = vld [vmem:[#allocation4 + $0x3b4] sm:$0xf]
    %v1082 = vld [vmem:[#allocation4 + $0x3b8] sm:$0xf]
    %v1083 = vld [vmem:[#allocation4 + $0x3bc] sm:$0xf]
    %v1084 = vld [vmem:[#allocation4 + $0x3c0] sm:$0xf]
    %v1085 = vld [vmem:[#allocation4 + $0x3c4] sm:$0xf]
    %v1086 = vld [vmem:[#allocation4 + $0x3c8] sm:$0xf]
    %v1087 = vld [vmem:[#allocation4 + $0x3cc] sm:$0xf]
    %v1088 = vld [vmem:[#allocation4 + $0x3d0] sm:$0xf]
    %v1089 = vld [vmem:[#allocation4 + $0x3d4] sm:$0xf]
    %v1090 = vld [vmem:[#allocation4 + $0x3d8] sm:$0xf]
    %v1091 = vld [vmem:[#allocation4 + $0x3dc] sm:$0xf]
    %v1092 = vld [vmem:[#allocation4 + $0x3e0] sm:$0xf]
    %v1093 = vld [vmem:[#allocation4 + $0x3e4] sm:$0xf]
    %v1094 = vld [vmem:[#allocation4 + $0x3e8] sm:$0xf]
    %v1095 = vld [vmem:[#allocation4 + $0x3ec] sm:$0xf]
    %v1096 = vld [vmem:[#allocation4 + $0x3f0] sm:$0xf]
    %v1097 = vld [vmem:[#allocation4 + $0x3f4] sm:$0xf]
    %v1098 = vld [vmem:[#allocation4 + $0x3f8] sm:$0xf]
    %v1099 = vld [vmem:[#allocation4 + $0x3fc] sm:$0xf]
    %v1100 = vld [vmem:[#allocation4 + $0x400] sm:$0xf]
    %v1101 = vld [vmem:[#allocation4 + $0x404] sm:$0xf]
    %v1102 = vld [vmem:[#allocation4 + $0x408] sm:$0xf]
    %v1103 = vld [vmem:[#allocation4 + $0x40c] sm:$0xf]
    %v1104 = vld [vmem:[#allocation4 + $0x410] sm:$0xf]
    %v1105 = vld [vmem:[#allocation4 + $0x414] sm:$0xf]
    %v1106 = vld [vmem:[#allocation4 + $0x418] sm:$0xf]
    %v1107 = vld [vmem:[#allocation4 + $0x41c] sm:$0xf]
    %v1108 = vld [vmem:[#allocation4 + $0x420] sm:$0xf]
    %v1109 = vld [vmem:[#allocation4 + $0x424] sm:$0xf]
    %v1110 = vld [vmem:[#allocation4 + $0x428] sm:$0xf]
    %v1111 = vld [vmem:[#allocation4 + $0x42c] sm:$0xf]
    %v1112 = vld [vmem:[#allocation4 + $0x430] sm:$0xf]
    %v1113 = vld [vmem:[#allocation4 + $0x434] sm:$0xf]
    %v1114 = vld [vmem:[#allocation4 + $0x438] sm:$0xf]
    %v1115 = vld [vmem:[#allocation4 + $0x43c] sm:$0xf]
    %v1116 = vld [vmem:[#allocation4 + $0x440] sm:$0xf]
    %v1117 = vld [vmem:[#allocation4 + $0x444] sm:$0xf]
    %v1118 = vld [vmem:[#allocation4 + $0x448] sm:$0xf]
    %v1119 = vld [vmem:[#allocation4 + $0x44c] sm:$0xf]
    %v1120 = vld [vmem:[#allocation4 + $0x450] sm:$0xf]
    %v1121 = vld [vmem:[#allocation4 + $0x454] sm:$0xf]
    %v1122 = vld [vmem:[#allocation4 + $0x458] sm:$0xf]
    %v1123 = vld [vmem:[#allocation4 + $0x45c] sm:$0xf]
    %v1124 = vld [vmem:[#allocation4 + $0x460] sm:$0xf]
    %v1125 = vld [vmem:[#allocation4 + $0x464] sm:$0xf]
    %v1126 = vld [vmem:[#allocation4 + $0x468] sm:$0xf]
    %v1127 = vld [vmem:[#allocation4 + $0x46c] sm:$0xf]
    %v1128 = vld [vmem:[#allocation4 + $0x470] sm:$0xf]
    %v1129 = vld [vmem:[#allocation4 + $0x474] sm:$0xf]
    %v1130 = vld [vmem:[#allocation4 + $0x478] sm:$0xf]
    %v1131 = vld [vmem:[#allocation4 + $0x47c] sm:$0xf]
    %v1132 = vld [vmem:[#allocation4 + $0x480] sm:$0xf]
    %v1133 = vld [vmem:[#allocation4 + $0x484] sm:$0xf]
    %v1134 = vld [vmem:[#allocation4 + $0x488] sm:$0xf]
    %v1135 = vld [vmem:[#allocation4 + $0x48c] sm:$0xf]
    %v1136 = vld [vmem:[#allocation4 + $0x490] sm:$0xf]
    %v1137 = vld [vmem:[#allocation4 + $0x494] sm:$0xf]
    %v1138 = vld [vmem:[#allocation4 + $0x498] sm:$0xf]
    %v1139 = vld [vmem:[#allocation4 + $0x49c] sm:$0xf]
    %v1140 = vld [vmem:[#allocation4 + $0x4a0] sm:$0xf]
    %v1141 = vld [vmem:[#allocation4 + $0x4a4] sm:$0xf]
    %v1142 = vld [vmem:[#allocation4 + $0x4a8] sm:$0xf]
    %v1143 = vld [vmem:[#allocation4 + $0x4ac] sm:$0xf]
    %v1144 = vld [vmem:[#allocation4 + $0x4b0] sm:$0xf]
    %v1145 = vld [vmem:[#allocation4 + $0x4b4] sm:$0xf]
    %v1146 = vld [vmem:[#allocation4 + $0x4b8] sm:$0xf]
    %v1147 = vld [vmem:[#allocation4 + $0x4bc] sm:$0xf]
    %v1148 = vld [vmem:[#allocation4 + $0x4c0] sm:$0xf]
    %v1149 = vld [vmem:[#allocation4 + $0x4c4] sm:$0xf]
    %v1150 = vld [vmem:[#allocation4 + $0x4c8] sm:$0xf]
    %v1151 = vld [vmem:[#allocation4 + $0x4cc] sm:$0xf]
    %v1152 = vld [vmem:[#allocation4 + $0x4d0] sm:$0xf]
    %v1153 = vld [vmem:[#allocation4 + $0x4d4] sm:$0xf]
    %v1154 = vld [vmem:[#allocation4 + $0x4d8] sm:$0xf]
    %v1155 = vld [vmem:[#allocation4 + $0x4dc] sm:$0xf]
    %v1156 = vld [vmem:[#allocation4 + $0x4e0] sm:$0xf]
    %v1157 = vld [vmem:[#allocation4 + $0x4e4] sm:$0xf]
    %v1158 = vld [vmem:[#allocation4 + $0x4e8] sm:$0xf]
    %v1159 = vld [vmem:[#allocation4 + $0x4ec] sm:$0xf]
    %v1160 = vld [vmem:[#allocation4 + $0x4f0] sm:$0xf]
    %v1161 = vld [vmem:[#allocation4 + $0x4f4] sm:$0xf]
    %v1162 = vld [vmem:[#allocation4 + $0x4f8] sm:$0xf]
    %v1163 = vld [vmem:[#allocation4 + $0x4fc] sm:$0xf]
    %v1164 = vld [vmem:[#allocation4 + $0x500] sm:$0xf]
    %v1165 = vld [vmem:[#allocation4 + $0x504] sm:$0xf]
    %v1166 = vld [vmem:[#allocation4 + $0x508] sm:$0xf]
    %v1167 = vld [vmem:[#allocation4 + $0x50c] sm:$0xf]
    %v1168 = vld [vmem:[#allocation4 + $0x510] sm:$0xf]
    %v1169 = vld [vmem:[#allocation4 + $0x514] sm:$0xf]
    %v1170 = vld [vmem:[#allocation4 + $0x518] sm:$0xf]
    %v1171 = vld [vmem:[#allocation4 + $0x51c] sm:$0xf]
    %v1172 = vld [vmem:[#allocation4 + $0x520] sm:$0xf]
    %v1173 = vld [vmem:[#allocation4 + $0x524] sm:$0xf]
    %v1174 = vld [vmem:[#allocation4 + $0x528] sm:$0xf]
    %v1175 = vld [vmem:[#allocation4 + $0x52c] sm:$0xf]
    %v1176 = vld [vmem:[#allocation4 + $0x530] sm:$0xf]
    %v1177 = vld [vmem:[#allocation4 + $0x534] sm:$0xf]
    %v1178 = vld [vmem:[#allocation4 + $0x538] sm:$0xf]
    %v1179 = vld [vmem:[#allocation4 + $0x53c] sm:$0xf]
    %v1180 = vld [vmem:[#allocation4 + $0x540] sm:$0xf]
    %v1181 = vld [vmem:[#allocation4 + $0x544] sm:$0xf]
    %v1182 = vld [vmem:[#allocation4 + $0x548] sm:$0xf]
    %v1183 = vld [vmem:[#allocation4 + $0x54c] sm:$0xf]
    %v1184 = vld [vmem:[#allocation4 + $0x550] sm:$0xf]
    %v1185 = vld [vmem:[#allocation4 + $0x554] sm:$0xf]
    %v1186 = vld [vmem:[#allocation4 + $0x558] sm:$0xf]
    %v1187 = vld [vmem:[#allocation4 + $0x55c] sm:$0xf]
    %v1188 = vld [vmem:[#allocation4 + $0x560] sm:$0xf]
    %v1189 = vld [vmem:[#allocation4 + $0x564] sm:$0xf]
    %v1190 = vld [vmem:[#allocation4 + $0x568] sm:$0xf]
    %v1191 = vld [vmem:[#allocation4 + $0x56c] sm:$0xf]
    %v1192 = vld [vmem:[#allocation4 + $0x570] sm:$0xf]
    %v1193 = vld [vmem:[#allocation4 + $0x574] sm:$0xf]
    %v1194 = vld [vmem:[#allocation4 + $0x578] sm:$0xf]
    %v1195 = vld [vmem:[#allocation4 + $0x57c] sm:$0xf]
    %v1196 = vld [vmem:[#allocation4 + $0x580] sm:$0xf]
    %v1197 = vld [vmem:[#allocation4 + $0x584] sm:$0xf]
    %v1198 = vld [vmem:[#allocation4 + $0x588] sm:$0xf]
    %v1199 = vld [vmem:[#allocation4 + $0x58c] sm:$0xf]
    %v1200 = vld [vmem:[#allocation4 + $0x590] sm:$0xf]
    %v1201 = vld [vmem:[#allocation4 + $0x594] sm:$0xf]
    %v1202 = vld [vmem:[#allocation4 + $0x598] sm:$0xf]
    %v1203 = vld [vmem:[#allocation4 + $0x59c] sm:$0xf]
    %v1204 = vld [vmem:[#allocation4 + $0x5a0] sm:$0xf]
    %v1205 = vld [vmem:[#allocation4 + $0x5a4] sm:$0xf]
    %v1206 = vld [vmem:[#allocation4 + $0x5a8] sm:$0xf]
    %v1207 = vld [vmem:[#allocation4 + $0x5ac] sm:$0xf]
    %v1208 = vld [vmem:[#allocation4 + $0x5b0] sm:$0xf]
    %v1209 = vld [vmem:[#allocation4 + $0x5b4] sm:$0xf]
    %v1210 = vld [vmem:[#allocation4 + $0x5b8] sm:$0xf]
    %v1211 = vld [vmem:[#allocation4 + $0x5bc] sm:$0xf]
    %v1212 = vld [vmem:[#allocation4 + $0x5c0] sm:$0xf]
    %v1213 = vld [vmem:[#allocation4 + $0x5c4] sm:$0xf]
    %v1214 = vld [vmem:[#allocation4 + $0x5c8] sm:$0xf]
    %v1215 = vld [vmem:[#allocation4 + $0x5cc] sm:$0xf]
    %v1216 = vld [vmem:[#allocation4 + $0x5d0] sm:$0xf]
    %v1217 = vld [vmem:[#allocation4 + $0x5d4] sm:$0xf]
    %v1218 = vld [vmem:[#allocation4 + $0x5d8] sm:$0xf]
    %v1219 = vld [vmem:[#allocation4 + $0x5dc] sm:$0xf]
    %v1220 = vld [vmem:[#allocation4 + $0x5e0] sm:$0xf]
    %v1221 = vld [vmem:[#allocation4 + $0x5e4] sm:$0xf]
    %v1222 = vld [vmem:[#allocation4 + $0x5e8] sm:$0xf]
    %v1223 = vld [vmem:[#allocation4 + $0x5ec] sm:$0xf]
    %v1224 = vld [vmem:[#allocation4 + $0x5f0] sm:$0xf]
    %v1225 = vld [vmem:[#allocation4 + $0x5f4] sm:$0xf]
    %v1226 = vld [vmem:[#allocation4 + $0x5f8] sm:$0xf]
    %v1227 = vld [vmem:[#allocation4 + $0x5fc] sm:$0xf]
    %v1228 = vld [vmem:[#allocation4 + $0x600] sm:$0xf]
    %v1229 = vld [vmem:[#allocation4 + $0x604] sm:$0xf]
    %v1230 = vld [vmem:[#allocation4 + $0x608] sm:$0xf]
    %v1231 = vld [vmem:[#allocation4 + $0x60c] sm:$0xf]
    %v1232 = vld [vmem:[#allocation4 + $0x610] sm:$0xf]
    %v1233 = vld [vmem:[#allocation4 + $0x614] sm:$0xf]
    %v1234 = vld [vmem:[#allocation4 + $0x618] sm:$0xf]
    %v1235 = vld [vmem:[#allocation4 + $0x61c] sm:$0xf]
    %v1236 = vld [vmem:[#allocation4 + $0x620] sm:$0xf]
    %v1237 = vld [vmem:[#allocation4 + $0x624] sm:$0xf]
    %v1238 = vld [vmem:[#allocation4 + $0x628] sm:$0xf]
    %v1239 = vld [vmem:[#allocation4 + $0x62c] sm:$0xf]
    %v1240 = vld [vmem:[#allocation4 + $0x630] sm:$0xf]
    %v1241 = vld [vmem:[#allocation4 + $0x634] sm:$0xf]
    %v1242 = vld [vmem:[#allocation4 + $0x638] sm:$0xf]
    %v1243 = vld [vmem:[#allocation4 + $0x63c] sm:$0xf]
    %v1244 = vld [vmem:[#allocation4 + $0x640] sm:$0xf]
    %v1245 = vld [vmem:[#allocation4 + $0x644] sm:$0xf]
    %v1246 = vld [vmem:[#allocation4 + $0x648] sm:$0xf]
    %v1247 = vld [vmem:[#allocation4 + $0x64c] sm:$0xf]
    %v1248 = vld [vmem:[#allocation4 + $0x650] sm:$0xf]
    %v1249 = vld [vmem:[#allocation4 + $0x654] sm:$0xf]
    %v1250 = vld [vmem:[#allocation4 + $0x658] sm:$0xf]
    %v1251 = vld [vmem:[#allocation4 + $0x65c] sm:$0xf]
    %v1252 = vld [vmem:[#allocation4 + $0x660] sm:$0xf]
    %v1253 = vld [vmem:[#allocation4 + $0x664] sm:$0xf]
    %v1254 = vld [vmem:[#allocation4 + $0x668] sm:$0xf]
    %v1255 = vld [vmem:[#allocation4 + $0x66c] sm:$0xf]
    %v1256 = vld [vmem:[#allocation4 + $0x670] sm:$0xf]
    %v1257 = vld [vmem:[#allocation4 + $0x674] sm:$0xf]
    %v1258 = vld [vmem:[#allocation4 + $0x678] sm:$0xf]
    %v1259 = vld [vmem:[#allocation4 + $0x67c] sm:$0xf]
    %v1260 = vld [vmem:[#allocation4 + $0x680] sm:$0xf]
    %v1261 = vld [vmem:[#allocation4 + $0x684] sm:$0xf]
    %v1262 = vld [vmem:[#allocation4 + $0x688] sm:$0xf]
    %v1263 = vld [vmem:[#allocation4 + $0x68c] sm:$0xf]
    %v1264 = vld [vmem:[#allocation4 + $0x690] sm:$0xf]
    %v1265 = vld [vmem:[#allocation4 + $0x694] sm:$0xf]
    %v1266 = vld [vmem:[#allocation4 + $0x698] sm:$0xf]
    %v1267 = vld [vmem:[#allocation4 + $0x69c] sm:$0xf]
    %v1268 = vld [vmem:[#allocation4 + $0x6a0] sm:$0xf]
    %v1269 = vld [vmem:[#allocation4 + $0x6a4] sm:$0xf]
    %v1270 = vld [vmem:[#allocation4 + $0x6a8] sm:$0xf]
    %v1271 = vld [vmem:[#allocation4 + $0x6ac] sm:$0xf]
    %v1272 = vld [vmem:[#allocation4 + $0x6b0] sm:$0xf]
    %v1273 = vld [vmem:[#allocation4 + $0x6b4] sm:$0xf]
    %v1274 = vld [vmem:[#allocation4 + $0x6b8] sm:$0xf]
    %v1275 = vld [vmem:[#allocation4 + $0x6bc] sm:$0xf]
    %v1276 = vld [vmem:[#allocation4 + $0x6c0] sm:$0xf]
    %v1277 = vld [vmem:[#allocation4 + $0x6c4] sm:$0xf]
    %v1278 = vld [vmem:[#allocation4 + $0x6c8] sm:$0xf]
    %v1279 = vld [vmem:[#allocation4 + $0x6cc] sm:$0xf]
    %v1280 = vld [vmem:[#allocation4 + $0x6d0] sm:$0xf]
    %v1281 = vld [vmem:[#allocation4 + $0x6d4] sm:$0xf]
    %v1282 = vld [vmem:[#allocation4 + $0x6d8] sm:$0xf]
    %v1283 = vld [vmem:[#allocation4 + $0x6dc] sm:$0xf]
    %v1284 = vld [vmem:[#allocation4 + $0x6e0] sm:$0xf]
    %v1285 = vld [vmem:[#allocation4 + $0x6e4] sm:$0xf]
    %v1286 = vld [vmem:[#allocation4 + $0x6e8] sm:$0xf]
    %v1287 = vld [vmem:[#allocation4 + $0x6ec] sm:$0xf]
    %v1288 = vld [vmem:[#allocation4 + $0x6f0] sm:$0xf]
    %v1289 = vld [vmem:[#allocation4 + $0x6f4] sm:$0xf]
    %v1290 = vld [vmem:[#allocation4 + $0x6f8] sm:$0xf]
    %v1291 = vld [vmem:[#allocation4 + $0x6fc] sm:$0xf]
    %v1292 = vld [vmem:[#allocation4 + $0x700] sm:$0xf]
    %v1293 = vld [vmem:[#allocation4 + $0x704] sm:$0xf]
    %v1294 = vld [vmem:[#allocation4 + $0x708] sm:$0xf]
    %v1295 = vld [vmem:[#allocation4 + $0x70c] sm:$0xf]
    %v1296 = vld [vmem:[#allocation4 + $0x710] sm:$0xf]
    %v1297 = vld [vmem:[#allocation4 + $0x714] sm:$0xf]
    %v1298 = vld [vmem:[#allocation4 + $0x718] sm:$0xf]
    %v1299 = vld [vmem:[#allocation4 + $0x71c] sm:$0xf]
    %v1300 = vld [vmem:[#allocation4 + $0x720] sm:$0xf]
    %v1301 = vld [vmem:[#allocation4 + $0x724] sm:$0xf]
    %v1302 = vld [vmem:[#allocation4 + $0x728] sm:$0xf]
    %v1303 = vld [vmem:[#allocation4 + $0x72c] sm:$0xf]
    %v1304 = vld [vmem:[#allocation4 + $0x730] sm:$0xf]
    %v1305 = vld [vmem:[#allocation4 + $0x734] sm:$0xf]
    %v1306 = vld [vmem:[#allocation4 + $0x738] sm:$0xf]
    %v1307 = vld [vmem:[#allocation4 + $0x73c] sm:$0xf]
    %v1308 = vld [vmem:[#allocation4 + $0x740] sm:$0xf]
    %v1309 = vld [vmem:[#allocation4 + $0x744] sm:$0xf]
    %v1310 = vld [vmem:[#allocation4 + $0x748] sm:$0xf]
    %v1311 = vld [vmem:[#allocation4 + $0x74c] sm:$0xf]
    %v1312 = vld [vmem:[#allocation4 + $0x750] sm:$0xf]
    %v1313 = vld [vmem:[#allocation4 + $0x754] sm:$0xf]
    %v1314 = vld [vmem:[#allocation4 + $0x758] sm:$0xf]
    %v1315 = vld [vmem:[#allocation4 + $0x75c] sm:$0xf]
    %v1316 = vld [vmem:[#allocation4 + $0x760] sm:$0xf]
    %v1317 = vld [vmem:[#allocation4 + $0x764] sm:$0xf]
    %v1318 = vld [vmem:[#allocation4 + $0x768] sm:$0xf]
    %v1319 = vld [vmem:[#allocation4 + $0x76c] sm:$0xf]
    %v1320 = vld [vmem:[#allocation4 + $0x770] sm:$0xf]
    %v1321 = vld [vmem:[#allocation4 + $0x774] sm:$0xf]
    %v1322 = vld [vmem:[#allocation4 + $0x778] sm:$0xf]
    %v1323 = vld [vmem:[#allocation4 + $0x77c] sm:$0xf]
    %v1324 = vld [vmem:[#allocation4 + $0x780] sm:$0xf]
    %v1325 = vld [vmem:[#allocation4 + $0x784] sm:$0xf]
    %v1326 = vld [vmem:[#allocation4 + $0x788] sm:$0xf]
    %v1327 = vld [vmem:[#allocation4 + $0x78c] sm:$0xf]
    %v1328 = vld [vmem:[#allocation4 + $0x790] sm:$0xf]
    %v1329 = vld [vmem:[#allocation4 + $0x794] sm:$0xf]
    %v1330 = vld [vmem:[#allocation4 + $0x798] sm:$0xf]
    %v1331 = vld [vmem:[#allocation4 + $0x79c] sm:$0xf]
    %v1332 = vld [vmem:[#allocation4 + $0x7a0] sm:$0xf]
    %v1333 = vld [vmem:[#allocation4 + $0x7a4] sm:$0xf]
    %v1334 = vld [vmem:[#allocation4 + $0x7a8] sm:$0xf]
    %v1335 = vld [vmem:[#allocation4 + $0x7ac] sm:$0xf]
    %v1336 = vld [vmem:[#allocation4 + $0x7b0] sm:$0xf]
    %v1337 = vld [vmem:[#allocation4 + $0x7b4] sm:$0xf]
    %v1338 = vld [vmem:[#allocation4 + $0x7b8] sm:$0xf]
    %v1339 = vld [vmem:[#allocation4 + $0x7bc] sm:$0xf]
    %v1340 = vld [vmem:[#allocation4 + $0x7c0] sm:$0xf]
    %v1341 = vld [vmem:[#allocation4 + $0x7c4] sm:$0xf]
    %v1342 = vld [vmem:[#allocation4 + $0x7c8] sm:$0xf]
    %v1343 = vld [vmem:[#allocation4 + $0x7cc] sm:$0xf]
    %v1344 = vld [vmem:[#allocation4 + $0x7d0] sm:$0xf]
    %v1345 = vld [vmem:[#allocation4 + $0x7d4] sm:$0xf]
    %v1346 = vld [vmem:[#allocation4 + $0x7d8] sm:$0xf]
    %v1347 = vld [vmem:[#allocation4 + $0x7dc] sm:$0xf]
    %v1348 = vld [vmem:[#allocation4 + $0x7e0] sm:$0xf]
    %v1349 = vld [vmem:[#allocation4 + $0x7e4] sm:$0xf]
    %v1350 = vld [vmem:[#allocation4 + $0x7e8] sm:$0xf]
    %v1351 = vld [vmem:[#allocation4 + $0x7ec] sm:$0xf]
    %v1352 = vld [vmem:[#allocation4 + $0x7f0] sm:$0xf]
    %v1353 = vld [vmem:[#allocation4 + $0x7f4] sm:$0xf]
    %v1354 = vld [vmem:[#allocation4 + $0x7f8] sm:$0xf]
    %v1355 = vld [vmem:[#allocation4 + $0x7fc] sm:$0xf]
    %v1356 = vld [vmem:[#allocation4 + $0x800] sm:$0xf]
    %v1357 = vld [vmem:[#allocation4 + $0x804] sm:$0xf]
    %v1358 = vld [vmem:[#allocation4 + $0x808] sm:$0xf]
    %v1359 = vld [vmem:[#allocation4 + $0x80c] sm:$0xf]
    %v1360 = vld [vmem:[#allocation4 + $0x810] sm:$0xf]
    %v1361 = vld [vmem:[#allocation4 + $0x814] sm:$0xf]
    %v1362 = vld [vmem:[#allocation4 + $0x818] sm:$0xf]
    %v1363 = vld [vmem:[#allocation4 + $0x81c] sm:$0xf]
    %v1364 = vld [vmem:[#allocation4 + $0x820] sm:$0xf]
    %v1365 = vld [vmem:[#allocation4 + $0x824] sm:$0xf]
    %v1366 = vld [vmem:[#allocation4 + $0x828] sm:$0xf]
    %v1367 = vld [vmem:[#allocation4 + $0x82c] sm:$0xf]
    %v1368 = vld [vmem:[#allocation4 + $0x830] sm:$0xf]
    %v1369 = vld [vmem:[#allocation4 + $0x834] sm:$0xf]
    %v1370 = vld [vmem:[#allocation4 + $0x838] sm:$0xf]
    %v1371 = vld [vmem:[#allocation4 + $0x83c] sm:$0xf]
    %v1372 = vld [vmem:[#allocation4 + $0x840] sm:$0xf]
    %v1373 = vld [vmem:[#allocation4 + $0x844] sm:$0xf]
    %v1374 = vld [vmem:[#allocation4 + $0x848] sm:$0xf]
    %v1375 = vld [vmem:[#allocation4 + $0x84c] sm:$0xf]
    %v1376 = vld [vmem:[#allocation4 + $0x850] sm:$0xf]
    %v1377 = vld [vmem:[#allocation4 + $0x854] sm:$0xf]
    %v1378 = vld [vmem:[#allocation4 + $0x858] sm:$0xf]
    %v1379 = vld [vmem:[#allocation4 + $0x85c] sm:$0xf]
    %v1380 = vld [vmem:[#allocation4 + $0x860] sm:$0xf]
    %v1381 = vld [vmem:[#allocation4 + $0x864] sm:$0xf]
    %v1382 = vld [vmem:[#allocation4 + $0x868] sm:$0xf]
    %v1383 = vld [vmem:[#allocation4 + $0x86c] sm:$0xf]
    %v1384 = vld [vmem:[#allocation4 + $0x870] sm:$0xf]
    %v1385 = vld [vmem:[#allocation4 + $0x874] sm:$0xf]
    %v1386 = vld [vmem:[#allocation4 + $0x878] sm:$0xf]
    %v1387 = vld [vmem:[#allocation4 + $0x87c] sm:$0xf]
    %v1388 = vld [vmem:[#allocation4 + $0x880] sm:$0xf]
    %v1389 = vld [vmem:[#allocation4 + $0x884] sm:$0xf]
    %v1390 = vld [vmem:[#allocation4 + $0x888] sm:$0xf]
    %v1391 = vld [vmem:[#allocation4 + $0x88c] sm:$0xf]
    %v1392 = vld [vmem:[#allocation4 + $0x890] sm:$0xf]
    %v1393 = vld [vmem:[#allocation4 + $0x894] sm:$0xf]
    %v1394 = vld [vmem:[#allocation4 + $0x898] sm:$0xf]
    %v1395 = vld [vmem:[#allocation4 + $0x89c] sm:$0xf]
    %v1396 = vld [vmem:[#allocation4 + $0x8a0] sm:$0xf]
    %v1397 = vld [vmem:[#allocation4 + $0x8a4] sm:$0xf]
    %v1398 = vld [vmem:[#allocation4 + $0x8a8] sm:$0xf]
    %v1399 = vld [vmem:[#allocation4 + $0x8ac] sm:$0xf]
    %v1400 = vld [vmem:[#allocation4 + $0x8b0] sm:$0xf]
    %v1401 = vld [vmem:[#allocation4 + $0x8b4] sm:$0xf]
    %v1402 = vld [vmem:[#allocation4 + $0x8b8] sm:$0xf]
    %v1403 = vld [vmem:[#allocation4 + $0x8bc] sm:$0xf]
    %v1404 = vld [vmem:[#allocation4 + $0x8c0] sm:$0xf]
    %v1405 = vld [vmem:[#allocation4 + $0x8c4] sm:$0xf]
    %v1406 = vld [vmem:[#allocation4 + $0x8c8] sm:$0xf]
    %v1407 = vld [vmem:[#allocation4 + $0x8cc] sm:$0xf]
    %v1408 = vld [vmem:[#allocation4 + $0x8d0] sm:$0xf]
    %v1409 = vld [vmem:[#allocation4 + $0x8d4] sm:$0xf]
    %v1410 = vld [vmem:[#allocation4 + $0x8d8] sm:$0xf]
    %v1411 = vld [vmem:[#allocation4 + $0x8dc] sm:$0xf]
    %v1412 = vld [vmem:[#allocation4 + $0x8e0] sm:$0xf]
    %v1413 = vld [vmem:[#allocation4 + $0x8e4] sm:$0xf]
    %v1414 = vld [vmem:[#allocation4 + $0x8e8] sm:$0xf]
    %v1415 = vld [vmem:[#allocation4 + $0x8ec] sm:$0xf]
    %v1416 = vld [vmem:[#allocation4 + $0x8f0] sm:$0xf]
    %v1417 = vld [vmem:[#allocation4 + $0x8f4] sm:$0xf]
    %v1418 = vld [vmem:[#allocation4 + $0x8f8] sm:$0xf]
    %v1419 = vld [vmem:[#allocation4 + $0x8fc] sm:$0xf]
    %v1420 = vld [vmem:[#allocation4 + $0x900] sm:$0xf]
    %v1421 = vld [vmem:[#allocation4 + $0x904] sm:$0xf]
    %v1422 = vld [vmem:[#allocation4 + $0x908] sm:$0xf]
    %v1423 = vld [vmem:[#allocation4 + $0x90c] sm:$0xf]
    %v1424 = vld [vmem:[#allocation4 + $0x910] sm:$0xf]
    %v1425 = vld [vmem:[#allocation4 + $0x914] sm:$0xf]
    %v1426 = vld [vmem:[#allocation4 + $0x918] sm:$0xf]
    %v1427 = vld [vmem:[#allocation4 + $0x91c] sm:$0xf]
    %v1428 = vld [vmem:[#allocation4 + $0x920] sm:$0xf]
    %v1429 = vld [vmem:[#allocation4 + $0x924] sm:$0xf]
    %v1430 = vld [vmem:[#allocation4 + $0x928] sm:$0xf]
    %v1431 = vld [vmem:[#allocation4 + $0x92c] sm:$0xf]
    %v1432 = vld [vmem:[#allocation4 + $0x930] sm:$0xf]
    %v1433 = vld [vmem:[#allocation4 + $0x934] sm:$0xf]
    %v1434 = vld [vmem:[#allocation4 + $0x938] sm:$0xf]
    %v1435 = vld [vmem:[#allocation4 + $0x93c] sm:$0xf]
    %v1436 = vld [vmem:[#allocation4 + $0x940] sm:$0xf]
    %v1437 = vld [vmem:[#allocation4 + $0x944] sm:$0xf]
    %v1438 = vld [vmem:[#allocation4 + $0x948] sm:$0xf]
    %v1439 = vld [vmem:[#allocation4 + $0x94c] sm:$0xf]
    %v1440 = vld [vmem:[#allocation4 + $0x950] sm:$0xf]
    %v1441 = vld [vmem:[#allocation4 + $0x954] sm:$0xf]
    %v1442 = vld [vmem:[#allocation4 + $0x958] sm:$0xf]
    %v1443 = vld [vmem:[#allocation4 + $0x95c] sm:$0xf]
    %v1444 = vld [vmem:[#allocation4 + $0x960] sm:$0xf]
    %v1445 = vld [vmem:[#allocation4 + $0x964] sm:$0xf]
    %v1446 = vld [vmem:[#allocation4 + $0x968] sm:$0xf]
    %v1447 = vld [vmem:[#allocation4 + $0x96c] sm:$0xf]
    %v1448 = vld [vmem:[#allocation4 + $0x970] sm:$0xf]
    %v1449 = vld [vmem:[#allocation4 + $0x974] sm:$0xf]
    %v1450 = vld [vmem:[#allocation4 + $0x978] sm:$0xf]
    %v1451 = vld [vmem:[#allocation4 + $0x97c] sm:$0xf]
    %v1452 = vld [vmem:[#allocation4 + $0x980] sm:$0xf]
    %v1453 = vld [vmem:[#allocation4 + $0x984] sm:$0xf]
    %v1454 = vld [vmem:[#allocation4 + $0x988] sm:$0xf]
    %v1455 = vld [vmem:[#allocation4 + $0x98c] sm:$0xf]
    %v1456 = vld [vmem:[#allocation4 + $0x990] sm:$0xf]
    %v1457 = vld [vmem:[#allocation4 + $0x994] sm:$0xf]
    %v1458 = vld [vmem:[#allocation4 + $0x998] sm:$0xf]
    %v1459 = vld [vmem:[#allocation4 + $0x99c] sm:$0xf]
    %v1460 = vld [vmem:[#allocation4 + $0x9a0] sm:$0xf]
    %v1461 = vld [vmem:[#allocation4 + $0x9a4] sm:$0xf]
    %v1462 = vld [vmem:[#allocation4 + $0x9a8] sm:$0xf]
    %v1463 = vld [vmem:[#allocation4 + $0x9ac] sm:$0xf]
    %v1464 = vld [vmem:[#allocation4 + $0x9b0] sm:$0xf]
    %v1465 = vld [vmem:[#allocation4 + $0x9b4] sm:$0xf]
    %v1466 = vld [vmem:[#allocation4 + $0x9b8] sm:$0xf]
    %v1467 = vld [vmem:[#allocation4 + $0x9bc] sm:$0xf]
    %v1468 = vld [vmem:[#allocation4 + $0x9c0] sm:$0xf]
    %v1469 = vld [vmem:[#allocation4 + $0x9c4] sm:$0xf]
    %v1470 = vld [vmem:[#allocation4 + $0x9c8] sm:$0xf]
    %v1471 = vld [vmem:[#allocation4 + $0x9cc] sm:$0xf]
    %v1472 = vld [vmem:[#allocation4 + $0x9d0] sm:$0xf]
    %v1473 = vld [vmem:[#allocation4 + $0x9d4] sm:$0xf]
    %v1474 = vld [vmem:[#allocation4 + $0x9d8] sm:$0xf]
    %v1475 = vld [vmem:[#allocation4 + $0x9dc] sm:$0xf]
    %v1476 = vld [vmem:[#allocation4 + $0x9e0] sm:$0xf]
    %v1477 = vld [vmem:[#allocation4 + $0x9e4] sm:$0xf]
    %v1478 = vld [vmem:[#allocation4 + $0x9e8] sm:$0xf]
    %v1479 = vld [vmem:[#allocation4 + $0x9ec] sm:$0xf]
    %v1480 = vld [vmem:[#allocation4 + $0x9f0] sm:$0xf]
    %v1481 = vld [vmem:[#allocation4 + $0x9f4] sm:$0xf]
    %v1482 = vld [vmem:[#allocation4 + $0x9f8] sm:$0xf]
    %v1483 = vld [vmem:[#allocation4 + $0x9fc] sm:$0xf]
    %v1484 = vld [vmem:[#allocation4 + $0xa00] sm:$0xf]
    %v1485 = vld [vmem:[#allocation4 + $0xa04] sm:$0xf]
    %v1486 = vld [vmem:[#allocation4 + $0xa08] sm:$0xf]
    %v1487 = vld [vmem:[#allocation4 + $0xa0c] sm:$0xf]
    %v1488 = vld [vmem:[#allocation4 + $0xa10] sm:$0xf]
    %v1489 = vld [vmem:[#allocation4 + $0xa14] sm:$0xf]
    %v1490 = vld [vmem:[#allocation4 + $0xa18] sm:$0xf]
    %v1491 = vld [vmem:[#allocation4 + $0xa1c] sm:$0xf]
    %v1492 = vld [vmem:[#allocation4 + $0xa20] sm:$0xf]
    %v1493 = vld [vmem:[#allocation4 + $0xa24] sm:$0xf]
    %v1494 = vld [vmem:[#allocation4 + $0xa28] sm:$0xf]
    %v1495 = vld [vmem:[#allocation4 + $0xa2c] sm:$0xf]
    %v1496 = vld [vmem:[#allocation4 + $0xa30] sm:$0xf]
    %v1497 = vld [vmem:[#allocation4 + $0xa34] sm:$0xf]
    %v1498 = vld [vmem:[#allocation4 + $0xa38] sm:$0xf]
    %v1499 = vld [vmem:[#allocation4 + $0xa3c] sm:$0xf]
    %v1500 = vld [vmem:[#allocation4 + $0xa40] sm:$0xf]
    %v1501 = vld [vmem:[#allocation4 + $0xa44] sm:$0xf]
    %v1502 = vld [vmem:[#allocation4 + $0xa48] sm:$0xf]
    %v1503 = vld [vmem:[#allocation4 + $0xa4c] sm:$0xf]
    %v1504 = vld [vmem:[#allocation4 + $0xa50] sm:$0xf]
    %v1505 = vld [vmem:[#allocation4 + $0xa54] sm:$0xf]
    %v1506 = vld [vmem:[#allocation4 + $0xa58] sm:$0xf]
    %v1507 = vld [vmem:[#allocation4 + $0xa5c] sm:$0xf]
    %v1508 = vld [vmem:[#allocation4 + $0xa60] sm:$0xf]
    %v1509 = vld [vmem:[#allocation4 + $0xa64] sm:$0xf]
    %v1510 = vld [vmem:[#allocation4 + $0xa68] sm:$0xf]
    %v1511 = vld [vmem:[#allocation4 + $0xa6c] sm:$0xf]
    %v1512 = vld [vmem:[#allocation4 + $0xa70] sm:$0xf]
    %v1513 = vld [vmem:[#allocation4 + $0xa74] sm:$0xf]
    %v1514 = vld [vmem:[#allocation4 + $0xa78] sm:$0xf]
    %v1515 = vld [vmem:[#allocation4 + $0xa7c] sm:$0xf]
    %v1516 = vld [vmem:[#allocation4 + $0xa80] sm:$0xf]
    %v1517 = vld [vmem:[#allocation4 + $0xa84] sm:$0xf]
    %v1518 = vld [vmem:[#allocation4 + $0xa88] sm:$0xf]
    %v1519 = vld [vmem:[#allocation4 + $0xa8c] sm:$0xf]
    %v1520 = vld [vmem:[#allocation4 + $0xa90] sm:$0xf]
    %v1521 = vld [vmem:[#allocation4 + $0xa94] sm:$0xf]
    %v1522 = vld [vmem:[#allocation4 + $0xa98] sm:$0xf]
    %v1523 = vld [vmem:[#allocation4 + $0xa9c] sm:$0xf]
    %v1524 = vld [vmem:[#allocation4 + $0xaa0] sm:$0xf]
    %v1525 = vld [vmem:[#allocation4 + $0xaa4] sm:$0xf]
    %v1526 = vld [vmem:[#allocation4 + $0xaa8] sm:$0xf]
    %v1527 = vld [vmem:[#allocation4 + $0xaac] sm:$0xf]
    %v1528 = vld [vmem:[#allocation4 + $0xab0] sm:$0xf]
    %v1529 = vld [vmem:[#allocation4 + $0xab4] sm:$0xf]
    %v1530 = vld [vmem:[#allocation4 + $0xab8] sm:$0xf]
    %v1531 = vld [vmem:[#allocation4 + $0xabc] sm:$0xf]
    %v1532 = vld [vmem:[#allocation4 + $0xac0] sm:$0xf]
    %v1533 = vld [vmem:[#allocation4 + $0xac4] sm:$0xf]
    %v1534 = vld [vmem:[#allocation4 + $0xac8] sm:$0xf]
    %v1535 = vld [vmem:[#allocation4 + $0xacc] sm:$0xf]
    %v1536 = vld [vmem:[#allocation4 + $0xad0] sm:$0xf]
    %v1537 = vld [vmem:[#allocation4 + $0xad4] sm:$0xf]
    %v1538 = vld [vmem:[#allocation4 + $0xad8] sm:$0xf]
    %v1539 = vld [vmem:[#allocation4 + $0xadc] sm:$0xf]
    %v1540 = vld [vmem:[#allocation4 + $0xae0] sm:$0xf]
    %v1541 = vld [vmem:[#allocation4 + $0xae4] sm:$0xf]
    %v1542 = vld [vmem:[#allocation4 + $0xae8] sm:$0xf]
    %v1543 = vld [vmem:[#allocation4 + $0xaec] sm:$0xf]
    %v1544 = vld [vmem:[#allocation4 + $0xaf0] sm:$0xf]
    %v1545 = vld [vmem:[#allocation4 + $0xaf4] sm:$0xf]
    %v1546 = vld [vmem:[#allocation4 + $0xaf8] sm:$0xf]
    %v1547 = vld [vmem:[#allocation4 + $0xafc] sm:$0xf]
    %v1548 = vld [vmem:[#allocation4 + $0xb00] sm:$0xf]
    %v1549 = vld [vmem:[#allocation4 + $0xb04] sm:$0xf]
    %v1550 = vld [vmem:[#allocation4 + $0xb08] sm:$0xf]
    %v1551 = vld [vmem:[#allocation4 + $0xb0c] sm:$0xf]
    %v1552 = vld [vmem:[#allocation4 + $0xb10] sm:$0xf]
    %v1553 = vld [vmem:[#allocation4 + $0xb14] sm:$0xf]
    %v1554 = vld [vmem:[#allocation4 + $0xb18] sm:$0xf]
    %v1555 = vld [vmem:[#allocation4 + $0xb1c] sm:$0xf]
    %v1556 = vld [vmem:[#allocation4 + $0xb20] sm:$0xf]
    %v1557 = vld [vmem:[#allocation4 + $0xb24] sm:$0xf]
    %v1558 = vld [vmem:[#allocation4 + $0xb28] sm:$0xf]
    %v1559 = vld [vmem:[#allocation4 + $0xb2c] sm:$0xf]
    %v1560 = vld [vmem:[#allocation4 + $0xb30] sm:$0xf]
    %v1561 = vld [vmem:[#allocation4 + $0xb34] sm:$0xf]
    %v1562 = vld [vmem:[#allocation4 + $0xb38] sm:$0xf]
    %v1563 = vld [vmem:[#allocation4 + $0xb3c] sm:$0xf]
    %v1564 = vld [vmem:[#allocation4 + $0xb40] sm:$0xf]
    %v1565 = vld [vmem:[#allocation4 + $0xb44] sm:$0xf]
    %v1566 = vld [vmem:[#allocation4 + $0xb48] sm:$0xf]
    %v1567 = vld [vmem:[#allocation4 + $0xb4c] sm:$0xf]
    %v1568 = vld [vmem:[#allocation4 + $0xb50] sm:$0xf]
    %v1569 = vld [vmem:[#allocation4 + $0xb54] sm:$0xf]
    %v1570 = vld [vmem:[#allocation4 + $0xb58] sm:$0xf]
    %v1571 = vld [vmem:[#allocation4 + $0xb5c] sm:$0xf]
    %v1572 = vld [vmem:[#allocation4 + $0xb60] sm:$0xf]
    %v1573 = vld [vmem:[#allocation4 + $0xb64] sm:$0xf]
    %v1574 = vld [vmem:[#allocation4 + $0xb68] sm:$0xf]
    %v1575 = vld [vmem:[#allocation4 + $0xb6c] sm:$0xf]
    %v1576 = vld [vmem:[#allocation4 + $0xb70] sm:$0xf]
    %v1577 = vld [vmem:[#allocation4 + $0xb74] sm:$0xf]
    %v1578 = vld [vmem:[#allocation4 + $0xb78] sm:$0xf]
    %v1579 = vld [vmem:[#allocation4 + $0xb7c] sm:$0xf]
    %v1580 = vld [vmem:[#allocation4 + $0xb80] sm:$0xf]
    %v1581 = vld [vmem:[#allocation4 + $0xb84] sm:$0xf]
    %v1582 = vld [vmem:[#allocation4 + $0xb88] sm:$0xf]
    %v1583 = vld [vmem:[#allocation4 + $0xb8c] sm:$0xf]
    %v1584 = vld [vmem:[#allocation4 + $0xb90] sm:$0xf]
    %v1585 = vld [vmem:[#allocation4 + $0xb94] sm:$0xf]
    %v1586 = vld [vmem:[#allocation4 + $0xb98] sm:$0xf]
    %v1587 = vld [vmem:[#allocation4 + $0xb9c] sm:$0xf]
    %v1588 = vld [vmem:[#allocation4 + $0xba0] sm:$0xf]
    %v1589 = vld [vmem:[#allocation4 + $0xba4] sm:$0xf]
    %v1590 = vld [vmem:[#allocation4 + $0xba8] sm:$0xf]
    %v1591 = vld [vmem:[#allocation4 + $0xbac] sm:$0xf]
    %v1592 = vld [vmem:[#allocation4 + $0xbb0] sm:$0xf]
    %v1593 = vld [vmem:[#allocation4 + $0xbb4] sm:$0xf]
    %v1594 = vld [vmem:[#allocation4 + $0xbb8] sm:$0xf]
    %v1595 = vld [vmem:[#allocation4 + $0xbbc] sm:$0xf]
    %v1596 = vld [vmem:[#allocation4 + $0xbc0] sm:$0xf]
    %v1597 = vld [vmem:[#allocation4 + $0xbc4] sm:$0xf]
    %v1598 = vld [vmem:[#allocation4 + $0xbc8] sm:$0xf]
    %v1599 = vld [vmem:[#allocation4 + $0xbcc] sm:$0xf]
    %v1600 = vld [vmem:[#allocation4 + $0xbd0] sm:$0xf]
    %v1601 = vld [vmem:[#allocation4 + $0xbd4] sm:$0xf]
    %v1602 = vld [vmem:[#allocation4 + $0xbd8] sm:$0xf]
    %v1603 = vld [vmem:[#allocation4 + $0xbdc] sm:$0xf]
    %v1604 = vld [vmem:[#allocation4 + $0xbe0] sm:$0xf]
    %v1605 = vld [vmem:[#allocation4 + $0xbe4] sm:$0xf]
    %v1606 = vld [vmem:[#allocation4 + $0xbe8] sm:$0xf]
    %v1607 = vld [vmem:[#allocation4 + $0xbec] sm:$0xf]
    %v1608 = vld [vmem:[#allocation4 + $0xbf0] sm:$0xf]
    %v1609 = vld [vmem:[#allocation4 + $0xbf4] sm:$0xf]
    %v1610 = vld [vmem:[#allocation4 + $0xbf8] sm:$0xf]
    %v1611 = vld [vmem:[#allocation4 + $0xbfc] sm:$0xf]
    %v1612 = vld [vmem:[#allocation4 + $0xc00] sm:$0xf]
    %v1613 = vld [vmem:[#allocation4 + $0xc04] sm:$0xf]
    %v1614 = vld [vmem:[#allocation4 + $0xc08] sm:$0xf]
    %v1615 = vld [vmem:[#allocation4 + $0xc0c] sm:$0xf]
    %v1616 = vld [vmem:[#allocation4 + $0xc10] sm:$0xf]
    %v1617 = vld [vmem:[#allocation4 + $0xc14] sm:$0xf]
    %v1618 = vld [vmem:[#allocation4 + $0xc18] sm:$0xf]
    %v1619 = vld [vmem:[#allocation4 + $0xc1c] sm:$0xf]
    %v1620 = vld [vmem:[#allocation4 + $0xc20] sm:$0xf]
    %v1621 = vld [vmem:[#allocation4 + $0xc24] sm:$0xf]
    %v1622 = vld [vmem:[#allocation4 + $0xc28] sm:$0xf]
    %v1623 = vld [vmem:[#allocation4 + $0xc2c] sm:$0xf]
    %v1624 = vld [vmem:[#allocation4 + $0xc30] sm:$0xf]
    %v1625 = vld [vmem:[#allocation4 + $0xc34] sm:$0xf]
    %v1626 = vld [vmem:[#allocation4 + $0xc38] sm:$0xf]
    %v1627 = vld [vmem:[#allocation4 + $0xc3c] sm:$0xf]
    %v1628 = vld [vmem:[#allocation4 + $0xc40] sm:$0xf]
    %v1629 = vld [vmem:[#allocation4 + $0xc44] sm:$0xf]
    %v1630 = vld [vmem:[#allocation4 + $0xc48] sm:$0xf]
    %v1631 = vld [vmem:[#allocation4 + $0xc4c] sm:$0xf]
    %v1632 = vld [vmem:[#allocation4 + $0xc50] sm:$0xf]
    %v1633 = vld [vmem:[#allocation4 + $0xc54] sm:$0xf]
    %v1634 = vld [vmem:[#allocation4 + $0xc58] sm:$0xf]
    %v1635 = vld [vmem:[#allocation4 + $0xc5c] sm:$0xf]
    %v1636 = vld [vmem:[#allocation4 + $0xc60] sm:$0xf]
    %v1637 = vld [vmem:[#allocation4 + $0xc64] sm:$0xf]
    %v1638 = vld [vmem:[#allocation4 + $0xc68] sm:$0xf]
    %v1639 = vld [vmem:[#allocation4 + $0xc6c] sm:$0xf]
    %v1640 = vld [vmem:[#allocation4 + $0xc70] sm:$0xf]
    %v1641 = vld [vmem:[#allocation4 + $0xc74] sm:$0xf]
    %v1642 = vld [vmem:[#allocation4 + $0xc78] sm:$0xf]
    %v1643 = vld [vmem:[#allocation4 + $0xc7c] sm:$0xf]
    %v1644 = vld [vmem:[#allocation4 + $0xc80] sm:$0xf]
    %v1645 = vld [vmem:[#allocation4 + $0xc84] sm:$0xf]
    %v1646 = vld [vmem:[#allocation4 + $0xc88] sm:$0xf]
    %v1647 = vld [vmem:[#allocation4 + $0xc8c] sm:$0xf]
    %v1648 = vld [vmem:[#allocation4 + $0xc90] sm:$0xf]
    %v1649 = vld [vmem:[#allocation4 + $0xc94] sm:$0xf]
    %v1650 = vld [vmem:[#allocation4 + $0xc98] sm:$0xf]
    %v1651 = vld [vmem:[#allocation4 + $0xc9c] sm:$0xf]
    %v1652 = vld [vmem:[#allocation4 + $0xca0] sm:$0xf]
    %v1653 = vld [vmem:[#allocation4 + $0xca4] sm:$0xf]
    %v1654 = vld [vmem:[#allocation4 + $0xca8] sm:$0xf]
    %v1655 = vld [vmem:[#allocation4 + $0xcac] sm:$0xf]
    %v1656 = vld [vmem:[#allocation4 + $0xcb0] sm:$0xf]
    %v1657 = vld [vmem:[#allocation4 + $0xcb4] sm:$0xf]
    %v1658 = vld [vmem:[#allocation4 + $0xcb8] sm:$0xf]
    %v1659 = vld [vmem:[#allocation4 + $0xcbc] sm:$0xf]
    %v1660 = vld [vmem:[#allocation4 + $0xcc0] sm:$0xf]
    %v1661 = vld [vmem:[#allocation4 + $0xcc4] sm:$0xf]
    %v1662 = vld [vmem:[#allocation4 + $0xcc8] sm:$0xf]
    %v1663 = vld [vmem:[#allocation4 + $0xccc] sm:$0xf]
    %v1664 = vld [vmem:[#allocation4 + $0xcd0] sm:$0xf]
    %v1665 = vld [vmem:[#allocation4 + $0xcd4] sm:$0xf]
    %v1666 = vld [vmem:[#allocation4 + $0xcd8] sm:$0xf]
    %v1667 = vld [vmem:[#allocation4 + $0xcdc] sm:$0xf]
    %v1668 = vld [vmem:[#allocation4 + $0xce0] sm:$0xf]
    %v1669 = vld [vmem:[#allocation4 + $0xce4] sm:$0xf]
    %v1670 = vld [vmem:[#allocation4 + $0xce8] sm:$0xf]
    %v1671 = vld [vmem:[#allocation4 + $0xcec] sm:$0xf]
    %v1672 = vld [vmem:[#allocation4 + $0xcf0] sm:$0xf]
    %v1673 = vld [vmem:[#allocation4 + $0xcf4] sm:$0xf]
    %v1674 = vld [vmem:[#allocation4 + $0xcf8] sm:$0xf]
    %v1675 = vld [vmem:[#allocation4 + $0xcfc] sm:$0xf]
    %v1676 = vld [vmem:[#allocation4 + $0xd00] sm:$0xf]
    %v1677 = vld [vmem:[#allocation4 + $0xd04] sm:$0xf]
    %v1678 = vld [vmem:[#allocation4 + $0xd08] sm:$0xf]
    %v1679 = vld [vmem:[#allocation4 + $0xd0c] sm:$0xf]
    %v1680 = vld [vmem:[#allocation4 + $0xd10] sm:$0xf]
    %v1681 = vld [vmem:[#allocation4 + $0xd14] sm:$0xf]
    %v1682 = vld [vmem:[#allocation4 + $0xd18] sm:$0xf]
    %v1683 = vld [vmem:[#allocation4 + $0xd1c] sm:$0xf]
    %v1684 = vld [vmem:[#allocation4 + $0xd20] sm:$0xf]
    %v1685 = vld [vmem:[#allocation4 + $0xd24] sm:$0xf]
    %v1686 = vld [vmem:[#allocation4 + $0xd28] sm:$0xf]
    %v1687 = vld [vmem:[#allocation4 + $0xd2c] sm:$0xf]
    %v1688 = vld [vmem:[#allocation4 + $0xd30] sm:$0xf]
    %v1689 = vld [vmem:[#allocation4 + $0xd34] sm:$0xf]
    %v1690 = vld [vmem:[#allocation4 + $0xd38] sm:$0xf]
    %v1691 = vld [vmem:[#allocation4 + $0xd3c] sm:$0xf]
    %v1692 = vld [vmem:[#allocation4 + $0xd40] sm:$0xf]
    %v1693 = vld [vmem:[#allocation4 + $0xd44] sm:$0xf]
    %v1694 = vld [vmem:[#allocation4 + $0xd48] sm:$0xf]
    %v1695 = vld [vmem:[#allocation4 + $0xd4c] sm:$0xf]
    %v1696 = vld [vmem:[#allocation4 + $0xd50] sm:$0xf]
    %v1697 = vld [vmem:[#allocation4 + $0xd54] sm:$0xf]
    %v1698 = vld [vmem:[#allocation4 + $0xd58] sm:$0xf]
    %v1699 = vld [vmem:[#allocation4 + $0xd5c] sm:$0xf]
    %v1700 = vld [vmem:[#allocation4 + $0xd60] sm:$0xf]
    %v1701 = vld [vmem:[#allocation4 + $0xd64] sm:$0xf]
    %v1702 = vld [vmem:[#allocation4 + $0xd68] sm:$0xf]
    %v1703 = vld [vmem:[#allocation4 + $0xd6c] sm:$0xf]
    %v1704 = vld [vmem:[#allocation4 + $0xd70] sm:$0xf]
    %v1705 = vld [vmem:[#allocation4 + $0xd74] sm:$0xf]
    %v1706 = vld [vmem:[#allocation4 + $0xd78] sm:$0xf]
    %v1707 = vld [vmem:[#allocation4 + $0xd7c] sm:$0xf]
    %v1708 = vld [vmem:[#allocation4 + $0xd80] sm:$0xf]
    %v1709 = vld [vmem:[#allocation4 + $0xd84] sm:$0xf]
    %v1710 = vld [vmem:[#allocation4 + $0xd88] sm:$0xf]
    %v1711 = vld [vmem:[#allocation4 + $0xd8c] sm:$0xf]
    %v1712 = vld [vmem:[#allocation4 + $0xd90] sm:$0xf]
    %v1713 = vld [vmem:[#allocation4 + $0xd94] sm:$0xf]
    %v1714 = vld [vmem:[#allocation4 + $0xd98] sm:$0xf]
    %v1715 = vld [vmem:[#allocation4 + $0xd9c] sm:$0xf]
    %v1716 = vld [vmem:[#allocation4 + $0xda0] sm:$0xf]
    %v1717 = vld [vmem:[#allocation4 + $0xda4] sm:$0xf]
    %v1718 = vld [vmem:[#allocation4 + $0xda8] sm:$0xf]
    %v1719 = vld [vmem:[#allocation4 + $0xdac] sm:$0xf]
    %v1720 = vld [vmem:[#allocation4 + $0xdb0] sm:$0xf]
    %v1721 = vld [vmem:[#allocation4 + $0xdb4] sm:$0xf]
    %v1722 = vld [vmem:[#allocation4 + $0xdb8] sm:$0xf]
    %v1723 = vld [vmem:[#allocation4 + $0xdbc] sm:$0xf]
    %v1724 = vld [vmem:[#allocation4 + $0xdc0] sm:$0xf]
    %v1725 = vld [vmem:[#allocation4 + $0xdc4] sm:$0xf]
    %v1726 = vld [vmem:[#allocation4 + $0xdc8] sm:$0xf]
    %v1727 = vld [vmem:[#allocation4 + $0xdcc] sm:$0xf]
    %v1728 = vld [vmem:[#allocation4 + $0xdd0] sm:$0xf]
    %v1729 = vld [vmem:[#allocation4 + $0xdd4] sm:$0xf]
    %v1730 = vld [vmem:[#allocation4 + $0xdd8] sm:$0xf]
    %v1731 = vld [vmem:[#allocation4 + $0xddc] sm:$0xf]
    %v1732 = vld [vmem:[#allocation4 + $0xde0] sm:$0xf]
    %v1733 = vld [vmem:[#allocation4 + $0xde4] sm:$0xf]
    %v1734 = vld [vmem:[#allocation4 + $0xde8] sm:$0xf]
    %v1735 = vld [vmem:[#allocation4 + $0xdec] sm:$0xf]
    %v1736 = vld [vmem:[#allocation4 + $0xdf0] sm:$0xf]
    %v1737 = vld [vmem:[#allocation4 + $0xdf4] sm:$0xf]
    %v1738 = vld [vmem:[#allocation4 + $0xdf8] sm:$0xf]
    %v1739 = vld [vmem:[#allocation4 + $0xdfc] sm:$0xf]
    %v1740 = vld [vmem:[#allocation4 + $0xe00] sm:$0xf]
    %v1741 = vld [vmem:[#allocation4 + $0xe04] sm:$0xf]
    %v1742 = vld [vmem:[#allocation4 + $0xe08] sm:$0xf]
    %v1743 = vld [vmem:[#allocation4 + $0xe0c] sm:$0xf]
    %v1744 = vld [vmem:[#allocation4 + $0xe10] sm:$0xf]
    %v1745 = vld [vmem:[#allocation4 + $0xe14] sm:$0xf]
    %v1746 = vld [vmem:[#allocation4 + $0xe18] sm:$0xf]
    %v1747 = vld [vmem:[#allocation4 + $0xe1c] sm:$0xf]
    %v1748 = vld [vmem:[#allocation4 + $0xe20] sm:$0x3]
    %v1749 = vld [vmem:[#allocation6] sm:$0x1]
    %v1751 = vlaneseq
    %v1752 = vshrl.u32 %v1751, 7
    %v1753 = vsub.s32 0, %v1752
    %v1754 = vrot.slane %v1749, %v1753
    %v2661 = vunpack.c.l.b16 %v844
    %v2662 = vunpack.c.l.b16 %v845
    %v2663 = vunpack.c.l.b16 %v846
    %v2664 = vunpack.c.l.b16 %v847
    %v2665 = vunpack.c.l.b16 %v848
    %v2666 = vunpack.c.l.b16 %v849
    %v2667 = vunpack.c.l.b16 %v850
    %v2668 = vunpack.c.l.b16 %v851
    %v2669 = vunpack.c.l.b16 %v852
    %v2670 = vunpack.c.l.b16 %v853
    %v2671 = vunpack.c.l.b16 %v854
    %v2672 = vunpack.c.l.b16 %v855
    %v2673 = vunpack.c.l.b16 %v856
    %v2674 = vunpack.c.l.b16 %v857
    %v2675 = vunpack.c.l.b16 %v858
    %v2676 = vunpack.c.l.b16 %v859
    %v2677 = vunpack.c.l.b16 %v860
    %v2678 = vunpack.c.l.b16 %v861
    %v2679 = vunpack.c.l.b16 %v862
    %v2680 = vunpack.c.l.b16 %v863
    %v2681 = vunpack.c.l.b16 %v864
    %v2682 = vunpack.c.l.b16 %v865
    %v2683 = vunpack.c.l.b16 %v866
    %v2684 = vunpack.c.l.b16 %v867
    %v2685 = vunpack.c.l.b16 %v868
    %v2686 = vunpack.c.l.b16 %v869
    %v2687 = vunpack.c.l.b16 %v870
    %v2688 = vunpack.c.l.b16 %v871
    %v2689 = vunpack.c.l.b16 %v872
    %v2690 = vunpack.c.l.b16 %v873
    %v2691 = vunpack.c.l.b16 %v874
    %v2692 = vunpack.c.l.b16 %v875
    %v2693 = vunpack.c.l.b16 %v876
    %v2694 = vunpack.c.l.b16 %v877
    %v2695 = vunpack.c.l.b16 %v878
    %v2696 = vunpack.c.l.b16 %v879
    %v2697 = vunpack.c.l.b16 %v880
    %v2698 = vunpack.c.l.b16 %v881
    %v2699 = vunpack.c.l.b16 %v882
    %v2700 = vunpack.c.l.b16 %v883
    %v2701 = vunpack.c.l.b16 %v884
    %v2702 = vunpack.c.l.b16 %v885
    %v2703 = vunpack.c.l.b16 %v886
    %v2704 = vunpack.c.l.b16 %v887
    %v2705 = vunpack.c.l.b16 %v888
    %v2706 = vunpack.c.l.b16 %v889
    %v2707 = vunpack.c.l.b16 %v890
    %v2708 = vunpack.c.l.b16 %v891
    %v2709 = vunpack.c.l.b16 %v892
    %v2710 = vunpack.c.l.b16 %v893
    %v2711 = vunpack.c.l.b16 %v894
    %v2712 = vunpack.c.l.b16 %v895
    %v2713 = vunpack.c.l.b16 %v896
    %v2714 = vunpack.c.l.b16 %v897
    %v2715 = vunpack.c.l.b16 %v898
    %v2716 = vunpack.c.l.b16 %v899
    %v2717 = vunpack.c.l.b16 %v900
    %v2718 = vunpack.c.l.b16 %v901
    %v2719 = vunpack.c.l.b16 %v902
    %v2720 = vunpack.c.l.b16 %v903
    %v2721 = vunpack.c.l.b16 %v904
    %v2722 = vunpack.c.l.b16 %v905
    %v2723 = vunpack.c.l.b16 %v906
    %v2724 = vunpack.c.l.b16 %v907
    %v2725 = vunpack.c.l.b16 %v908
    %v2726 = vunpack.c.l.b16 %v909
    %v2727 = vunpack.c.l.b16 %v910
    %v2728 = vunpack.c.l.b16 %v911
    %v2729 = vunpack.c.l.b16 %v912
    %v2730 = vunpack.c.l.b16 %v913
    %v2731 = vunpack.c.l.b16 %v914
    %v2732 = vunpack.c.l.b16 %v915
    %v2733 = vunpack.c.l.b16 %v916
    %v2734 = vunpack.c.l.b16 %v917
    %v2735 = vunpack.c.l.b16 %v918
    %v2736 = vunpack.c.l.b16 %v919
    %v2737 = vunpack.c.l.b16 %v920
    %v2738 = vunpack.c.l.b16 %v921
    %v2739 = vunpack.c.l.b16 %v922
    %v2740 = vunpack.c.l.b16 %v923
    %v2741 = vunpack.c.l.b16 %v924
    %v2742 = vunpack.c.l.b16 %v925
    %v2743 = vunpack.c.l.b16 %v926
    %v2744 = vunpack.c.l.b16 %v927
    %v2745 = vunpack.c.l.b16 %v928
    %v2746 = vunpack.c.l.b16 %v929
    %v2747 = vunpack.c.l.b16 %v930
    %v2748 = vunpack.c.l.b16 %v931
    %v2749 = vunpack.c.l.b16 %v932
    %v2750 = vunpack.c.l.b16 %v933
    %v2751 = vunpack.c.l.b16 %v934
    %v2752 = vunpack.c.l.b16 %v935
    %v2753 = vunpack.c.l.b16 %v936
    %v2754 = vunpack.c.l.b16 %v937
    %v2755 = vunpack.c.l.b16 %v938
    %v2756 = vunpack.c.l.b16 %v939
    %v2757 = vunpack.c.l.b16 %v940
    %v2758 = vunpack.c.l.b16 %v941
    %v2759 = vunpack.c.l.b16 %v942
    %v2760 = vunpack.c.l.b16 %v943
    %v2761 = vunpack.c.l.b16 %v944
    %v2762 = vunpack.c.l.b16 %v945
    %v2763 = vunpack.c.l.b16 %v946
    %v2764 = vunpack.c.l.b16 %v947
    %v2765 = vunpack.c.l.b16 %v948
    %v2766 = vunpack.c.l.b16 %v949
    %v2767 = vunpack.c.l.b16 %v950
    %v2768 = vunpack.c.l.b16 %v951
    %v2769 = vunpack.c.l.b16 %v952
    %v2770 = vunpack.c.l.b16 %v953
    %v2771 = vunpack.c.l.b16 %v954
    %v2772 = vunpack.c.l.b16 %v955
    %v2773 = vunpack.c.l.b16 %v956
    %v2774 = vunpack.c.l.b16 %v957
    %v2775 = vunpack.c.l.b16 %v958
    %v2776 = vunpack.c.l.b16 %v959
    %v2777 = vunpack.c.l.b16 %v960
    %v2778 = vunpack.c.l.b16 %v961
    %v2779 = vunpack.c.l.b16 %v962
    %v2780 = vunpack.c.l.b16 %v963
    %v2781 = vunpack.c.l.b16 %v964
    %v2782 = vunpack.c.l.b16 %v965
    %v2783 = vunpack.c.l.b16 %v966
    %v2784 = vunpack.c.l.b16 %v967
    %v2785 = vunpack.c.l.b16 %v968
    %v2786 = vunpack.c.l.b16 %v969
    %v2787 = vunpack.c.l.b16 %v970
    %v2788 = vunpack.c.l.b16 %v971
    %v2789 = vunpack.c.l.b16 %v972
    %v2790 = vunpack.c.l.b16 %v973
    %v2791 = vunpack.c.l.b16 %v974
    %v2792 = vunpack.c.l.b16 %v975
    %v2793 = vunpack.c.l.b16 %v976
    %v2794 = vunpack.c.l.b16 %v977
    %v2795 = vunpack.c.l.b16 %v978
    %v2796 = vunpack.c.l.b16 %v979
    %v2797 = vunpack.c.l.b16 %v980
    %v2798 = vunpack.c.l.b16 %v981
    %v2799 = vunpack.c.l.b16 %v982
    %v2800 = vunpack.c.l.b16 %v983
    %v2801 = vunpack.c.l.b16 %v984
    %v2802 = vunpack.c.l.b16 %v985
    %v2803 = vunpack.c.l.b16 %v986
    %v2804 = vunpack.c.l.b16 %v987
    %v2805 = vunpack.c.l.b16 %v988
    %v2806 = vunpack.c.l.b16 %v989
    %v2807 = vunpack.c.l.b16 %v990
    %v2808 = vunpack.c.l.b16 %v991
    %v2809 = vunpack.c.l.b16 %v992
    %v2810 = vunpack.c.l.b16 %v993
    %v2811 = vunpack.c.l.b16 %v994
    %v2812 = vunpack.c.l.b16 %v995
    %v2813 = vunpack.c.l.b16 %v996
    %v2814 = vunpack.c.l.b16 %v997
    %v2815 = vunpack.c.l.b16 %v998
    %v2816 = vunpack.c.l.b16 %v999
    %v2817 = vunpack.c.l.b16 %v1000
    %v2818 = vunpack.c.l.b16 %v1001
    %v2819 = vunpack.c.l.b16 %v1002
    %v2820 = vunpack.c.l.b16 %v1003
    %v2821 = vunpack.c.l.b16 %v1004
    %v2822 = vunpack.c.l.b16 %v1005
    %v2823 = vunpack.c.l.b16 %v1006
    %v2824 = vunpack.c.l.b16 %v1007
    %v2825 = vunpack.c.l.b16 %v1008
    %v2826 = vunpack.c.l.b16 %v1009
    %v2827 = vunpack.c.l.b16 %v1010
    %v2828 = vunpack.c.l.b16 %v1011
    %v2829 = vunpack.c.l.b16 %v1012
    %v2830 = vunpack.c.l.b16 %v1013
    %v2831 = vunpack.c.l.b16 %v1014
    %v2832 = vunpack.c.l.b16 %v1015
    %v2833 = vunpack.c.l.b16 %v1016
    %v2834 = vunpack.c.l.b16 %v1017
    %v2835 = vunpack.c.l.b16 %v1018
    %v2836 = vunpack.c.l.b16 %v1019
    %v2837 = vunpack.c.l.b16 %v1020
    %v2838 = vunpack.c.l.b16 %v1021
    %v2839 = vunpack.c.l.b16 %v1022
    %v2840 = vunpack.c.l.b16 %v1023
    %v2841 = vunpack.c.l.b16 %v1024
    %v2842 = vunpack.c.l.b16 %v1025
    %v2843 = vunpack.c.l.b16 %v1026
    %v2844 = vunpack.c.l.b16 %v1027
    %v2845 = vunpack.c.l.b16 %v1028
    %v2846 = vunpack.c.l.b16 %v1029
    %v2847 = vunpack.c.l.b16 %v1030
    %v2848 = vunpack.c.l.b16 %v1031
    %v2849 = vunpack.c.l.b16 %v1032
    %v2850 = vunpack.c.l.b16 %v1033
    %v2851 = vunpack.c.l.b16 %v1034
    %v2852 = vunpack.c.l.b16 %v1035
    %v2853 = vunpack.c.l.b16 %v1036
    %v2854 = vunpack.c.l.b16 %v1037
    %v2855 = vunpack.c.l.b16 %v1038
    %v2856 = vunpack.c.l.b16 %v1039
    %v2857 = vunpack.c.l.b16 %v1040
    %v2858 = vunpack.c.l.b16 %v1041
    %v2859 = vunpack.c.l.b16 %v1042
    %v2860 = vunpack.c.l.b16 %v1043
    %v2861 = vunpack.c.l.b16 %v1044
    %v2862 = vunpack.c.l.b16 %v1045
    %v2863 = vunpack.c.l.b16 %v1046
    %v2864 = vunpack.c.l.b16 %v1047
    %v2865 = vunpack.c.l.b16 %v1048
    %v2866 = vunpack.c.l.b16 %v1049
    %v2867 = vunpack.c.l.b16 %v1050
    %v2868 = vunpack.c.l.b16 %v1051
    %v2869 = vunpack.c.l.b16 %v1052
    %v2870 = vunpack.c.l.b16 %v1053
    %v2871 = vunpack.c.l.b16 %v1054
    %v2872 = vunpack.c.l.b16 %v1055
    %v2873 = vunpack.c.l.b16 %v1056
    %v2874 = vunpack.c.l.b16 %v1057
    %v2875 = vunpack.c.l.b16 %v1058
    %v2876 = vunpack.c.l.b16 %v1059
    %v2877 = vunpack.c.l.b16 %v1060
    %v2878 = vunpack.c.l.b16 %v1061
    %v2879 = vunpack.c.l.b16 %v1062
    %v2880 = vunpack.c.l.b16 %v1063
    %v2881 = vunpack.c.l.b16 %v1064
    %v2882 = vunpack.c.l.b16 %v1065
    %v2883 = vunpack.c.l.b16 %v1066
    %v2884 = vunpack.c.l.b16 %v1067
    %v2885 = vunpack.c.l.b16 %v1068
    %v2886 = vunpack.c.l.b16 %v1069
    %v2887 = vunpack.c.l.b16 %v1070
    %v2888 = vunpack.c.l.b16 %v1071
    %v2889 = vunpack.c.l.b16 %v1072
    %v2890 = vunpack.c.l.b16 %v1073
    %v2891 = vunpack.c.l.b16 %v1074
    %v2892 = vunpack.c.l.b16 %v1075
    %v2893 = vunpack.c.l.b16 %v1076
    %v2894 = vunpack.c.l.b16 %v1077
    %v2895 = vunpack.c.l.b16 %v1078
    %v2896 = vunpack.c.l.b16 %v1079
    %v2897 = vunpack.c.l.b16 %v1080
    %v2898 = vunpack.c.l.b16 %v1081
    %v2899 = vunpack.c.l.b16 %v1082
    %v2900 = vunpack.c.l.b16 %v1083
    %v2901 = vunpack.c.l.b16 %v1084
    %v2902 = vunpack.c.l.b16 %v1085
    %v2903 = vunpack.c.l.b16 %v1086
    %v2904 = vunpack.c.l.b16 %v1087
    %v2905 = vunpack.c.l.b16 %v1088
    %v2906 = vunpack.c.l.b16 %v1089
    %v2907 = vunpack.c.l.b16 %v1090
    %v2908 = vunpack.c.l.b16 %v1091
    %v2909 = vunpack.c.l.b16 %v1092
    %v2910 = vunpack.c.l.b16 %v1093
    %v2911 = vunpack.c.l.b16 %v1094
    %v2912 = vunpack.c.l.b16 %v1095
    %v2913 = vunpack.c.l.b16 %v1096
    %v2914 = vunpack.c.l.b16 %v1097
    %v2915 = vunpack.c.l.b16 %v1098
    %v2916 = vunpack.c.l.b16 %v1099
    %v2917 = vunpack.c.l.b16 %v1100
    %v2918 = vunpack.c.l.b16 %v1101
    %v2919 = vunpack.c.l.b16 %v1102
    %v2920 = vunpack.c.l.b16 %v1103
    %v2921 = vunpack.c.l.b16 %v1104
    %v2922 = vunpack.c.l.b16 %v1105
    %v2923 = vunpack.c.l.b16 %v1106
    %v2924 = vunpack.c.l.b16 %v1107
    %v2925 = vunpack.c.l.b16 %v1108
    %v2926 = vunpack.c.l.b16 %v1109
    %v2927 = vunpack.c.l.b16 %v1110
    %v2928 = vunpack.c.l.b16 %v1111
    %v2929 = vunpack.c.l.b16 %v1112
    %v2930 = vunpack.c.l.b16 %v1113
    %v2931 = vunpack.c.l.b16 %v1114
    %v2932 = vunpack.c.l.b16 %v1115
    %v2933 = vunpack.c.l.b16 %v1116
    %v2934 = vunpack.c.l.b16 %v1117
    %v2935 = vunpack.c.l.b16 %v1118
    %v2936 = vunpack.c.l.b16 %v1119
    %v2937 = vunpack.c.l.b16 %v1120
    %v2938 = vunpack.c.l.b16 %v1121
    %v2939 = vunpack.c.l.b16 %v1122
    %v2940 = vunpack.c.l.b16 %v1123
    %v2941 = vunpack.c.l.b16 %v1124
    %v2942 = vunpack.c.l.b16 %v1125
    %v2943 = vunpack.c.l.b16 %v1126
    %v2944 = vunpack.c.l.b16 %v1127
    %v2945 = vunpack.c.l.b16 %v1128
    %v2946 = vunpack.c.l.b16 %v1129
    %v2947 = vunpack.c.l.b16 %v1130
    %v2948 = vunpack.c.l.b16 %v1131
    %v2949 = vunpack.c.l.b16 %v1132
    %v2950 = vunpack.c.l.b16 %v1133
    %v2951 = vunpack.c.l.b16 %v1134
    %v2952 = vunpack.c.l.b16 %v1135
    %v2953 = vunpack.c.l.b16 %v1136
    %v2954 = vunpack.c.l.b16 %v1137
    %v2955 = vunpack.c.l.b16 %v1138
    %v2956 = vunpack.c.l.b16 %v1139
    %v2957 = vunpack.c.l.b16 %v1140
    %v2958 = vunpack.c.l.b16 %v1141
    %v2959 = vunpack.c.l.b16 %v1142
    %v2960 = vunpack.c.l.b16 %v1143
    %v2961 = vunpack.c.l.b16 %v1144
    %v2962 = vunpack.c.l.b16 %v1145
    %v2963 = vunpack.c.l.b16 %v1146
    %v2964 = vunpack.c.l.b16 %v1147
    %v2965 = vunpack.c.l.b16 %v1148
    %v2966 = vunpack.c.l.b16 %v1149
    %v2967 = vunpack.c.l.b16 %v1150
    %v2968 = vunpack.c.l.b16 %v1151
    %v2969 = vunpack.c.l.b16 %v1152
    %v2970 = vunpack.c.l.b16 %v1153
    %v2971 = vunpack.c.l.b16 %v1154
    %v2972 = vunpack.c.l.b16 %v1155
    %v2973 = vunpack.c.l.b16 %v1156
    %v2974 = vunpack.c.l.b16 %v1157
    %v2975 = vunpack.c.l.b16 %v1158
    %v2976 = vunpack.c.l.b16 %v1159
    %v2977 = vunpack.c.l.b16 %v1160
    %v2978 = vunpack.c.l.b16 %v1161
    %v2979 = vunpack.c.l.b16 %v1162
    %v2980 = vunpack.c.l.b16 %v1163
    %v2981 = vunpack.c.l.b16 %v1164
    %v2982 = vunpack.c.l.b16 %v1165
    %v2983 = vunpack.c.l.b16 %v1166
    %v2984 = vunpack.c.l.b16 %v1167
    %v2985 = vunpack.c.l.b16 %v1168
    %v2986 = vunpack.c.l.b16 %v1169
    %v2987 = vunpack.c.l.b16 %v1170
    %v2988 = vunpack.c.l.b16 %v1171
    %v2989 = vunpack.c.l.b16 %v1172
    %v2990 = vunpack.c.l.b16 %v1173
    %v2991 = vunpack.c.l.b16 %v1174
    %v2992 = vunpack.c.l.b16 %v1175
    %v2993 = vunpack.c.l.b16 %v1176
    %v2994 = vunpack.c.l.b16 %v1177
    %v2995 = vunpack.c.l.b16 %v1178
    %v2996 = vunpack.c.l.b16 %v1179
    %v2997 = vunpack.c.l.b16 %v1180
    %v2998 = vunpack.c.l.b16 %v1181
    %v2999 = vunpack.c.l.b16 %v1182
    %v3000 = vunpack.c.l.b16 %v1183
    %v3001 = vunpack.c.l.b16 %v1184
    %v3002 = vunpack.c.l.b16 %v1185
    %v3003 = vunpack.c.l.b16 %v1186
    %v3004 = vunpack.c.l.b16 %v1187
    %v3005 = vunpack.c.l.b16 %v1188
    %v3006 = vunpack.c.l.b16 %v1189
    %v3007 = vunpack.c.l.b16 %v1190
    %v3008 = vunpack.c.l.b16 %v1191
    %v3009 = vunpack.c.l.b16 %v1192
    %v3010 = vunpack.c.l.b16 %v1193
    %v3011 = vunpack.c.l.b16 %v1194
    %v3012 = vunpack.c.l.b16 %v1195
    %v3013 = vunpack.c.l.b16 %v1196
    %v3014 = vunpack.c.l.b16 %v1197
    %v3015 = vunpack.c.l.b16 %v1198
    %v3016 = vunpack.c.l.b16 %v1199
    %v3017 = vunpack.c.l.b16 %v1200
    %v3018 = vunpack.c.l.b16 %v1201
    %v3019 = vunpack.c.l.b16 %v1202
    %v3020 = vunpack.c.l.b16 %v1203
    %v3021 = vunpack.c.l.b16 %v1204
    %v3022 = vunpack.c.l.b16 %v1205
    %v3023 = vunpack.c.l.b16 %v1206
    %v3024 = vunpack.c.l.b16 %v1207
    %v3025 = vunpack.c.l.b16 %v1208
    %v3026 = vunpack.c.l.b16 %v1209
    %v3027 = vunpack.c.l.b16 %v1210
    %v3028 = vunpack.c.l.b16 %v1211
    %v3029 = vunpack.c.l.b16 %v1212
    %v3030 = vunpack.c.l.b16 %v1213
    %v3031 = vunpack.c.l.b16 %v1214
    %v3032 = vunpack.c.l.b16 %v1215
    %v3033 = vunpack.c.l.b16 %v1216
    %v3034 = vunpack.c.l.b16 %v1217
    %v3035 = vunpack.c.l.b16 %v1218
    %v3036 = vunpack.c.l.b16 %v1219
    %v3037 = vunpack.c.l.b16 %v1220
    %v3038 = vunpack.c.l.b16 %v1221
    %v3039 = vunpack.c.l.b16 %v1222
    %v3040 = vunpack.c.l.b16 %v1223
    %v3041 = vunpack.c.l.b16 %v1224
    %v3042 = vunpack.c.l.b16 %v1225
    %v3043 = vunpack.c.l.b16 %v1226
    %v3044 = vunpack.c.l.b16 %v1227
    %v3045 = vunpack.c.l.b16 %v1228
    %v3046 = vunpack.c.l.b16 %v1229
    %v3047 = vunpack.c.l.b16 %v1230
    %v3048 = vunpack.c.l.b16 %v1231
    %v3049 = vunpack.c.l.b16 %v1232
    %v3050 = vunpack.c.l.b16 %v1233
    %v3051 = vunpack.c.l.b16 %v1234
    %v3052 = vunpack.c.l.b16 %v1235
    %v3053 = vunpack.c.l.b16 %v1236
    %v3054 = vunpack.c.l.b16 %v1237
    %v3055 = vunpack.c.l.b16 %v1238
    %v3056 = vunpack.c.l.b16 %v1239
    %v3057 = vunpack.c.l.b16 %v1240
    %v3058 = vunpack.c.l.b16 %v1241
    %v3059 = vunpack.c.l.b16 %v1242
    %v3060 = vunpack.c.l.b16 %v1243
    %v3061 = vunpack.c.l.b16 %v1244
    %v3062 = vunpack.c.l.b16 %v1245
    %v3063 = vunpack.c.l.b16 %v1246
    %v3064 = vunpack.c.l.b16 %v1247
    %v3065 = vunpack.c.l.b16 %v1248
    %v3066 = vunpack.c.l.b16 %v1249
    %v3067 = vunpack.c.l.b16 %v1250
    %v3068 = vunpack.c.l.b16 %v1251
    %v3069 = vunpack.c.l.b16 %v1252
    %v3070 = vunpack.c.l.b16 %v1253
    %v3071 = vunpack.c.l.b16 %v1254
    %v3072 = vunpack.c.l.b16 %v1255
    %v3073 = vunpack.c.l.b16 %v1256
    %v3074 = vunpack.c.l.b16 %v1257
    %v3075 = vunpack.c.l.b16 %v1258
    %v3076 = vunpack.c.l.b16 %v1259
    %v3077 = vunpack.c.l.b16 %v1260
    %v3078 = vunpack.c.l.b16 %v1261
    %v3079 = vunpack.c.l.b16 %v1262
    %v3080 = vunpack.c.l.b16 %v1263
    %v3081 = vunpack.c.l.b16 %v1264
    %v3082 = vunpack.c.l.b16 %v1265
    %v3083 = vunpack.c.l.b16 %v1266
    %v3084 = vunpack.c.l.b16 %v1267
    %v3085 = vunpack.c.l.b16 %v1268
    %v3086 = vunpack.c.l.b16 %v1269
    %v3087 = vunpack.c.l.b16 %v1270
    %v3088 = vunpack.c.l.b16 %v1271
    %v3089 = vunpack.c.l.b16 %v1272
    %v3090 = vunpack.c.l.b16 %v1273
    %v3091 = vunpack.c.l.b16 %v1274
    %v3092 = vunpack.c.l.b16 %v1275
    %v3093 = vunpack.c.l.b16 %v1276
    %v3094 = vunpack.c.l.b16 %v1277
    %v3095 = vunpack.c.l.b16 %v1278
    %v3096 = vunpack.c.l.b16 %v1279
    %v3097 = vunpack.c.l.b16 %v1280
    %v3098 = vunpack.c.l.b16 %v1281
    %v3099 = vunpack.c.l.b16 %v1282
    %v3100 = vunpack.c.l.b16 %v1283
    %v3101 = vunpack.c.l.b16 %v1284
    %v3102 = vunpack.c.l.b16 %v1285
    %v3103 = vunpack.c.l.b16 %v1286
    %v3104 = vunpack.c.l.b16 %v1287
    %v3105 = vunpack.c.l.b16 %v1288
    %v3106 = vunpack.c.l.b16 %v1289
    %v3107 = vunpack.c.l.b16 %v1290
    %v3108 = vunpack.c.l.b16 %v1291
    %v3109 = vunpack.c.l.b16 %v1292
    %v3110 = vunpack.c.l.b16 %v1293
    %v3111 = vunpack.c.l.b16 %v1294
    %v3112 = vunpack.c.l.b16 %v1295
    %v3113 = vunpack.c.l.b16 %v1296
    %v3114 = vunpack.c.l.b16 %v1297
    %v3115 = vunpack.c.l.b16 %v1298
    %v3116 = vunpack.c.l.b16 %v1299
    %v3117 = vunpack.c.l.b16 %v1300
    %v3118 = vunpack.c.l.b16 %v1301
    %v3119 = vunpack.c.l.b16 %v1302
    %v3120 = vunpack.c.l.b16 %v1303
    %v3121 = vunpack.c.l.b16 %v1304
    %v3122 = vunpack.c.l.b16 %v1305
    %v3123 = vunpack.c.l.b16 %v1306
    %v3124 = vunpack.c.l.b16 %v1307
    %v3125 = vunpack.c.l.b16 %v1308
    %v3126 = vunpack.c.l.b16 %v1309
    %v3127 = vunpack.c.l.b16 %v1310
    %v3128 = vunpack.c.l.b16 %v1311
    %v3129 = vunpack.c.l.b16 %v1312
    %v3130 = vunpack.c.l.b16 %v1313
    %v3131 = vunpack.c.l.b16 %v1314
    %v3132 = vunpack.c.l.b16 %v1315
    %v3133 = vunpack.c.l.b16 %v1316
    %v3134 = vunpack.c.l.b16 %v1317
    %v3135 = vunpack.c.l.b16 %v1318
    %v3136 = vunpack.c.l.b16 %v1319
    %v3137 = vunpack.c.l.b16 %v1320
    %v3138 = vunpack.c.l.b16 %v1321
    %v3139 = vunpack.c.l.b16 %v1322
    %v3140 = vunpack.c.l.b16 %v1323
    %v3141 = vunpack.c.l.b16 %v1324
    %v3142 = vunpack.c.l.b16 %v1325
    %v3143 = vunpack.c.l.b16 %v1326
    %v3144 = vunpack.c.l.b16 %v1327
    %v3145 = vunpack.c.l.b16 %v1328
    %v3146 = vunpack.c.l.b16 %v1329
    %v3147 = vunpack.c.l.b16 %v1330
    %v3148 = vunpack.c.l.b16 %v1331
    %v3149 = vunpack.c.l.b16 %v1332
    %v3150 = vunpack.c.l.b16 %v1333
    %v3151 = vunpack.c.l.b16 %v1334
    %v3152 = vunpack.c.l.b16 %v1335
    %v3153 = vunpack.c.l.b16 %v1336
    %v3154 = vunpack.c.l.b16 %v1337
    %v3155 = vunpack.c.l.b16 %v1338
    %v3156 = vunpack.c.l.b16 %v1339
    %v3157 = vunpack.c.l.b16 %v1340
    %v3158 = vunpack.c.l.b16 %v1341
    %v3159 = vunpack.c.l.b16 %v1342
    %v3160 = vunpack.c.l.b16 %v1343
    %v3161 = vunpack.c.l.b16 %v1344
    %v3162 = vunpack.c.l.b16 %v1345
    %v3163 = vunpack.c.l.b16 %v1346
    %v3164 = vunpack.c.l.b16 %v1347
    %v3165 = vunpack.c.l.b16 %v1348
    %v3166 = vunpack.c.l.b16 %v1349
    %v3167 = vunpack.c.l.b16 %v1350
    %v3168 = vunpack.c.l.b16 %v1351
    %v3169 = vunpack.c.l.b16 %v1352
    %v3170 = vunpack.c.l.b16 %v1353
    %v3171 = vunpack.c.l.b16 %v1354
    %v3172 = vunpack.c.l.b16 %v1355
    %v3173 = vunpack.c.l.b16 %v1356
    %v3174 = vunpack.c.l.b16 %v1357
    %v3175 = vunpack.c.l.b16 %v1358
    %v3176 = vunpack.c.l.b16 %v1359
    %v3177 = vunpack.c.l.b16 %v1360
    %v3178 = vunpack.c.l.b16 %v1361
    %v3179 = vunpack.c.l.b16 %v1362
    %v3180 = vunpack.c.l.b16 %v1363
    %v3181 = vunpack.c.l.b16 %v1364
    %v3182 = vunpack.c.l.b16 %v1365
    %v3183 = vunpack.c.l.b16 %v1366
    %v3184 = vunpack.c.l.b16 %v1367
    %v3185 = vunpack.c.l.b16 %v1368
    %v3186 = vunpack.c.l.b16 %v1369
    %v3187 = vunpack.c.l.b16 %v1370
    %v3188 = vunpack.c.l.b16 %v1371
    %v3189 = vunpack.c.l.b16 %v1372
    %v3190 = vunpack.c.l.b16 %v1373
    %v3191 = vunpack.c.l.b16 %v1374
    %v3192 = vunpack.c.l.b16 %v1375
    %v3193 = vunpack.c.l.b16 %v1376
    %v3194 = vunpack.c.l.b16 %v1377
    %v3195 = vunpack.c.l.b16 %v1378
    %v3196 = vunpack.c.l.b16 %v1379
    %v3197 = vunpack.c.l.b16 %v1380
    %v3198 = vunpack.c.l.b16 %v1381
    %v3199 = vunpack.c.l.b16 %v1382
    %v3200 = vunpack.c.l.b16 %v1383
    %v3201 = vunpack.c.l.b16 %v1384
    %v3202 = vunpack.c.l.b16 %v1385
    %v3203 = vunpack.c.l.b16 %v1386
    %v3204 = vunpack.c.l.b16 %v1387
    %v3205 = vunpack.c.l.b16 %v1388
    %v3206 = vunpack.c.l.b16 %v1389
    %v3207 = vunpack.c.l.b16 %v1390
    %v3208 = vunpack.c.l.b16 %v1391
    %v3209 = vunpack.c.l.b16 %v1392
    %v3210 = vunpack.c.l.b16 %v1393
    %v3211 = vunpack.c.l.b16 %v1394
    %v3212 = vunpack.c.l.b16 %v1395
    %v3213 = vunpack.c.l.b16 %v1396
    %v3214 = vunpack.c.l.b16 %v1397
    %v3215 = vunpack.c.l.b16 %v1398
    %v3216 = vunpack.c.l.b16 %v1399
    %v3217 = vunpack.c.l.b16 %v1400
    %v3218 = vunpack.c.l.b16 %v1401
    %v3219 = vunpack.c.l.b16 %v1402
    %v3220 = vunpack.c.l.b16 %v1403
    %v3221 = vunpack.c.l.b16 %v1404
    %v3222 = vunpack.c.l.b16 %v1405
    %v3223 = vunpack.c.l.b16 %v1406
    %v3224 = vunpack.c.l.b16 %v1407
    %v3225 = vunpack.c.l.b16 %v1408
    %v3226 = vunpack.c.l.b16 %v1409
    %v3227 = vunpack.c.l.b16 %v1410
    %v3228 = vunpack.c.l.b16 %v1411
    %v3229 = vunpack.c.l.b16 %v1412
    %v3230 = vunpack.c.l.b16 %v1413
    %v3231 = vunpack.c.l.b16 %v1414
    %v3232 = vunpack.c.l.b16 %v1415
    %v3233 = vunpack.c.l.b16 %v1416
    %v3234 = vunpack.c.l.b16 %v1417
    %v3235 = vunpack.c.l.b16 %v1418
    %v3236 = vunpack.c.l.b16 %v1419
    %v3237 = vunpack.c.l.b16 %v1420
    %v3238 = vunpack.c.l.b16 %v1421
    %v3239 = vunpack.c.l.b16 %v1422
    %v3240 = vunpack.c.l.b16 %v1423
    %v3241 = vunpack.c.l.b16 %v1424
    %v3242 = vunpack.c.l.b16 %v1425
    %v3243 = vunpack.c.l.b16 %v1426
    %v3244 = vunpack.c.l.b16 %v1427
    %v3245 = vunpack.c.l.b16 %v1428
    %v3246 = vunpack.c.l.b16 %v1429
    %v3247 = vunpack.c.l.b16 %v1430
    %v3248 = vunpack.c.l.b16 %v1431
    %v3249 = vunpack.c.l.b16 %v1432
    %v3250 = vunpack.c.l.b16 %v1433
    %v3251 = vunpack.c.l.b16 %v1434
    %v3252 = vunpack.c.l.b16 %v1435
    %v3253 = vunpack.c.l.b16 %v1436
    %v3254 = vunpack.c.l.b16 %v1437
    %v3255 = vunpack.c.l.b16 %v1438
    %v3256 = vunpack.c.l.b16 %v1439
    %v3257 = vunpack.c.l.b16 %v1440
    %v3258 = vunpack.c.l.b16 %v1441
    %v3259 = vunpack.c.l.b16 %v1442
    %v3260 = vunpack.c.l.b16 %v1443
    %v3261 = vunpack.c.l.b16 %v1444
    %v3262 = vunpack.c.l.b16 %v1445
    %v3263 = vunpack.c.l.b16 %v1446
    %v3264 = vunpack.c.l.b16 %v1447
    %v3265 = vunpack.c.l.b16 %v1448
    %v3266 = vunpack.c.l.b16 %v1449
    %v3267 = vunpack.c.l.b16 %v1450
    %v3268 = vunpack.c.l.b16 %v1451
    %v3269 = vunpack.c.l.b16 %v1452
    %v3270 = vunpack.c.l.b16 %v1453
    %v3271 = vunpack.c.l.b16 %v1454
    %v3272 = vunpack.c.l.b16 %v1455
    %v3273 = vunpack.c.l.b16 %v1456
    %v3274 = vunpack.c.l.b16 %v1457
    %v3275 = vunpack.c.l.b16 %v1458
    %v3276 = vunpack.c.l.b16 %v1459
    %v3277 = vunpack.c.l.b16 %v1460
    %v3278 = vunpack.c.l.b16 %v1461
    %v3279 = vunpack.c.l.b16 %v1462
    %v3280 = vunpack.c.l.b16 %v1463
    %v3281 = vunpack.c.l.b16 %v1464
    %v3282 = vunpack.c.l.b16 %v1465
    %v3283 = vunpack.c.l.b16 %v1466
    %v3284 = vunpack.c.l.b16 %v1467
    %v3285 = vunpack.c.l.b16 %v1468
    %v3286 = vunpack.c.l.b16 %v1469
    %v3287 = vunpack.c.l.b16 %v1470
    %v3288 = vunpack.c.l.b16 %v1471
    %v3289 = vunpack.c.l.b16 %v1472
    %v3290 = vunpack.c.l.b16 %v1473
    %v3291 = vunpack.c.l.b16 %v1474
    %v3292 = vunpack.c.l.b16 %v1475
    %v3293 = vunpack.c.l.b16 %v1476
    %v3294 = vunpack.c.l.b16 %v1477
    %v3295 = vunpack.c.l.b16 %v1478
    %v3296 = vunpack.c.l.b16 %v1479
    %v3297 = vunpack.c.l.b16 %v1480
    %v3298 = vunpack.c.l.b16 %v1481
    %v3299 = vunpack.c.l.b16 %v1482
    %v3300 = vunpack.c.l.b16 %v1483
    %v3301 = vunpack.c.l.b16 %v1484
    %v3302 = vunpack.c.l.b16 %v1485
    %v3303 = vunpack.c.l.b16 %v1486
    %v3304 = vunpack.c.l.b16 %v1487
    %v3305 = vunpack.c.l.b16 %v1488
    %v3306 = vunpack.c.l.b16 %v1489
    %v3307 = vunpack.c.l.b16 %v1490
    %v3308 = vunpack.c.l.b16 %v1491
    %v3309 = vunpack.c.l.b16 %v1492
    %v3310 = vunpack.c.l.b16 %v1493
    %v3311 = vunpack.c.l.b16 %v1494
    %v3312 = vunpack.c.l.b16 %v1495
    %v3313 = vunpack.c.l.b16 %v1496
    %v3314 = vunpack.c.l.b16 %v1497
    %v3315 = vunpack.c.l.b16 %v1498
    %v3316 = vunpack.c.l.b16 %v1499
    %v3317 = vunpack.c.l.b16 %v1500
    %v3318 = vunpack.c.l.b16 %v1501
    %v3319 = vunpack.c.l.b16 %v1502
    %v3320 = vunpack.c.l.b16 %v1503
    %v3321 = vunpack.c.l.b16 %v1504
    %v3322 = vunpack.c.l.b16 %v1505
    %v3323 = vunpack.c.l.b16 %v1506
    %v3324 = vunpack.c.l.b16 %v1507
    %v3325 = vunpack.c.l.b16 %v1508
    %v3326 = vunpack.c.l.b16 %v1509
    %v3327 = vunpack.c.l.b16 %v1510
    %v3328 = vunpack.c.l.b16 %v1511
    %v3329 = vunpack.c.l.b16 %v1512
    %v3330 = vunpack.c.l.b16 %v1513
    %v3331 = vunpack.c.l.b16 %v1514
    %v3332 = vunpack.c.l.b16 %v1515
    %v3333 = vunpack.c.l.b16 %v1516
    %v3334 = vunpack.c.l.b16 %v1517
    %v3335 = vunpack.c.l.b16 %v1518
    %v3336 = vunpack.c.l.b16 %v1519
    %v3337 = vunpack.c.l.b16 %v1520
    %v3338 = vunpack.c.l.b16 %v1521
    %v3339 = vunpack.c.l.b16 %v1522
    %v3340 = vunpack.c.l.b16 %v1523
    %v3341 = vunpack.c.l.b16 %v1524
    %v3342 = vunpack.c.l.b16 %v1525
    %v3343 = vunpack.c.l.b16 %v1526
    %v3344 = vunpack.c.l.b16 %v1527
    %v3345 = vunpack.c.l.b16 %v1528
    %v3346 = vunpack.c.l.b16 %v1529
    %v3347 = vunpack.c.l.b16 %v1530
    %v3348 = vunpack.c.l.b16 %v1531
    %v3349 = vunpack.c.l.b16 %v1532
    %v3350 = vunpack.c.l.b16 %v1533
    %v3351 = vunpack.c.l.b16 %v1534
    %v3352 = vunpack.c.l.b16 %v1535
    %v3353 = vunpack.c.l.b16 %v1536
    %v3354 = vunpack.c.l.b16 %v1537
    %v3355 = vunpack.c.l.b16 %v1538
    %v3356 = vunpack.c.l.b16 %v1539
    %v3357 = vunpack.c.l.b16 %v1540
    %v3358 = vunpack.c.l.b16 %v1541
    %v3359 = vunpack.c.l.b16 %v1542
    %v3360 = vunpack.c.l.b16 %v1543
    %v3361 = vunpack.c.l.b16 %v1544
    %v3362 = vunpack.c.l.b16 %v1545
    %v3363 = vunpack.c.l.b16 %v1546
    %v3364 = vunpack.c.l.b16 %v1547
    %v3365 = vunpack.c.l.b16 %v1548
    %v3366 = vunpack.c.l.b16 %v1549
    %v3367 = vunpack.c.l.b16 %v1550
    %v3368 = vunpack.c.l.b16 %v1551
    %v3369 = vunpack.c.l.b16 %v1552
    %v3370 = vunpack.c.l.b16 %v1553
    %v3371 = vunpack.c.l.b16 %v1554
    %v3372 = vunpack.c.l.b16 %v1555
    %v3373 = vunpack.c.l.b16 %v1556
    %v3374 = vunpack.c.l.b16 %v1557
    %v3375 = vunpack.c.l.b16 %v1558
    %v3376 = vunpack.c.l.b16 %v1559
    %v3377 = vunpack.c.l.b16 %v1560
    %v3378 = vunpack.c.l.b16 %v1561
    %v3379 = vunpack.c.l.b16 %v1562
    %v3380 = vunpack.c.l.b16 %v1563
    %v3381 = vunpack.c.l.b16 %v1564
    %v3382 = vunpack.c.l.b16 %v1565
    %v3383 = vunpack.c.l.b16 %v1566
    %v3384 = vunpack.c.l.b16 %v1567
    %v3385 = vunpack.c.l.b16 %v1568
    %v3386 = vunpack.c.l.b16 %v1569
    %v3387 = vunpack.c.l.b16 %v1570
    %v3388 = vunpack.c.l.b16 %v1571
    %v3389 = vunpack.c.l.b16 %v1572
    %v3390 = vunpack.c.l.b16 %v1573
    %v3391 = vunpack.c.l.b16 %v1574
    %v3392 = vunpack.c.l.b16 %v1575
    %v3393 = vunpack.c.l.b16 %v1576
    %v3394 = vunpack.c.l.b16 %v1577
    %v3395 = vunpack.c.l.b16 %v1578
    %v3396 = vunpack.c.l.b16 %v1579
    %v3397 = vunpack.c.l.b16 %v1580
    %v3398 = vunpack.c.l.b16 %v1581
    %v3399 = vunpack.c.l.b16 %v1582
    %v3400 = vunpack.c.l.b16 %v1583
    %v3401 = vunpack.c.l.b16 %v1584
    %v3402 = vunpack.c.l.b16 %v1585
    %v3403 = vunpack.c.l.b16 %v1586
    %v3404 = vunpack.c.l.b16 %v1587
    %v3405 = vunpack.c.l.b16 %v1588
    %v3406 = vunpack.c.l.b16 %v1589
    %v3407 = vunpack.c.l.b16 %v1590
    %v3408 = vunpack.c.l.b16 %v1591
    %v3409 = vunpack.c.l.b16 %v1592
    %v3410 = vunpack.c.l.b16 %v1593
    %v3411 = vunpack.c.l.b16 %v1594
    %v3412 = vunpack.c.l.b16 %v1595
    %v3413 = vunpack.c.l.b16 %v1596
    %v3414 = vunpack.c.l.b16 %v1597
    %v3415 = vunpack.c.l.b16 %v1598
    %v3416 = vunpack.c.l.b16 %v1599
    %v3417 = vunpack.c.l.b16 %v1600
    %v3418 = vunpack.c.l.b16 %v1601
    %v3419 = vunpack.c.l.b16 %v1602
    %v3420 = vunpack.c.l.b16 %v1603
    %v3421 = vunpack.c.l.b16 %v1604
    %v3422 = vunpack.c.l.b16 %v1605
    %v3423 = vunpack.c.l.b16 %v1606
    %v3424 = vunpack.c.l.b16 %v1607
    %v3425 = vunpack.c.l.b16 %v1608
    %v3426 = vunpack.c.l.b16 %v1609
    %v3427 = vunpack.c.l.b16 %v1610
    %v3428 = vunpack.c.l.b16 %v1611
    %v3429 = vunpack.c.l.b16 %v1612
    %v3430 = vunpack.c.l.b16 %v1613
    %v3431 = vunpack.c.l.b16 %v1614
    %v3432 = vunpack.c.l.b16 %v1615
    %v3433 = vunpack.c.l.b16 %v1616
    %v3434 = vunpack.c.l.b16 %v1617
    %v3435 = vunpack.c.l.b16 %v1618
    %v3436 = vunpack.c.l.b16 %v1619
    %v3437 = vunpack.c.l.b16 %v1620
    %v3438 = vunpack.c.l.b16 %v1621
    %v3439 = vunpack.c.l.b16 %v1622
    %v3440 = vunpack.c.l.b16 %v1623
    %v3441 = vunpack.c.l.b16 %v1624
    %v3442 = vunpack.c.l.b16 %v1625
    %v3443 = vunpack.c.l.b16 %v1626
    %v3444 = vunpack.c.l.b16 %v1627
    %v3445 = vunpack.c.l.b16 %v1628
    %v3446 = vunpack.c.l.b16 %v1629
    %v3447 = vunpack.c.l.b16 %v1630
    %v3448 = vunpack.c.l.b16 %v1631
    %v3449 = vunpack.c.l.b16 %v1632
    %v3450 = vunpack.c.l.b16 %v1633
    %v3451 = vunpack.c.l.b16 %v1634
    %v3452 = vunpack.c.l.b16 %v1635
    %v3453 = vunpack.c.l.b16 %v1636
    %v3454 = vunpack.c.l.b16 %v1637
    %v3455 = vunpack.c.l.b16 %v1638
    %v3456 = vunpack.c.l.b16 %v1639
    %v3457 = vunpack.c.l.b16 %v1640
    %v3458 = vunpack.c.l.b16 %v1641
    %v3459 = vunpack.c.l.b16 %v1642
    %v3460 = vunpack.c.l.b16 %v1643
    %v3461 = vunpack.c.l.b16 %v1644
    %v3462 = vunpack.c.l.b16 %v1645
    %v3463 = vunpack.c.l.b16 %v1646
    %v3464 = vunpack.c.l.b16 %v1647
    %v3465 = vunpack.c.l.b16 %v1648
    %v3466 = vunpack.c.l.b16 %v1649
    %v3467 = vunpack.c.l.b16 %v1650
    %v3468 = vunpack.c.l.b16 %v1651
    %v3469 = vunpack.c.l.b16 %v1652
    %v3470 = vunpack.c.l.b16 %v1653
    %v3471 = vunpack.c.l.b16 %v1654
    %v3472 = vunpack.c.l.b16 %v1655
    %v3473 = vunpack.c.l.b16 %v1656
    %v3474 = vunpack.c.l.b16 %v1657
    %v3475 = vunpack.c.l.b16 %v1658
    %v3476 = vunpack.c.l.b16 %v1659
    %v3477 = vunpack.c.l.b16 %v1660
    %v3478 = vunpack.c.l.b16 %v1661
    %v3479 = vunpack.c.l.b16 %v1662
    %v3480 = vunpack.c.l.b16 %v1663
    %v3481 = vunpack.c.l.b16 %v1664
    %v3482 = vunpack.c.l.b16 %v1665
    %v3483 = vunpack.c.l.b16 %v1666
    %v3484 = vunpack.c.l.b16 %v1667
    %v3485 = vunpack.c.l.b16 %v1668
    %v3486 = vunpack.c.l.b16 %v1669
    %v3487 = vunpack.c.l.b16 %v1670
    %v3488 = vunpack.c.l.b16 %v1671
    %v3489 = vunpack.c.l.b16 %v1672
    %v3490 = vunpack.c.l.b16 %v1673
    %v3491 = vunpack.c.l.b16 %v1674
    %v3492 = vunpack.c.l.b16 %v1675
    %v3493 = vunpack.c.l.b16 %v1676
    %v3494 = vunpack.c.l.b16 %v1677
    %v3495 = vunpack.c.l.b16 %v1678
    %v3496 = vunpack.c.l.b16 %v1679
    %v3497 = vunpack.c.l.b16 %v1680
    %v3498 = vunpack.c.l.b16 %v1681
    %v3499 = vunpack.c.l.b16 %v1682
    %v3500 = vunpack.c.l.b16 %v1683
    %v3501 = vunpack.c.l.b16 %v1684
    %v3502 = vunpack.c.l.b16 %v1685
    %v3503 = vunpack.c.l.b16 %v1686
    %v3504 = vunpack.c.l.b16 %v1687
    %v3505 = vunpack.c.l.b16 %v1688
    %v3506 = vunpack.c.l.b16 %v1689
    %v3507 = vunpack.c.l.b16 %v1690
    %v3508 = vunpack.c.l.b16 %v1691
    %v3509 = vunpack.c.l.b16 %v1692
    %v3510 = vunpack.c.l.b16 %v1693
    %v3511 = vunpack.c.l.b16 %v1694
    %v3512 = vunpack.c.l.b16 %v1695
    %v3513 = vunpack.c.l.b16 %v1696
    %v3514 = vunpack.c.l.b16 %v1697
    %v3515 = vunpack.c.l.b16 %v1698
    %v3516 = vunpack.c.l.b16 %v1699
    %v3517 = vunpack.c.l.b16 %v1700
    %v3518 = vunpack.c.l.b16 %v1701
    %v3519 = vunpack.c.l.b16 %v1702
    %v3520 = vunpack.c.l.b16 %v1703
    %v3521 = vunpack.c.l.b16 %v1704
    %v3522 = vunpack.c.l.b16 %v1705
    %v3523 = vunpack.c.l.b16 %v1706
    %v3524 = vunpack.c.l.b16 %v1707
    %v3525 = vunpack.c.l.b16 %v1708
    %v3526 = vunpack.c.l.b16 %v1709
    %v3527 = vunpack.c.l.b16 %v1710
    %v3528 = vunpack.c.l.b16 %v1711
    %v3529 = vunpack.c.l.b16 %v1712
    %v3530 = vunpack.c.l.b16 %v1713
    %v3531 = vunpack.c.l.b16 %v1714
    %v3532 = vunpack.c.l.b16 %v1715
    %v3533 = vunpack.c.l.b16 %v1716
    %v3534 = vunpack.c.l.b16 %v1717
    %v3535 = vunpack.c.l.b16 %v1718
    %v3536 = vunpack.c.l.b16 %v1719
    %v3537 = vunpack.c.l.b16 %v1720
    %v3538 = vunpack.c.l.b16 %v1721
    %v3539 = vunpack.c.l.b16 %v1722
    %v3540 = vunpack.c.l.b16 %v1723
    %v3541 = vunpack.c.l.b16 %v1724
    %v3542 = vunpack.c.l.b16 %v1725
    %v3543 = vunpack.c.l.b16 %v1726
    %v3544 = vunpack.c.l.b16 %v1727
    %v3545 = vunpack.c.l.b16 %v1728
    %v3546 = vunpack.c.l.b16 %v1729
    %v3547 = vunpack.c.l.b16 %v1730
    %v3548 = vunpack.c.l.b16 %v1731
    %v3549 = vunpack.c.l.b16 %v1732
    %v3550 = vunpack.c.l.b16 %v1733
    %v3551 = vunpack.c.l.b16 %v1734
    %v3552 = vunpack.c.l.b16 %v1735
    %v3553 = vunpack.c.l.b16 %v1736
    %v3554 = vunpack.c.l.b16 %v1737
    %v3555 = vunpack.c.l.b16 %v1738
    %v3556 = vunpack.c.l.b16 %v1739
    %v3557 = vunpack.c.l.b16 %v1740
    %v3558 = vunpack.c.l.b16 %v1741
    %v3559 = vunpack.c.l.b16 %v1742
    %v3560 = vunpack.c.l.b16 %v1743
    %v3561 = vunpack.c.l.b16 %v1744
    %v3562 = vunpack.c.l.b16 %v1745
    %v3563 = vunpack.c.l.b16 %v1746
    %v3564 = vunpack.c.l.b16 %v1747
    %v3565 = vunpack.c.l.b16 %v1748
    %v3566 = vpack.c.b16 %v2662, %v2661
    %v3567 = vpack.c.b16 %v2664, %v2663
    %v3568 = vpack.c.b16 %v2666, %v2665
    %v3569 = vpack.c.b16 %v2668, %v2667
    %v3570 = vpack.c.b16 %v2670, %v2669
    %v3571 = vpack.c.b16 %v2672, %v2671
    %v3572 = vpack.c.b16 %v2674, %v2673
    %v3573 = vpack.c.b16 %v2676, %v2675
    %v3574 = vpack.c.b16 %v2678, %v2677
    %v3575 = vpack.c.b16 %v2680, %v2679
    %v3576 = vpack.c.b16 %v2682, %v2681
    %v3577 = vpack.c.b16 %v2684, %v2683
    %v3578 = vpack.c.b16 %v2686, %v2685
    %v3579 = vpack.c.b16 %v2688, %v2687
    %v3580 = vpack.c.b16 %v2690, %v2689
    %v3581 = vpack.c.b16 %v2692, %v2691
    %v3582 = vpack.c.b16 %v2694, %v2693
    %v3583 = vpack.c.b16 %v2696, %v2695
    %v3584 = vpack.c.b16 %v2698, %v2697
    %v3585 = vpack.c.b16 %v2700, %v2699
    %v3586 = vpack.c.b16 %v2702, %v2701
    %v3587 = vpack.c.b16 %v2704, %v2703
    %v3588 = vpack.c.b16 %v2706, %v2705
    %v3589 = vpack.c.b16 %v2708, %v2707
    %v3590 = vpack.c.b16 %v2710, %v2709
    %v3591 = vpack.c.b16 %v2712, %v2711
    %v3592 = vpack.c.b16 %v2714, %v2713
    %v3593 = vpack.c.b16 %v2716, %v2715
    %v3594 = vpack.c.b16 %v2718, %v2717
    %v3595 = vpack.c.b16 %v2720, %v2719
    %v3596 = vpack.c.b16 %v2722, %v2721
    %v3597 = vpack.c.b16 %v2724, %v2723
    %v3598 = vpack.c.b16 %v2726, %v2725
    %v3599 = vpack.c.b16 %v2728, %v2727
    %v3600 = vpack.c.b16 %v2730, %v2729
    %v3601 = vpack.c.b16 %v2732, %v2731
    %v3602 = vpack.c.b16 %v2734, %v2733
    %v3603 = vpack.c.b16 %v2736, %v2735
    %v3604 = vpack.c.b16 %v2738, %v2737
    %v3605 = vpack.c.b16 %v2740, %v2739
    %v3606 = vpack.c.b16 %v2742, %v2741
    %v3607 = vpack.c.b16 %v2744, %v2743
    %v3608 = vpack.c.b16 %v2746, %v2745
    %v3609 = vpack.c.b16 %v2748, %v2747
    %v3610 = vpack.c.b16 %v2750, %v2749
    %v3611 = vpack.c.b16 %v2752, %v2751
    %v3612 = vpack.c.b16 %v2754, %v2753
    %v3613 = vpack.c.b16 %v2756, %v2755
    %v3614 = vpack.c.b16 %v2758, %v2757
    %v3615 = vpack.c.b16 %v2760, %v2759
    %v3616 = vpack.c.b16 %v2762, %v2761
    %v3617 = vpack.c.b16 %v2764, %v2763
    %v3618 = vpack.c.b16 %v2766, %v2765
    %v3619 = vpack.c.b16 %v2768, %v2767
    %v3620 = vpack.c.b16 %v2770, %v2769
    %v3621 = vpack.c.b16 %v2772, %v2771
    %v3622 = vpack.c.b16 %v2774, %v2773
    %v3623 = vpack.c.b16 %v2776, %v2775
    %v3624 = vpack.c.b16 %v2778, %v2777
    %v3625 = vpack.c.b16 %v2780, %v2779
    %v3626 = vpack.c.b16 %v2782, %v2781
    %v3627 = vpack.c.b16 %v2784, %v2783
    %v3628 = vpack.c.b16 %v2786, %v2785
    %v3629 = vpack.c.b16 %v2788, %v2787
    %v3630 = vpack.c.b16 %v2790, %v2789
    %v3631 = vpack.c.b16 %v2792, %v2791
    %v3632 = vpack.c.b16 %v2794, %v2793
    %v3633 = vpack.c.b16 %v2796, %v2795
    %v3634 = vpack.c.b16 %v2798, %v2797
    %v3635 = vpack.c.b16 %v2800, %v2799
    %v3636 = vpack.c.b16 %v2802, %v2801
    %v3637 = vpack.c.b16 %v2804, %v2803
    %v3638 = vpack.c.b16 %v2806, %v2805
    %v3639 = vpack.c.b16 %v2808, %v2807
    %v3640 = vpack.c.b16 %v2810, %v2809
    %v3641 = vpack.c.b16 %v2812, %v2811
    %v3642 = vpack.c.b16 %v2814, %v2813
    %v3643 = vpack.c.b16 %v2816, %v2815
    %v3644 = vpack.c.b16 %v2818, %v2817
    %v3645 = vpack.c.b16 %v2820, %v2819
    %v3646 = vpack.c.b16 %v2822, %v2821
    %v3647 = vpack.c.b16 %v2824, %v2823
    %v3648 = vpack.c.b16 %v2826, %v2825
    %v3649 = vpack.c.b16 %v2828, %v2827
    %v3650 = vpack.c.b16 %v2830, %v2829
    %v3651 = vpack.c.b16 %v2832, %v2831
    %v3652 = vpack.c.b16 %v2834, %v2833
    %v3653 = vpack.c.b16 %v2836, %v2835
    %v3654 = vpack.c.b16 %v2838, %v2837
    %v3655 = vpack.c.b16 %v2840, %v2839
    %v3656 = vpack.c.b16 %v2842, %v2841
    %v3657 = vpack.c.b16 %v2844, %v2843
    %v3658 = vpack.c.b16 %v2846, %v2845
    %v3659 = vpack.c.b16 %v2848, %v2847
    %v3660 = vpack.c.b16 %v2850, %v2849
    %v3661 = vpack.c.b16 %v2852, %v2851
    %v3662 = vpack.c.b16 %v2854, %v2853
    %v3663 = vpack.c.b16 %v2856, %v2855
    %v3664 = vpack.c.b16 %v2858, %v2857
    %v3665 = vpack.c.b16 %v2860, %v2859
    %v3666 = vpack.c.b16 %v2862, %v2861
    %v3667 = vpack.c.b16 %v2864, %v2863
    %v3668 = vpack.c.b16 %v2866, %v2865
    %v3669 = vpack.c.b16 %v2868, %v2867
    %v3670 = vpack.c.b16 %v2870, %v2869
    %v3671 = vpack.c.b16 %v2872, %v2871
    %v3672 = vpack.c.b16 %v2874, %v2873
    %v3673 = vpack.c.b16 %v2876, %v2875
    %v3674 = vpack.c.b16 %v2878, %v2877
    %v3675 = vpack.c.b16 %v2880, %v2879
    %v3676 = vpack.c.b16 %v2882, %v2881
    %v3677 = vpack.c.b16 %v2884, %v2883
    %v3678 = vpack.c.b16 %v2886, %v2885
    %v3679 = vpack.c.b16 %v2888, %v2887
    %v3680 = vpack.c.b16 %v2890, %v2889
    %v3681 = vpack.c.b16 %v2892, %v2891
    %v3682 = vpack.c.b16 %v2894, %v2893
    %v3683 = vpack.c.b16 %v2896, %v2895
    %v3684 = vpack.c.b16 %v2898, %v2897
    %v3685 = vpack.c.b16 %v2900, %v2899
    %v3686 = vpack.c.b16 %v2902, %v2901
    %v3687 = vpack.c.b16 %v2904, %v2903
    %v3688 = vpack.c.b16 %v2906, %v2905
    %v3689 = vpack.c.b16 %v2908, %v2907
    %v3690 = vpack.c.b16 %v2910, %v2909
    %v3691 = vpack.c.b16 %v2912, %v2911
    %v3692 = vpack.c.b16 %v2914, %v2913
    %v3693 = vpack.c.b16 %v2916, %v2915
    %v3694 = vpack.c.b16 %v2918, %v2917
    %v3695 = vpack.c.b16 %v2920, %v2919
    %v3696 = vpack.c.b16 %v2922, %v2921
    %v3697 = vpack.c.b16 %v2924, %v2923
    %v3698 = vpack.c.b16 %v2926, %v2925
    %v3699 = vpack.c.b16 %v2928, %v2927
    %v3700 = vpack.c.b16 %v2930, %v2929
    %v3701 = vpack.c.b16 %v2932, %v2931
    %v3702 = vpack.c.b16 %v2934, %v2933
    %v3703 = vpack.c.b16 %v2936, %v2935
    %v3704 = vpack.c.b16 %v2938, %v2937
    %v3705 = vpack.c.b16 %v2940, %v2939
    %v3706 = vpack.c.b16 %v2942, %v2941
    %v3707 = vpack.c.b16 %v2944, %v2943
    %v3708 = vpack.c.b16 %v2946, %v2945
    %v3709 = vpack.c.b16 %v2948, %v2947
    %v3710 = vpack.c.b16 %v2950, %v2949
    %v3711 = vpack.c.b16 %v2952, %v2951
    %v3712 = vpack.c.b16 %v2954, %v2953
    %v3713 = vpack.c.b16 %v2956, %v2955
    %v3714 = vpack.c.b16 %v2958, %v2957
    %v3715 = vpack.c.b16 %v2960, %v2959
    %v3716 = vpack.c.b16 %v2962, %v2961
    %v3717 = vpack.c.b16 %v2964, %v2963
    %v3718 = vpack.c.b16 %v2966, %v2965
    %v3719 = vpack.c.b16 %v2968, %v2967
    %v3720 = vpack.c.b16 %v2970, %v2969
    %v3721 = vpack.c.b16 %v2972, %v2971
    %v3722 = vpack.c.b16 %v2974, %v2973
    %v3723 = vpack.c.b16 %v2976, %v2975
    %v3724 = vpack.c.b16 %v2978, %v2977
    %v3725 = vpack.c.b16 %v2980, %v2979
    %v3726 = vpack.c.b16 %v2982, %v2981
    %v3727 = vpack.c.b16 %v2984, %v2983
    %v3728 = vpack.c.b16 %v2986, %v2985
    %v3729 = vpack.c.b16 %v2988, %v2987
    %v3730 = vpack.c.b16 %v2990, %v2989
    %v3731 = vpack.c.b16 %v2992, %v2991
    %v3732 = vpack.c.b16 %v2994, %v2993
    %v3733 = vpack.c.b16 %v2996, %v2995
    %v3734 = vpack.c.b16 %v2998, %v2997
    %v3735 = vpack.c.b16 %v3000, %v2999
    %v3736 = vpack.c.b16 %v3002, %v3001
    %v3737 = vpack.c.b16 %v3004, %v3003
    %v3738 = vpack.c.b16 %v3006, %v3005
    %v3739 = vpack.c.b16 %v3008, %v3007
    %v3740 = vpack.c.b16 %v3010, %v3009
    %v3741 = vpack.c.b16 %v3012, %v3011
    %v3742 = vpack.c.b16 %v3014, %v3013
    %v3743 = vpack.c.b16 %v3016, %v3015
    %v3744 = vpack.c.b16 %v3018, %v3017
    %v3745 = vpack.c.b16 %v3020, %v3019
    %v3746 = vpack.c.b16 %v3022, %v3021
    %v3747 = vpack.c.b16 %v3024, %v3023
    %v3748 = vpack.c.b16 %v3026, %v3025
    %v3749 = vpack.c.b16 %v3028, %v3027
    %v3750 = vpack.c.b16 %v3030, %v3029
    %v3751 = vpack.c.b16 %v3032, %v3031
    %v3752 = vpack.c.b16 %v3034, %v3033
    %v3753 = vpack.c.b16 %v3036, %v3035
    %v3754 = vpack.c.b16 %v3038, %v3037
    %v3755 = vpack.c.b16 %v3040, %v3039
    %v3756 = vpack.c.b16 %v3042, %v3041
    %v3757 = vpack.c.b16 %v3044, %v3043
    %v3758 = vpack.c.b16 %v3046, %v3045
    %v3759 = vpack.c.b16 %v3048, %v3047
    %v3760 = vpack.c.b16 %v3050, %v3049
    %v3761 = vpack.c.b16 %v3052, %v3051
    %v3762 = vpack.c.b16 %v3054, %v3053
    %v3763 = vpack.c.b16 %v3056, %v3055
    %v3764 = vpack.c.b16 %v3058, %v3057
    %v3765 = vpack.c.b16 %v3060, %v3059
    %v3766 = vpack.c.b16 %v3062, %v3061
    %v3767 = vpack.c.b16 %v3064, %v3063
    %v3768 = vpack.c.b16 %v3066, %v3065
    %v3769 = vpack.c.b16 %v3068, %v3067
    %v3770 = vpack.c.b16 %v3070, %v3069
    %v3771 = vpack.c.b16 %v3072, %v3071
    %v3772 = vpack.c.b16 %v3074, %v3073
    %v3773 = vpack.c.b16 %v3076, %v3075
    %v3774 = vpack.c.b16 %v3078, %v3077
    %v3775 = vpack.c.b16 %v3080, %v3079
    %v3776 = vpack.c.b16 %v3082, %v3081
    %v3777 = vpack.c.b16 %v3084, %v3083
    %v3778 = vpack.c.b16 %v3086, %v3085
    %v3779 = vpack.c.b16 %v3088, %v3087
    %v3780 = vpack.c.b16 %v3090, %v3089
    %v3781 = vpack.c.b16 %v3092, %v3091
    %v3782 = vpack.c.b16 %v3094, %v3093
    %v3783 = vpack.c.b16 %v3096, %v3095
    %v3784 = vpack.c.b16 %v3098, %v3097
    %v3785 = vpack.c.b16 %v3100, %v3099
    %v3786 = vpack.c.b16 %v3102, %v3101
    %v3787 = vpack.c.b16 %v3104, %v3103
    %v3788 = vpack.c.b16 %v3106, %v3105
    %v3789 = vpack.c.b16 %v3108, %v3107
    %v3790 = vpack.c.b16 %v3110, %v3109
    %v3791 = vpack.c.b16 %v3112, %v3111
    %v3792 = vpack.c.b16 %v3114, %v3113
    %v3793 = vpack.c.b16 %v3116, %v3115
    %v3794 = vpack.c.b16 %v3118, %v3117
    %v3795 = vpack.c.b16 %v3120, %v3119
    %v3796 = vpack.c.b16 %v3122, %v3121
    %v3797 = vpack.c.b16 %v3124, %v3123
    %v3798 = vpack.c.b16 %v3126, %v3125
    %v3799 = vpack.c.b16 %v3128, %v3127
    %v3800 = vpack.c.b16 %v3130, %v3129
    %v3801 = vpack.c.b16 %v3132, %v3131
    %v3802 = vpack.c.b16 %v3134, %v3133
    %v3803 = vpack.c.b16 %v3136, %v3135
    %v3804 = vpack.c.b16 %v3138, %v3137
    %v3805 = vpack.c.b16 %v3140, %v3139
    %v3806 = vpack.c.b16 %v3142, %v3141
    %v3807 = vpack.c.b16 %v3144, %v3143
    %v3808 = vpack.c.b16 %v3146, %v3145
    %v3809 = vpack.c.b16 %v3148, %v3147
    %v3810 = vpack.c.b16 %v3150, %v3149
    %v3811 = vpack.c.b16 %v3152, %v3151
    %v3812 = vpack.c.b16 %v3154, %v3153
    %v3813 = vpack.c.b16 %v3156, %v3155
    %v3814 = vpack.c.b16 %v3158, %v3157
    %v3815 = vpack.c.b16 %v3160, %v3159
    %v3816 = vpack.c.b16 %v3162, %v3161
    %v3817 = vpack.c.b16 %v3164, %v3163
    %v3818 = vpack.c.b16 %v3166, %v3165
    %v3819 = vpack.c.b16 %v3168, %v3167
    %v3820 = vpack.c.b16 %v3170, %v3169
    %v3821 = vpack.c.b16 %v3172, %v3171
    %v3822 = vpack.c.b16 %v3174, %v3173
    %v3823 = vpack.c.b16 %v3176, %v3175
    %v3824 = vpack.c.b16 %v3178, %v3177
    %v3825 = vpack.c.b16 %v3180, %v3179
    %v3826 = vpack.c.b16 %v3182, %v3181
    %v3827 = vpack.c.b16 %v3184, %v3183
    %v3828 = vpack.c.b16 %v3186, %v3185
    %v3829 = vpack.c.b16 %v3188, %v3187
    %v3830 = vpack.c.b16 %v3190, %v3189
    %v3831 = vpack.c.b16 %v3192, %v3191
    %v3832 = vpack.c.b16 %v3194, %v3193
    %v3833 = vpack.c.b16 %v3196, %v3195
    %v3834 = vpack.c.b16 %v3198, %v3197
    %v3835 = vpack.c.b16 %v3200, %v3199
    %v3836 = vpack.c.b16 %v3202, %v3201
    %v3837 = vpack.c.b16 %v3204, %v3203
    %v3838 = vpack.c.b16 %v3206, %v3205
    %v3839 = vpack.c.b16 %v3208, %v3207
    %v3840 = vpack.c.b16 %v3210, %v3209
    %v3841 = vpack.c.b16 %v3212, %v3211
    %v3842 = vpack.c.b16 %v3214, %v3213
    %v3843 = vpack.c.b16 %v3216, %v3215
    %v3844 = vpack.c.b16 %v3218, %v3217
    %v3845 = vpack.c.b16 %v3220, %v3219
    %v3846 = vpack.c.b16 %v3222, %v3221
    %v3847 = vpack.c.b16 %v3224, %v3223
    %v3848 = vpack.c.b16 %v3226, %v3225
    %v3849 = vpack.c.b16 %v3228, %v3227
    %v3850 = vpack.c.b16 %v3230, %v3229
    %v3851 = vpack.c.b16 %v3232, %v3231
    %v3852 = vpack.c.b16 %v3234, %v3233
    %v3853 = vpack.c.b16 %v3236, %v3235
    %v3854 = vpack.c.b16 %v3238, %v3237
    %v3855 = vpack.c.b16 %v3240, %v3239
    %v3856 = vpack.c.b16 %v3242, %v3241
    %v3857 = vpack.c.b16 %v3244, %v3243
    %v3858 = vpack.c.b16 %v3246, %v3245
    %v3859 = vpack.c.b16 %v3248, %v3247
    %v3860 = vpack.c.b16 %v3250, %v3249
    %v3861 = vpack.c.b16 %v3252, %v3251
    %v3862 = vpack.c.b16 %v3254, %v3253
    %v3863 = vpack.c.b16 %v3256, %v3255
    %v3864 = vpack.c.b16 %v3258, %v3257
    %v3865 = vpack.c.b16 %v3260, %v3259
    %v3866 = vpack.c.b16 %v3262, %v3261
    %v3867 = vpack.c.b16 %v3264, %v3263
    %v3868 = vpack.c.b16 %v3266, %v3265
    %v3869 = vpack.c.b16 %v3268, %v3267
    %v3870 = vpack.c.b16 %v3270, %v3269
    %v3871 = vpack.c.b16 %v3272, %v3271
    %v3872 = vpack.c.b16 %v3274, %v3273
    %v3873 = vpack.c.b16 %v3276, %v3275
    %v3874 = vpack.c.b16 %v3278, %v3277
    %v3875 = vpack.c.b16 %v3280, %v3279
    %v3876 = vpack.c.b16 %v3282, %v3281
    %v3877 = vpack.c.b16 %v3284, %v3283
    %v3878 = vpack.c.b16 %v3286, %v3285
    %v3879 = vpack.c.b16 %v3288, %v3287
    %v3880 = vpack.c.b16 %v3290, %v3289
    %v3881 = vpack.c.b16 %v3292, %v3291
    %v3882 = vpack.c.b16 %v3294, %v3293
    %v3883 = vpack.c.b16 %v3296, %v3295
    %v3884 = vpack.c.b16 %v3298, %v3297
    %v3885 = vpack.c.b16 %v3300, %v3299
    %v3886 = vpack.c.b16 %v3302, %v3301
    %v3887 = vpack.c.b16 %v3304, %v3303
    %v3888 = vpack.c.b16 %v3306, %v3305
    %v3889 = vpack.c.b16 %v3308, %v3307
    %v3890 = vpack.c.b16 %v3310, %v3309
    %v3891 = vpack.c.b16 %v3312, %v3311
    %v3892 = vpack.c.b16 %v3314, %v3313
    %v3893 = vpack.c.b16 %v3316, %v3315
    %v3894 = vpack.c.b16 %v3318, %v3317
    %v3895 = vpack.c.b16 %v3320, %v3319
    %v3896 = vpack.c.b16 %v3322, %v3321
    %v3897 = vpack.c.b16 %v3324, %v3323
    %v3898 = vpack.c.b16 %v3326, %v3325
    %v3899 = vpack.c.b16 %v3328, %v3327
    %v3900 = vpack.c.b16 %v3330, %v3329
    %v3901 = vpack.c.b16 %v3332, %v3331
    %v3902 = vpack.c.b16 %v3334, %v3333
    %v3903 = vpack.c.b16 %v3336, %v3335
    %v3904 = vpack.c.b16 %v3338, %v3337
    %v3905 = vpack.c.b16 %v3340, %v3339
    %v3906 = vpack.c.b16 %v3342, %v3341
    %v3907 = vpack.c.b16 %v3344, %v3343
    %v3908 = vpack.c.b16 %v3346, %v3345
    %v3909 = vpack.c.b16 %v3348, %v3347
    %v3910 = vpack.c.b16 %v3350, %v3349
    %v3911 = vpack.c.b16 %v3352, %v3351
    %v3912 = vpack.c.b16 %v3354, %v3353
    %v3913 = vpack.c.b16 %v3356, %v3355
    %v3914 = vpack.c.b16 %v3358, %v3357
    %v3915 = vpack.c.b16 %v3360, %v3359
    %v3916 = vpack.c.b16 %v3362, %v3361
    %v3917 = vpack.c.b16 %v3364, %v3363
    %v3918 = vpack.c.b16 %v3366, %v3365
    %v3919 = vpack.c.b16 %v3368, %v3367
    %v3920 = vpack.c.b16 %v3370, %v3369
    %v3921 = vpack.c.b16 %v3372, %v3371
    %v3922 = vpack.c.b16 %v3374, %v3373
    %v3923 = vpack.c.b16 %v3376, %v3375
    %v3924 = vpack.c.b16 %v3378, %v3377
    %v3925 = vpack.c.b16 %v3380, %v3379
    %v3926 = vpack.c.b16 %v3382, %v3381
    %v3927 = vpack.c.b16 %v3384, %v3383
    %v3928 = vpack.c.b16 %v3386, %v3385
    %v3929 = vpack.c.b16 %v3388, %v3387
    %v3930 = vpack.c.b16 %v3390, %v3389
    %v3931 = vpack.c.b16 %v3392, %v3391
    %v3932 = vpack.c.b16 %v3394, %v3393
    %v3933 = vpack.c.b16 %v3396, %v3395
    %v3934 = vpack.c.b16 %v3398, %v3397
    %v3935 = vpack.c.b16 %v3400, %v3399
    %v3936 = vpack.c.b16 %v3402, %v3401
    %v3937 = vpack.c.b16 %v3404, %v3403
    %v3938 = vpack.c.b16 %v3406, %v3405
    %v3939 = vpack.c.b16 %v3408, %v3407
    %v3940 = vpack.c.b16 %v3410, %v3409
    %v3941 = vpack.c.b16 %v3412, %v3411
    %v3942 = vpack.c.b16 %v3414, %v3413
    %v3943 = vpack.c.b16 %v3416, %v3415
    %v3944 = vpack.c.b16 %v3418, %v3417
    %v3945 = vpack.c.b16 %v3420, %v3419
    %v3946 = vpack.c.b16 %v3422, %v3421
    %v3947 = vpack.c.b16 %v3424, %v3423
    %v3948 = vpack.c.b16 %v3426, %v3425
    %v3949 = vpack.c.b16 %v3428, %v3427
    %v3950 = vpack.c.b16 %v3430, %v3429
    %v3951 = vpack.c.b16 %v3432, %v3431
    %v3952 = vpack.c.b16 %v3434, %v3433
    %v3953 = vpack.c.b16 %v3436, %v3435
    %v3954 = vpack.c.b16 %v3438, %v3437
    %v3955 = vpack.c.b16 %v3440, %v3439
    %v3956 = vpack.c.b16 %v3442, %v3441
    %v3957 = vpack.c.b16 %v3444, %v3443
    %v3958 = vpack.c.b16 %v3446, %v3445
    %v3959 = vpack.c.b16 %v3448, %v3447
    %v3960 = vpack.c.b16 %v3450, %v3449
    %v3961 = vpack.c.b16 %v3452, %v3451
    %v3962 = vpack.c.b16 %v3454, %v3453
    %v3963 = vpack.c.b16 %v3456, %v3455
    %v3964 = vpack.c.b16 %v3458, %v3457
    %v3965 = vpack.c.b16 %v3460, %v3459
    %v3966 = vpack.c.b16 %v3462, %v3461
    %v3967 = vpack.c.b16 %v3464, %v3463
    %v3968 = vpack.c.b16 %v3466, %v3465
    %v3969 = vpack.c.b16 %v3468, %v3467
    %v3970 = vpack.c.b16 %v3470, %v3469
    %v3971 = vpack.c.b16 %v3472, %v3471
    %v3972 = vpack.c.b16 %v3474, %v3473
    %v3973 = vpack.c.b16 %v3476, %v3475
    %v3974 = vpack.c.b16 %v3478, %v3477
    %v3975 = vpack.c.b16 %v3480, %v3479
    %v3976 = vpack.c.b16 %v3482, %v3481
    %v3977 = vpack.c.b16 %v3484, %v3483
    %v3978 = vpack.c.b16 %v3486, %v3485
    %v3979 = vpack.c.b16 %v3488, %v3487
    %v3980 = vpack.c.b16 %v3490, %v3489
    %v3981 = vpack.c.b16 %v3492, %v3491
    %v3982 = vpack.c.b16 %v3494, %v3493
    %v3983 = vpack.c.b16 %v3496, %v3495
    %v3984 = vpack.c.b16 %v3498, %v3497
    %v3985 = vpack.c.b16 %v3500, %v3499
    %v3986 = vpack.c.b16 %v3502, %v3501
    %v3987 = vpack.c.b16 %v3504, %v3503
    %v3988 = vpack.c.b16 %v3506, %v3505
    %v3989 = vpack.c.b16 %v3508, %v3507
    %v3990 = vpack.c.b16 %v3510, %v3509
    %v3991 = vpack.c.b16 %v3512, %v3511
    %v3992 = vpack.c.b16 %v3514, %v3513
    %v3993 = vpack.c.b16 %v3516, %v3515
    %v3994 = vpack.c.b16 %v3518, %v3517
    %v3995 = vpack.c.b16 %v3520, %v3519
    %v3996 = vpack.c.b16 %v3522, %v3521
    %v3997 = vpack.c.b16 %v3524, %v3523
    %v3998 = vpack.c.b16 %v3526, %v3525
    %v3999 = vpack.c.b16 %v3528, %v3527
    %v4000 = vpack.c.b16 %v3530, %v3529
    %v4001 = vpack.c.b16 %v3532, %v3531
    %v4002 = vpack.c.b16 %v3534, %v3533
    %v4003 = vpack.c.b16 %v3536, %v3535
    %v4004 = vpack.c.b16 %v3538, %v3537
    %v4005 = vpack.c.b16 %v3540, %v3539
    %v4006 = vpack.c.b16 %v3542, %v3541
    %v4007 = vpack.c.b16 %v3544, %v3543
    %v4008 = vpack.c.b16 %v3546, %v3545
    %v4009 = vpack.c.b16 %v3548, %v3547
    %v4010 = vpack.c.b16 %v3550, %v3549
    %v4011 = vpack.c.b16 %v3552, %v3551
    %v4012 = vpack.c.b16 %v3554, %v3553
    %v4013 = vpack.c.b16 %v3556, %v3555
    %v4014 = vpack.c.b16 %v3558, %v3557
    %v4015 = vpack.c.b16 %v3560, %v3559
    %v4016 = vpack.c.b16 %v3562, %v3561
    %v4017 = vpack.c.b16 %v3564, %v3563
    %v4018 = vpack.c.b16 %v3565, %v3565
    %vm4471 = vcmask 556032
    %v4473 = vsel %vm4471, %v843, 0
    %vm4475 = vcmask 1041408
    %v4477 = vsel %vm4475, %v4018, 0
    %4479 = vmatprep.subr.bf16.mxu0 0
    %4480 = vmatpush1.bf16.msra.mxu0 %v3573
    %4481 = vmatprep.subr.bf16.mxu0 0
    %4482 = vmatpush1.bf16.msra.mxu0 %v3572
    %4483 = vmatprep.subr.bf16.mxu0 0
    %4484 = vmatpush1.bf16.msra.mxu0 %v3571
    %4485 = vmatprep.subr.bf16.mxu0 0
    %4486 = vmatpush1.bf16.msra.mxu0 %v3570
    %4487 = vmatprep.subr.bf16.mxu0 0
    %4488 = vmatpush1.bf16.msra.mxu0 %v3569
    %4489 = vmatprep.subr.bf16.mxu0 0
    %4490 = vmatpush1.bf16.msra.mxu0 %v3568
    %4491 = vmatprep.subr.bf16.mxu0 0
    %4492 = vmatpush1.bf16.msra.mxu0 %v3567
    %4493 = vmatprep.subr.bf16.mxu0 0
    %4494 = vmatpush1.bf16.msra.mxu0 %v3566
    %4495 = vmatprep.subr.bf16.mxu0 0
    %4496 = vmatpush2.bf16.msra.mxu0 %v3581
    %4497 = vmatprep.subr.bf16.mxu0 0
    %4498 = vmatpush2.bf16.msra.mxu0 %v3580
    %4499 = vmatprep.subr.bf16.mxu0 0
    %4500 = vmatpush2.bf16.msra.mxu0 %v3579
    %4501 = vmatprep.subr.bf16.mxu0 0
    %4502 = vmatpush2.bf16.msra.mxu0 %v3578
    %4503 = vmatprep.subr.bf16.mxu0 0
    %4504 = vmatpush2.bf16.msra.mxu0 %v3577
    %4505 = vmatprep.subr.bf16.mxu0 0
    %4506 = vmatpush2.bf16.msra.mxu0 %v3576
    %4507 = vmatprep.subr.bf16.mxu0 0
    %4508 = vmatpush2.bf16.msra.mxu0 %v3575
    %4509 = vmatprep.subr.bf16.mxu0 0
    %4510 = vmatpush2.bf16.msra.mxu0 %v3574
    %4511 = vmatprep.mubr.bf16.mxu0 %v788
    %4512 = vmatmul.mubr.bf16.gmra.mxu0 %v787
    %v4513 = vpop.f32.mrf.mxu0
    %v4514 = vadd.f32 %v1754, %v4513
    %v4515 = vpop.f32.mrf.mxu0
    %v4516 = vpop.f32.mrf.mxu0
    %v4517 = vpop.f32.mrf.mxu0
    %4518 = vdwg.mxu0
    %4519 = vmatprep.subr.bf16.mxu0 0
    %4520 = vmatpush1.bf16.msra.mxu0 %v3589
    %4521 = vmatprep.subr.bf16.mxu0 0
    %4522 = vmatpush1.bf16.msra.mxu0 %v3588
    %4523 = vmatprep.subr.bf16.mxu0 0
    %4524 = vmatpush1.bf16.msra.mxu0 %v3587
    %4525 = vmatprep.subr.bf16.mxu0 0
    %4526 = vmatpush1.bf16.msra.mxu0 %v3586
    %4527 = vmatprep.subr.bf16.mxu0 0
    %4528 = vmatpush1.bf16.msra.mxu0 %v3585
    %4529 = vmatprep.subr.bf16.mxu0 0
    %4530 = vmatpush1.bf16.msra.mxu0 %v3584
    %4531 = vmatprep.subr.bf16.mxu0 0
    %4532 = vmatpush1.bf16.msra.mxu0 %v3583
    %4533 = vmatprep.subr.bf16.mxu0 0
    %4534 = vmatpush1.bf16.msra.mxu0 %v3582
    %4535 = vmatprep.subr.bf16.mxu0 0
    %4536 = vmatpush2.bf16.msra.mxu0 %v3597
    %4537 = vmatprep.subr.bf16.mxu0 0
    %4538 = vmatpush2.bf16.msra.mxu0 %v3596
    %4539 = vmatprep.subr.bf16.mxu0 0
    %4540 = vmatpush2.bf16.msra.mxu0 %v3595
    %4541 = vmatprep.subr.bf16.mxu0 0
    %4542 = vmatpush2.bf16.msra.mxu0 %v3594
    %4543 = vmatprep.subr.bf16.mxu0 0
    %4544 = vmatpush2.bf16.msra.mxu0 %v3593
    %4545 = vmatprep.subr.bf16.mxu0 0
    %4546 = vmatpush2.bf16.msra.mxu0 %v3592
    %4547 = vmatprep.subr.bf16.mxu0 0
    %4548 = vmatpush2.bf16.msra.mxu0 %v3591
    %4549 = vmatprep.subr.bf16.mxu0 0
    %4550 = vmatpush2.bf16.msra.mxu0 %v3590
    %4551 = vmatprep.mubr.bf16.mxu0 %v790
    %4552 = vmatmul.mubr.bf16.gmra.mxu0 %v789
    %v4553 = vpop.f32.mrf.mxu0
    %v4554 = vadd.f32 %v4514, %v4553
    %v4555 = vpop.f32.mrf.mxu0
    %v4556 = vpop.f32.mrf.mxu0
    %v4557 = vpop.f32.mrf.mxu0
    %4558 = vdwg.mxu0
    %4559 = vmatprep.subr.bf16.mxu0 0
    %4560 = vmatpush1.bf16.msra.mxu0 %v3605
    %4561 = vmatprep.subr.bf16.mxu0 0
    %4562 = vmatpush1.bf16.msra.mxu0 %v3604
    %4563 = vmatprep.subr.bf16.mxu0 0
    %4564 = vmatpush1.bf16.msra.mxu0 %v3603
    %4565 = vmatprep.subr.bf16.mxu0 0
    %4566 = vmatpush1.bf16.msra.mxu0 %v3602
    %4567 = vmatprep.subr.bf16.mxu0 0
    %4568 = vmatpush1.bf16.msra.mxu0 %v3601
    %4569 = vmatprep.subr.bf16.mxu0 0
    %4570 = vmatpush1.bf16.msra.mxu0 %v3600
    %4571 = vmatprep.subr.bf16.mxu0 0
    %4572 = vmatpush1.bf16.msra.mxu0 %v3599
    %4573 = vmatprep.subr.bf16.mxu0 0
    %4574 = vmatpush1.bf16.msra.mxu0 %v3598
    %4575 = vmatprep.subr.bf16.mxu0 0
    %4576 = vmatpush2.bf16.msra.mxu0 %v3613
    %4577 = vmatprep.subr.bf16.mxu0 0
    %4578 = vmatpush2.bf16.msra.mxu0 %v3612
    %4579 = vmatprep.subr.bf16.mxu0 0
    %4580 = vmatpush2.bf16.msra.mxu0 %v3611
    %4581 = vmatprep.subr.bf16.mxu0 0
    %4582 = vmatpush2.bf16.msra.mxu0 %v3610
    %4583 = vmatprep.subr.bf16.mxu0 0
    %4584 = vmatpush2.bf16.msra.mxu0 %v3609
    %4585 = vmatprep.subr.bf16.mxu0 0
    %4586 = vmatpush2.bf16.msra.mxu0 %v3608
    %4587 = vmatprep.subr.bf16.mxu0 0
    %4588 = vmatpush2.bf16.msra.mxu0 %v3607
    %4589 = vmatprep.subr.bf16.mxu0 0
    %4590 = vmatpush2.bf16.msra.mxu0 %v3606
    %4591 = vmatprep.mubr.bf16.mxu0 %v792
    %4592 = vmatmul.mubr.bf16.gmra.mxu0 %v791
    %v4593 = vpop.f32.mrf.mxu0
    %v4594 = vadd.f32 %v4554, %v4593
    %v4595 = vpop.f32.mrf.mxu0
    %v4596 = vpop.f32.mrf.mxu0
    %v4597 = vpop.f32.mrf.mxu0
    %4598 = vdwg.mxu0
    %4599 = vmatprep.subr.bf16.mxu0 0
    %4600 = vmatpush1.bf16.msra.mxu0 %v3621
    %4601 = vmatprep.subr.bf16.mxu0 0
    %4602 = vmatpush1.bf16.msra.mxu0 %v3620
    %4603 = vmatprep.subr.bf16.mxu0 0
    %4604 = vmatpush1.bf16.msra.mxu0 %v3619
    %4605 = vmatprep.subr.bf16.mxu0 0
    %4606 = vmatpush1.bf16.msra.mxu0 %v3618
    %4607 = vmatprep.subr.bf16.mxu0 0
    %4608 = vmatpush1.bf16.msra.mxu0 %v3617
    %4609 = vmatprep.subr.bf16.mxu0 0
    %4610 = vmatpush1.bf16.msra.mxu0 %v3616
    %4611 = vmatprep.subr.bf16.mxu0 0
    %4612 = vmatpush1.bf16.msra.mxu0 %v3615
    %4613 = vmatprep.subr.bf16.mxu0 0
    %4614 = vmatpush1.bf16.msra.mxu0 %v3614
    %4615 = vmatprep.subr.bf16.mxu0 0
    %4616 = vmatpush2.bf16.msra.mxu0 %v3629
    %4617 = vmatprep.subr.bf16.mxu0 0
    %4618 = vmatpush2.bf16.msra.mxu0 %v3628
    %4619 = vmatprep.subr.bf16.mxu0 0
    %4620 = vmatpush2.bf16.msra.mxu0 %v3627
    %4621 = vmatprep.subr.bf16.mxu0 0
    %4622 = vmatpush2.bf16.msra.mxu0 %v3626
    %4623 = vmatprep.subr.bf16.mxu0 0
    %4624 = vmatpush2.bf16.msra.mxu0 %v3625
    %4625 = vmatprep.subr.bf16.mxu0 0
    %4626 = vmatpush2.bf16.msra.mxu0 %v3624
    %4627 = vmatprep.subr.bf16.mxu0 0
    %4628 = vmatpush2.bf16.msra.mxu0 %v3623
    %4629 = vmatprep.subr.bf16.mxu0 0
    %4630 = vmatpush2.bf16.msra.mxu0 %v3622
    %4631 = vmatprep.mubr.bf16.mxu0 %v794
    %4632 = vmatmul.mubr.bf16.gmra.mxu0 %v793
    %v4633 = vpop.f32.mrf.mxu0
    %v4634 = vadd.f32 %v4594, %v4633
    %v4635 = vpop.f32.mrf.mxu0
    %v4636 = vpop.f32.mrf.mxu0
    %v4637 = vpop.f32.mrf.mxu0
    %4638 = vdwg.mxu0
    %4639 = vmatprep.subr.bf16.mxu0 0
    %4640 = vmatpush1.bf16.msra.mxu0 %v3637
    %4641 = vmatprep.subr.bf16.mxu0 0
    %4642 = vmatpush1.bf16.msra.mxu0 %v3636
    %4643 = vmatprep.subr.bf16.mxu0 0
    %4644 = vmatpush1.bf16.msra.mxu0 %v3635
    %4645 = vmatprep.subr.bf16.mxu0 0
    %4646 = vmatpush1.bf16.msra.mxu0 %v3634
    %4647 = vmatprep.subr.bf16.mxu0 0
    %4648 = vmatpush1.bf16.msra.mxu0 %v3633
    %4649 = vmatprep.subr.bf16.mxu0 0
    %4650 = vmatpush1.bf16.msra.mxu0 %v3632
    %4651 = vmatprep.subr.bf16.mxu0 0
    %4652 = vmatpush1.bf16.msra.mxu0 %v3631
    %4653 = vmatprep.subr.bf16.mxu0 0
    %4654 = vmatpush1.bf16.msra.mxu0 %v3630
    %4655 = vmatprep.subr.bf16.mxu0 0
    %4656 = vmatpush2.bf16.msra.mxu0 %v3645
    %4657 = vmatprep.subr.bf16.mxu0 0
    %4658 = vmatpush2.bf16.msra.mxu0 %v3644
    %4659 = vmatprep.subr.bf16.mxu0 0
    %4660 = vmatpush2.bf16.msra.mxu0 %v3643
    %4661 = vmatprep.subr.bf16.mxu0 0
    %4662 = vmatpush2.bf16.msra.mxu0 %v3642
    %4663 = vmatprep.subr.bf16.mxu0 0
    %4664 = vmatpush2.bf16.msra.mxu0 %v3641
    %4665 = vmatprep.subr.bf16.mxu0 0
    %4666 = vmatpush2.bf16.msra.mxu0 %v3640
    %4667 = vmatprep.subr.bf16.mxu0 0
    %4668 = vmatpush2.bf16.msra.mxu0 %v3639
    %4669 = vmatprep.subr.bf16.mxu0 0
    %4670 = vmatpush2.bf16.msra.mxu0 %v3638
    %4671 = vmatprep.mubr.bf16.mxu0 %v796
    %4672 = vmatmul.mubr.bf16.gmra.mxu0 %v795
    %v4673 = vpop.f32.mrf.mxu0
    %v4674 = vadd.f32 %v4634, %v4673
    %v4675 = vpop.f32.mrf.mxu0
    %v4676 = vpop.f32.mrf.mxu0
    %v4677 = vpop.f32.mrf.mxu0
    %4678 = vdwg.mxu0
    %4679 = vmatprep.subr.bf16.mxu0 0
    %4680 = vmatpush1.bf16.msra.mxu0 %v3653
    %4681 = vmatprep.subr.bf16.mxu0 0
    %4682 = vmatpush1.bf16.msra.mxu0 %v3652
    %4683 = vmatprep.subr.bf16.mxu0 0
    %4684 = vmatpush1.bf16.msra.mxu0 %v3651
    %4685 = vmatprep.subr.bf16.mxu0 0
    %4686 = vmatpush1.bf16.msra.mxu0 %v3650
    %4687 = vmatprep.subr.bf16.mxu0 0
    %4688 = vmatpush1.bf16.msra.mxu0 %v3649
    %4689 = vmatprep.subr.bf16.mxu0 0
    %4690 = vmatpush1.bf16.msra.mxu0 %v3648
    %4691 = vmatprep.subr.bf16.mxu0 0
    %4692 = vmatpush1.bf16.msra.mxu0 %v3647
    %4693 = vmatprep.subr.bf16.mxu0 0
    %4694 = vmatpush1.bf16.msra.mxu0 %v3646
    %4695 = vmatprep.subr.bf16.mxu0 0
    %4696 = vmatpush2.bf16.msra.mxu0 %v3661
    %4697 = vmatprep.subr.bf16.mxu0 0
    %4698 = vmatpush2.bf16.msra.mxu0 %v3660
    %4699 = vmatprep.subr.bf16.mxu0 0
    %4700 = vmatpush2.bf16.msra.mxu0 %v3659
    %4701 = vmatprep.subr.bf16.mxu0 0
    %4702 = vmatpush2.bf16.msra.mxu0 %v3658
    %4703 = vmatprep.subr.bf16.mxu0 0
    %4704 = vmatpush2.bf16.msra.mxu0 %v3657
    %4705 = vmatprep.subr.bf16.mxu0 0
    %4706 = vmatpush2.bf16.msra.mxu0 %v3656
    %4707 = vmatprep.subr.bf16.mxu0 0
    %4708 = vmatpush2.bf16.msra.mxu0 %v3655
    %4709 = vmatprep.subr.bf16.mxu0 0
    %4710 = vmatpush2.bf16.msra.mxu0 %v3654
    %4711 = vmatprep.mubr.bf16.mxu0 %v798
    %4712 = vmatmul.mubr.bf16.gmra.mxu0 %v797
    %v4713 = vpop.f32.mrf.mxu0
    %v4714 = vadd.f32 %v4674, %v4713
    %v4715 = vpop.f32.mrf.mxu0
    %v4716 = vpop.f32.mrf.mxu0
    %v4717 = vpop.f32.mrf.mxu0
    %4718 = vdwg.mxu0
    %4719 = vmatprep.subr.bf16.mxu0 0
    %4720 = vmatpush1.bf16.msra.mxu0 %v3669
    %4721 = vmatprep.subr.bf16.mxu0 0
    %4722 = vmatpush1.bf16.msra.mxu0 %v3668
    %4723 = vmatprep.subr.bf16.mxu0 0
    %4724 = vmatpush1.bf16.msra.mxu0 %v3667
    %4725 = vmatprep.subr.bf16.mxu0 0
    %4726 = vmatpush1.bf16.msra.mxu0 %v3666
    %4727 = vmatprep.subr.bf16.mxu0 0
    %4728 = vmatpush1.bf16.msra.mxu0 %v3665
    %4729 = vmatprep.subr.bf16.mxu0 0
    %4730 = vmatpush1.bf16.msra.mxu0 %v3664
    %4731 = vmatprep.subr.bf16.mxu0 0
    %4732 = vmatpush1.bf16.msra.mxu0 %v3663
    %4733 = vmatprep.subr.bf16.mxu0 0
    %4734 = vmatpush1.bf16.msra.mxu0 %v3662
    %4735 = vmatprep.subr.bf16.mxu0 0
    %4736 = vmatpush2.bf16.msra.mxu0 %v3677
    %4737 = vmatprep.subr.bf16.mxu0 0
    %4738 = vmatpush2.bf16.msra.mxu0 %v3676
    %4739 = vmatprep.subr.bf16.mxu0 0
    %4740 = vmatpush2.bf16.msra.mxu0 %v3675
    %4741 = vmatprep.subr.bf16.mxu0 0
    %4742 = vmatpush2.bf16.msra.mxu0 %v3674
    %4743 = vmatprep.subr.bf16.mxu0 0
    %4744 = vmatpush2.bf16.msra.mxu0 %v3673
    %4745 = vmatprep.subr.bf16.mxu0 0
    %4746 = vmatpush2.bf16.msra.mxu0 %v3672
    %4747 = vmatprep.subr.bf16.mxu0 0
    %4748 = vmatpush2.bf16.msra.mxu0 %v3671
    %4749 = vmatprep.subr.bf16.mxu0 0
    %4750 = vmatpush2.bf16.msra.mxu0 %v3670
    %4751 = vmatprep.mubr.bf16.mxu0 %v800
    %4752 = vmatmul.mubr.bf16.gmra.mxu0 %v799
    %v4753 = vpop.f32.mrf.mxu0
    %v4754 = vadd.f32 %v4714, %v4753
    %v4755 = vpop.f32.mrf.mxu0
    %v4756 = vpop.f32.mrf.mxu0
    %v4757 = vpop.f32.mrf.mxu0
    %4758 = vdwg.mxu0
    %4759 = vmatprep.subr.bf16.mxu0 0
    %4760 = vmatpush1.bf16.msra.mxu0 %v3685
    %4761 = vmatprep.subr.bf16.mxu0 0
    %4762 = vmatpush1.bf16.msra.mxu0 %v3684
    %4763 = vmatprep.subr.bf16.mxu0 0
    %4764 = vmatpush1.bf16.msra.mxu0 %v3683
    %4765 = vmatprep.subr.bf16.mxu0 0
    %4766 = vmatpush1.bf16.msra.mxu0 %v3682
    %4767 = vmatprep.subr.bf16.mxu0 0
    %4768 = vmatpush1.bf16.msra.mxu0 %v3681
    %4769 = vmatprep.subr.bf16.mxu0 0
    %4770 = vmatpush1.bf16.msra.mxu0 %v3680
    %4771 = vmatprep.subr.bf16.mxu0 0
    %4772 = vmatpush1.bf16.msra.mxu0 %v3679
    %4773 = vmatprep.subr.bf16.mxu0 0
    %4774 = vmatpush1.bf16.msra.mxu0 %v3678
    %4775 = vmatprep.subr.bf16.mxu0 0
    %4776 = vmatpush2.bf16.msra.mxu0 %v3693
    %4777 = vmatprep.subr.bf16.mxu0 0
    %4778 = vmatpush2.bf16.msra.mxu0 %v3692
    %4779 = vmatprep.subr.bf16.mxu0 0
    %4780 = vmatpush2.bf16.msra.mxu0 %v3691
    %4781 = vmatprep.subr.bf16.mxu0 0
    %4782 = vmatpush2.bf16.msra.mxu0 %v3690
    %4783 = vmatprep.subr.bf16.mxu0 0
    %4784 = vmatpush2.bf16.msra.mxu0 %v3689
    %4785 = vmatprep.subr.bf16.mxu0 0
    %4786 = vmatpush2.bf16.msra.mxu0 %v3688
    %4787 = vmatprep.subr.bf16.mxu0 0
    %4788 = vmatpush2.bf16.msra.mxu0 %v3687
    %4789 = vmatprep.subr.bf16.mxu0 0
    %4790 = vmatpush2.bf16.msra.mxu0 %v3686
    %4791 = vmatprep.mubr.bf16.mxu0 %v802
    %4792 = vmatmul.mubr.bf16.gmra.mxu0 %v801
    %v4793 = vpop.f32.mrf.mxu0
    %v4794 = vadd.f32 %v4754, %v4793
    %v4795 = vpop.f32.mrf.mxu0
    %v4796 = vpop.f32.mrf.mxu0
    %v4797 = vpop.f32.mrf.mxu0
    %4798 = vdwg.mxu0
    %4799 = vmatprep.subr.bf16.mxu0 0
    %4800 = vmatpush1.bf16.msra.mxu0 %v3701
    %4801 = vmatprep.subr.bf16.mxu0 0
    %4802 = vmatpush1.bf16.msra.mxu0 %v3700
    %4803 = vmatprep.subr.bf16.mxu0 0
    %4804 = vmatpush1.bf16.msra.mxu0 %v3699
    %4805 = vmatprep.subr.bf16.mxu0 0
    %4806 = vmatpush1.bf16.msra.mxu0 %v3698
    %4807 = vmatprep.subr.bf16.mxu0 0
    %4808 = vmatpush1.bf16.msra.mxu0 %v3697
    %4809 = vmatprep.subr.bf16.mxu0 0
    %4810 = vmatpush1.bf16.msra.mxu0 %v3696
    %4811 = vmatprep.subr.bf16.mxu0 0
    %4812 = vmatpush1.bf16.msra.mxu0 %v3695
    %4813 = vmatprep.subr.bf16.mxu0 0
    %4814 = vmatpush1.bf16.msra.mxu0 %v3694
    %4815 = vmatprep.subr.bf16.mxu0 0
    %4816 = vmatpush2.bf16.msra.mxu0 %v3709
    %4817 = vmatprep.subr.bf16.mxu0 0
    %4818 = vmatpush2.bf16.msra.mxu0 %v3708
    %4819 = vmatprep.subr.bf16.mxu0 0
    %4820 = vmatpush2.bf16.msra.mxu0 %v3707
    %4821 = vmatprep.subr.bf16.mxu0 0
    %4822 = vmatpush2.bf16.msra.mxu0 %v3706
    %4823 = vmatprep.subr.bf16.mxu0 0
    %4824 = vmatpush2.bf16.msra.mxu0 %v3705
    %4825 = vmatprep.subr.bf16.mxu0 0
    %4826 = vmatpush2.bf16.msra.mxu0 %v3704
    %4827 = vmatprep.subr.bf16.mxu0 0
    %4828 = vmatpush2.bf16.msra.mxu0 %v3703
    %4829 = vmatprep.subr.bf16.mxu0 0
    %4830 = vmatpush2.bf16.msra.mxu0 %v3702
    %4831 = vmatprep.mubr.bf16.mxu0 %v804
    %4832 = vmatmul.mubr.bf16.gmra.mxu0 %v803
    %v4833 = vpop.f32.mrf.mxu0
    %v4834 = vadd.f32 %v4794, %v4833
    %v4835 = vpop.f32.mrf.mxu0
    %v4836 = vpop.f32.mrf.mxu0
    %v4837 = vpop.f32.mrf.mxu0
    %4838 = vdwg.mxu0
    %4839 = vmatprep.subr.bf16.mxu0 0
    %4840 = vmatpush1.bf16.msra.mxu0 %v3717
    %4841 = vmatprep.subr.bf16.mxu0 0
    %4842 = vmatpush1.bf16.msra.mxu0 %v3716
    %4843 = vmatprep.subr.bf16.mxu0 0
    %4844 = vmatpush1.bf16.msra.mxu0 %v3715
    %4845 = vmatprep.subr.bf16.mxu0 0
    %4846 = vmatpush1.bf16.msra.mxu0 %v3714
    %4847 = vmatprep.subr.bf16.mxu0 0
    %4848 = vmatpush1.bf16.msra.mxu0 %v3713
    %4849 = vmatprep.subr.bf16.mxu0 0
    %4850 = vmatpush1.bf16.msra.mxu0 %v3712
    %4851 = vmatprep.subr.bf16.mxu0 0
    %4852 = vmatpush1.bf16.msra.mxu0 %v3711
    %4853 = vmatprep.subr.bf16.mxu0 0
    %4854 = vmatpush1.bf16.msra.mxu0 %v3710
    %4855 = vmatprep.subr.bf16.mxu0 0
    %4856 = vmatpush2.bf16.msra.mxu0 %v3725
    %4857 = vmatprep.subr.bf16.mxu0 0
    %4858 = vmatpush2.bf16.msra.mxu0 %v3724
    %4859 = vmatprep.subr.bf16.mxu0 0
    %4860 = vmatpush2.bf16.msra.mxu0 %v3723
    %4861 = vmatprep.subr.bf16.mxu0 0
    %4862 = vmatpush2.bf16.msra.mxu0 %v3722
    %4863 = vmatprep.subr.bf16.mxu0 0
    %4864 = vmatpush2.bf16.msra.mxu0 %v3721
    %4865 = vmatprep.subr.bf16.mxu0 0
    %4866 = vmatpush2.bf16.msra.mxu0 %v3720
    %4867 = vmatprep.subr.bf16.mxu0 0
    %4868 = vmatpush2.bf16.msra.mxu0 %v3719
    %4869 = vmatprep.subr.bf16.mxu0 0
    %4870 = vmatpush2.bf16.msra.mxu0 %v3718
    %4871 = vmatprep.mubr.bf16.mxu0 %v806
    %4872 = vmatmul.mubr.bf16.gmra.mxu0 %v805
    %v4873 = vpop.f32.mrf.mxu0
    %v4874 = vadd.f32 %v4834, %v4873
    %v4875 = vpop.f32.mrf.mxu0
    %v4876 = vpop.f32.mrf.mxu0
    %v4877 = vpop.f32.mrf.mxu0
    %4878 = vdwg.mxu0
    %4879 = vmatprep.subr.bf16.mxu0 0
    %4880 = vmatpush1.bf16.msra.mxu0 %v3733
    %4881 = vmatprep.subr.bf16.mxu0 0
    %4882 = vmatpush1.bf16.msra.mxu0 %v3732
    %4883 = vmatprep.subr.bf16.mxu0 0
    %4884 = vmatpush1.bf16.msra.mxu0 %v3731
    %4885 = vmatprep.subr.bf16.mxu0 0
    %4886 = vmatpush1.bf16.msra.mxu0 %v3730
    %4887 = vmatprep.subr.bf16.mxu0 0
    %4888 = vmatpush1.bf16.msra.mxu0 %v3729
    %4889 = vmatprep.subr.bf16.mxu0 0
    %4890 = vmatpush1.bf16.msra.mxu0 %v3728
    %4891 = vmatprep.subr.bf16.mxu0 0
    %4892 = vmatpush1.bf16.msra.mxu0 %v3727
    %4893 = vmatprep.subr.bf16.mxu0 0
    %4894 = vmatpush1.bf16.msra.mxu0 %v3726
    %4895 = vmatprep.subr.bf16.mxu0 0
    %4896 = vmatpush2.bf16.msra.mxu0 %v3741
    %4897 = vmatprep.subr.bf16.mxu0 0
    %4898 = vmatpush2.bf16.msra.mxu0 %v3740
    %4899 = vmatprep.subr.bf16.mxu0 0
    %4900 = vmatpush2.bf16.msra.mxu0 %v3739
    %4901 = vmatprep.subr.bf16.mxu0 0
    %4902 = vmatpush2.bf16.msra.mxu0 %v3738
    %4903 = vmatprep.subr.bf16.mxu0 0
    %4904 = vmatpush2.bf16.msra.mxu0 %v3737
    %4905 = vmatprep.subr.bf16.mxu0 0
    %4906 = vmatpush2.bf16.msra.mxu0 %v3736
    %4907 = vmatprep.subr.bf16.mxu0 0
    %4908 = vmatpush2.bf16.msra.mxu0 %v3735
    %4909 = vmatprep.subr.bf16.mxu0 0
    %4910 = vmatpush2.bf16.msra.mxu0 %v3734
    %4911 = vmatprep.mubr.bf16.mxu0 %v808
    %4912 = vmatmul.mubr.bf16.gmra.mxu0 %v807
    %v4913 = vpop.f32.mrf.mxu0
    %v4914 = vadd.f32 %v4874, %v4913
    %v4915 = vpop.f32.mrf.mxu0
    %v4916 = vpop.f32.mrf.mxu0
    %v4917 = vpop.f32.mrf.mxu0
    %4918 = vdwg.mxu0
    %4919 = vmatprep.subr.bf16.mxu0 0
    %4920 = vmatpush1.bf16.msra.mxu0 %v3749
    %4921 = vmatprep.subr.bf16.mxu0 0
    %4922 = vmatpush1.bf16.msra.mxu0 %v3748
    %4923 = vmatprep.subr.bf16.mxu0 0
    %4924 = vmatpush1.bf16.msra.mxu0 %v3747
    %4925 = vmatprep.subr.bf16.mxu0 0
    %4926 = vmatpush1.bf16.msra.mxu0 %v3746
    %4927 = vmatprep.subr.bf16.mxu0 0
    %4928 = vmatpush1.bf16.msra.mxu0 %v3745
    %4929 = vmatprep.subr.bf16.mxu0 0
    %4930 = vmatpush1.bf16.msra.mxu0 %v3744
    %4931 = vmatprep.subr.bf16.mxu0 0
    %4932 = vmatpush1.bf16.msra.mxu0 %v3743
    %4933 = vmatprep.subr.bf16.mxu0 0
    %4934 = vmatpush1.bf16.msra.mxu0 %v3742
    %4935 = vmatprep.subr.bf16.mxu0 0
    %4936 = vmatpush2.bf16.msra.mxu0 %v3757
    %4937 = vmatprep.subr.bf16.mxu0 0
    %4938 = vmatpush2.bf16.msra.mxu0 %v3756
    %4939 = vmatprep.subr.bf16.mxu0 0
    %4940 = vmatpush2.bf16.msra.mxu0 %v3755
    %4941 = vmatprep.subr.bf16.mxu0 0
    %4942 = vmatpush2.bf16.msra.mxu0 %v3754
    %4943 = vmatprep.subr.bf16.mxu0 0
    %4944 = vmatpush2.bf16.msra.mxu0 %v3753
    %4945 = vmatprep.subr.bf16.mxu0 0
    %4946 = vmatpush2.bf16.msra.mxu0 %v3752
    %4947 = vmatprep.subr.bf16.mxu0 0
    %4948 = vmatpush2.bf16.msra.mxu0 %v3751
    %4949 = vmatprep.subr.bf16.mxu0 0
    %4950 = vmatpush2.bf16.msra.mxu0 %v3750
    %4951 = vmatprep.mubr.bf16.mxu0 %v810
    %4952 = vmatmul.mubr.bf16.gmra.mxu0 %v809
    %v4953 = vpop.f32.mrf.mxu0
    %v4954 = vadd.f32 %v4914, %v4953
    %v4955 = vpop.f32.mrf.mxu0
    %v4956 = vpop.f32.mrf.mxu0
    %v4957 = vpop.f32.mrf.mxu0
    %4958 = vdwg.mxu0
    %4959 = vmatprep.subr.bf16.mxu0 0
    %4960 = vmatpush1.bf16.msra.mxu0 %v3765
    %4961 = vmatprep.subr.bf16.mxu0 0
    %4962 = vmatpush1.bf16.msra.mxu0 %v3764
    %4963 = vmatprep.subr.bf16.mxu0 0
    %4964 = vmatpush1.bf16.msra.mxu0 %v3763
    %4965 = vmatprep.subr.bf16.mxu0 0
    %4966 = vmatpush1.bf16.msra.mxu0 %v3762
    %4967 = vmatprep.subr.bf16.mxu0 0
    %4968 = vmatpush1.bf16.msra.mxu0 %v3761
    %4969 = vmatprep.subr.bf16.mxu0 0
    %4970 = vmatpush1.bf16.msra.mxu0 %v3760
    %4971 = vmatprep.subr.bf16.mxu0 0
    %4972 = vmatpush1.bf16.msra.mxu0 %v3759
    %4973 = vmatprep.subr.bf16.mxu0 0
    %4974 = vmatpush1.bf16.msra.mxu0 %v3758
    %4975 = vmatprep.subr.bf16.mxu0 0
    %4976 = vmatpush2.bf16.msra.mxu0 %v3773
    %4977 = vmatprep.subr.bf16.mxu0 0
    %4978 = vmatpush2.bf16.msra.mxu0 %v3772
    %4979 = vmatprep.subr.bf16.mxu0 0
    %4980 = vmatpush2.bf16.msra.mxu0 %v3771
    %4981 = vmatprep.subr.bf16.mxu0 0
    %4982 = vmatpush2.bf16.msra.mxu0 %v3770
    %4983 = vmatprep.subr.bf16.mxu0 0
    %4984 = vmatpush2.bf16.msra.mxu0 %v3769
    %4985 = vmatprep.subr.bf16.mxu0 0
    %4986 = vmatpush2.bf16.msra.mxu0 %v3768
    %4987 = vmatprep.subr.bf16.mxu0 0
    %4988 = vmatpush2.bf16.msra.mxu0 %v3767
    %4989 = vmatprep.subr.bf16.mxu0 0
    %4990 = vmatpush2.bf16.msra.mxu0 %v3766
    %4991 = vmatprep.mubr.bf16.mxu0 %v812
    %4992 = vmatmul.mubr.bf16.gmra.mxu0 %v811
    %v4993 = vpop.f32.mrf.mxu0
    %v4994 = vadd.f32 %v4954, %v4993
    %v4995 = vpop.f32.mrf.mxu0
    %v4996 = vpop.f32.mrf.mxu0
    %v4997 = vpop.f32.mrf.mxu0
    %4998 = vdwg.mxu0
    %4999 = vmatprep.subr.bf16.mxu0 0
    %5000 = vmatpush1.bf16.msra.mxu0 %v3781
    %5001 = vmatprep.subr.bf16.mxu0 0
    %5002 = vmatpush1.bf16.msra.mxu0 %v3780
    %5003 = vmatprep.subr.bf16.mxu0 0
    %5004 = vmatpush1.bf16.msra.mxu0 %v3779
    %5005 = vmatprep.subr.bf16.mxu0 0
    %5006 = vmatpush1.bf16.msra.mxu0 %v3778
    %5007 = vmatprep.subr.bf16.mxu0 0
    %5008 = vmatpush1.bf16.msra.mxu0 %v3777
    %5009 = vmatprep.subr.bf16.mxu0 0
    %5010 = vmatpush1.bf16.msra.mxu0 %v3776
    %5011 = vmatprep.subr.bf16.mxu0 0
    %5012 = vmatpush1.bf16.msra.mxu0 %v3775
    %5013 = vmatprep.subr.bf16.mxu0 0
    %5014 = vmatpush1.bf16.msra.mxu0 %v3774
    %5015 = vmatprep.subr.bf16.mxu0 0
    %5016 = vmatpush2.bf16.msra.mxu0 %v3789
    %5017 = vmatprep.subr.bf16.mxu0 0
    %5018 = vmatpush2.bf16.msra.mxu0 %v3788
    %5019 = vmatprep.subr.bf16.mxu0 0
    %5020 = vmatpush2.bf16.msra.mxu0 %v3787
    %5021 = vmatprep.subr.bf16.mxu0 0
    %5022 = vmatpush2.bf16.msra.mxu0 %v3786
    %5023 = vmatprep.subr.bf16.mxu0 0
    %5024 = vmatpush2.bf16.msra.mxu0 %v3785
    %5025 = vmatprep.subr.bf16.mxu0 0
    %5026 = vmatpush2.bf16.msra.mxu0 %v3784
    %5027 = vmatprep.subr.bf16.mxu0 0
    %5028 = vmatpush2.bf16.msra.mxu0 %v3783
    %5029 = vmatprep.subr.bf16.mxu0 0
    %5030 = vmatpush2.bf16.msra.mxu0 %v3782
    %5031 = vmatprep.mubr.bf16.mxu0 %v814
    %5032 = vmatmul.mubr.bf16.gmra.mxu0 %v813
    %v5033 = vpop.f32.mrf.mxu0
    %v5034 = vadd.f32 %v4994, %v5033
    %v5035 = vpop.f32.mrf.mxu0
    %v5036 = vpop.f32.mrf.mxu0
    %v5037 = vpop.f32.mrf.mxu0
    %5038 = vdwg.mxu0
    %5039 = vmatprep.subr.bf16.mxu0 0
    %5040 = vmatpush1.bf16.msra.mxu0 %v3797
    %5041 = vmatprep.subr.bf16.mxu0 0
    %5042 = vmatpush1.bf16.msra.mxu0 %v3796
    %5043 = vmatprep.subr.bf16.mxu0 0
    %5044 = vmatpush1.bf16.msra.mxu0 %v3795
    %5045 = vmatprep.subr.bf16.mxu0 0
    %5046 = vmatpush1.bf16.msra.mxu0 %v3794
    %5047 = vmatprep.subr.bf16.mxu0 0
    %5048 = vmatpush1.bf16.msra.mxu0 %v3793
    %5049 = vmatprep.subr.bf16.mxu0 0
    %5050 = vmatpush1.bf16.msra.mxu0 %v3792
    %5051 = vmatprep.subr.bf16.mxu0 0
    %5052 = vmatpush1.bf16.msra.mxu0 %v3791
    %5053 = vmatprep.subr.bf16.mxu0 0
    %5054 = vmatpush1.bf16.msra.mxu0 %v3790
    %5055 = vmatprep.subr.bf16.mxu0 0
    %5056 = vmatpush2.bf16.msra.mxu0 %v3805
    %5057 = vmatprep.subr.bf16.mxu0 0
    %5058 = vmatpush2.bf16.msra.mxu0 %v3804
    %5059 = vmatprep.subr.bf16.mxu0 0
    %5060 = vmatpush2.bf16.msra.mxu0 %v3803
    %5061 = vmatprep.subr.bf16.mxu0 0
    %5062 = vmatpush2.bf16.msra.mxu0 %v3802
    %5063 = vmatprep.subr.bf16.mxu0 0
    %5064 = vmatpush2.bf16.msra.mxu0 %v3801
    %5065 = vmatprep.subr.bf16.mxu0 0
    %5066 = vmatpush2.bf16.msra.mxu0 %v3800
    %5067 = vmatprep.subr.bf16.mxu0 0
    %5068 = vmatpush2.bf16.msra.mxu0 %v3799
    %5069 = vmatprep.subr.bf16.mxu0 0
    %5070 = vmatpush2.bf16.msra.mxu0 %v3798
    %5071 = vmatprep.mubr.bf16.mxu0 %v816
    %5072 = vmatmul.mubr.bf16.gmra.mxu0 %v815
    %v5073 = vpop.f32.mrf.mxu0
    %v5074 = vadd.f32 %v5034, %v5073
    %v5075 = vpop.f32.mrf.mxu0
    %v5076 = vpop.f32.mrf.mxu0
    %v5077 = vpop.f32.mrf.mxu0
    %5078 = vdwg.mxu0
    %5079 = vmatprep.subr.bf16.mxu0 0
    %5080 = vmatpush1.bf16.msra.mxu0 %v3813
    %5081 = vmatprep.subr.bf16.mxu0 0
    %5082 = vmatpush1.bf16.msra.mxu0 %v3812
    %5083 = vmatprep.subr.bf16.mxu0 0
    %5084 = vmatpush1.bf16.msra.mxu0 %v3811
    %5085 = vmatprep.subr.bf16.mxu0 0
    %5086 = vmatpush1.bf16.msra.mxu0 %v3810
    %5087 = vmatprep.subr.bf16.mxu0 0
    %5088 = vmatpush1.bf16.msra.mxu0 %v3809
    %5089 = vmatprep.subr.bf16.mxu0 0
    %5090 = vmatpush1.bf16.msra.mxu0 %v3808
    %5091 = vmatprep.subr.bf16.mxu0 0
    %5092 = vmatpush1.bf16.msra.mxu0 %v3807
    %5093 = vmatprep.subr.bf16.mxu0 0
    %5094 = vmatpush1.bf16.msra.mxu0 %v3806
    %5095 = vmatprep.subr.bf16.mxu0 0
    %5096 = vmatpush2.bf16.msra.mxu0 %v3821
    %5097 = vmatprep.subr.bf16.mxu0 0
    %5098 = vmatpush2.bf16.msra.mxu0 %v3820
    %5099 = vmatprep.subr.bf16.mxu0 0
    %5100 = vmatpush2.bf16.msra.mxu0 %v3819
    %5101 = vmatprep.subr.bf16.mxu0 0
    %5102 = vmatpush2.bf16.msra.mxu0 %v3818
    %5103 = vmatprep.subr.bf16.mxu0 0
    %5104 = vmatpush2.bf16.msra.mxu0 %v3817
    %5105 = vmatprep.subr.bf16.mxu0 0
    %5106 = vmatpush2.bf16.msra.mxu0 %v3816
    %5107 = vmatprep.subr.bf16.mxu0 0
    %5108 = vmatpush2.bf16.msra.mxu0 %v3815
    %5109 = vmatprep.subr.bf16.mxu0 0
    %5110 = vmatpush2.bf16.msra.mxu0 %v3814
    %5111 = vmatprep.mubr.bf16.mxu0 %v818
    %5112 = vmatmul.mubr.bf16.gmra.mxu0 %v817
    %v5113 = vpop.f32.mrf.mxu0
    %v5114 = vadd.f32 %v5074, %v5113
    %v5115 = vpop.f32.mrf.mxu0
    %v5116 = vpop.f32.mrf.mxu0
    %v5117 = vpop.f32.mrf.mxu0
    %5118 = vdwg.mxu0
    %5119 = vmatprep.subr.bf16.mxu0 0
    %5120 = vmatpush1.bf16.msra.mxu0 %v3829
    %5121 = vmatprep.subr.bf16.mxu0 0
    %5122 = vmatpush1.bf16.msra.mxu0 %v3828
    %5123 = vmatprep.subr.bf16.mxu0 0
    %5124 = vmatpush1.bf16.msra.mxu0 %v3827
    %5125 = vmatprep.subr.bf16.mxu0 0
    %5126 = vmatpush1.bf16.msra.mxu0 %v3826
    %5127 = vmatprep.subr.bf16.mxu0 0
    %5128 = vmatpush1.bf16.msra.mxu0 %v3825
    %5129 = vmatprep.subr.bf16.mxu0 0
    %5130 = vmatpush1.bf16.msra.mxu0 %v3824
    %5131 = vmatprep.subr.bf16.mxu0 0
    %5132 = vmatpush1.bf16.msra.mxu0 %v3823
    %5133 = vmatprep.subr.bf16.mxu0 0
    %5134 = vmatpush1.bf16.msra.mxu0 %v3822
    %5135 = vmatprep.subr.bf16.mxu0 0
    %5136 = vmatpush2.bf16.msra.mxu0 %v3837
    %5137 = vmatprep.subr.bf16.mxu0 0
    %5138 = vmatpush2.bf16.msra.mxu0 %v3836
    %5139 = vmatprep.subr.bf16.mxu0 0
    %5140 = vmatpush2.bf16.msra.mxu0 %v3835
    %5141 = vmatprep.subr.bf16.mxu0 0
    %5142 = vmatpush2.bf16.msra.mxu0 %v3834
    %5143 = vmatprep.subr.bf16.mxu0 0
    %5144 = vmatpush2.bf16.msra.mxu0 %v3833
    %5145 = vmatprep.subr.bf16.mxu0 0
    %5146 = vmatpush2.bf16.msra.mxu0 %v3832
    %5147 = vmatprep.subr.bf16.mxu0 0
    %5148 = vmatpush2.bf16.msra.mxu0 %v3831
    %5149 = vmatprep.subr.bf16.mxu0 0
    %5150 = vmatpush2.bf16.msra.mxu0 %v3830
    %5151 = vmatprep.mubr.bf16.mxu0 %v820
    %5152 = vmatmul.mubr.bf16.gmra.mxu0 %v819
    %v5153 = vpop.f32.mrf.mxu0
    %v5154 = vadd.f32 %v5114, %v5153
    %v5155 = vpop.f32.mrf.mxu0
    %v5156 = vpop.f32.mrf.mxu0
    %v5157 = vpop.f32.mrf.mxu0
    %5158 = vdwg.mxu0
    %5159 = vmatprep.subr.bf16.mxu0 0
    %5160 = vmatpush1.bf16.msra.mxu0 %v3845
    %5161 = vmatprep.subr.bf16.mxu0 0
    %5162 = vmatpush1.bf16.msra.mxu0 %v3844
    %5163 = vmatprep.subr.bf16.mxu0 0
    %5164 = vmatpush1.bf16.msra.mxu0 %v3843
    %5165 = vmatprep.subr.bf16.mxu0 0
    %5166 = vmatpush1.bf16.msra.mxu0 %v3842
    %5167 = vmatprep.subr.bf16.mxu0 0
    %5168 = vmatpush1.bf16.msra.mxu0 %v3841
    %5169 = vmatprep.subr.bf16.mxu0 0
    %5170 = vmatpush1.bf16.msra.mxu0 %v3840
    %5171 = vmatprep.subr.bf16.mxu0 0
    %5172 = vmatpush1.bf16.msra.mxu0 %v3839
    %5173 = vmatprep.subr.bf16.mxu0 0
    %5174 = vmatpush1.bf16.msra.mxu0 %v3838
    %5175 = vmatprep.subr.bf16.mxu0 0
    %5176 = vmatpush2.bf16.msra.mxu0 %v3853
    %5177 = vmatprep.subr.bf16.mxu0 0
    %5178 = vmatpush2.bf16.msra.mxu0 %v3852
    %5179 = vmatprep.subr.bf16.mxu0 0
    %5180 = vmatpush2.bf16.msra.mxu0 %v3851
    %5181 = vmatprep.subr.bf16.mxu0 0
    %5182 = vmatpush2.bf16.msra.mxu0 %v3850
    %5183 = vmatprep.subr.bf16.mxu0 0
    %5184 = vmatpush2.bf16.msra.mxu0 %v3849
    %5185 = vmatprep.subr.bf16.mxu0 0
    %5186 = vmatpush2.bf16.msra.mxu0 %v3848
    %5187 = vmatprep.subr.bf16.mxu0 0
    %5188 = vmatpush2.bf16.msra.mxu0 %v3847
    %5189 = vmatprep.subr.bf16.mxu0 0
    %5190 = vmatpush2.bf16.msra.mxu0 %v3846
    %5191 = vmatprep.mubr.bf16.mxu0 %v822
    %5192 = vmatmul.mubr.bf16.gmra.mxu0 %v821
    %v5193 = vpop.f32.mrf.mxu0
    %v5194 = vadd.f32 %v5154, %v5193
    %v5195 = vpop.f32.mrf.mxu0
    %v5196 = vpop.f32.mrf.mxu0
    %v5197 = vpop.f32.mrf.mxu0
    %5198 = vdwg.mxu0
    %5199 = vmatprep.subr.bf16.mxu0 0
    %5200 = vmatpush1.bf16.msra.mxu0 %v3861
    %5201 = vmatprep.subr.bf16.mxu0 0
    %5202 = vmatpush1.bf16.msra.mxu0 %v3860
    %5203 = vmatprep.subr.bf16.mxu0 0
    %5204 = vmatpush1.bf16.msra.mxu0 %v3859
    %5205 = vmatprep.subr.bf16.mxu0 0
    %5206 = vmatpush1.bf16.msra.mxu0 %v3858
    %5207 = vmatprep.subr.bf16.mxu0 0
    %5208 = vmatpush1.bf16.msra.mxu0 %v3857
    %5209 = vmatprep.subr.bf16.mxu0 0
    %5210 = vmatpush1.bf16.msra.mxu0 %v3856
    %5211 = vmatprep.subr.bf16.mxu0 0
    %5212 = vmatpush1.bf16.msra.mxu0 %v3855
    %5213 = vmatprep.subr.bf16.mxu0 0
    %5214 = vmatpush1.bf16.msra.mxu0 %v3854
    %5215 = vmatprep.subr.bf16.mxu0 0
    %5216 = vmatpush2.bf16.msra.mxu0 %v3869
    %5217 = vmatprep.subr.bf16.mxu0 0
    %5218 = vmatpush2.bf16.msra.mxu0 %v3868
    %5219 = vmatprep.subr.bf16.mxu0 0
    %5220 = vmatpush2.bf16.msra.mxu0 %v3867
    %5221 = vmatprep.subr.bf16.mxu0 0
    %5222 = vmatpush2.bf16.msra.mxu0 %v3866
    %5223 = vmatprep.subr.bf16.mxu0 0
    %5224 = vmatpush2.bf16.msra.mxu0 %v3865
    %5225 = vmatprep.subr.bf16.mxu0 0
    %5226 = vmatpush2.bf16.msra.mxu0 %v3864
    %5227 = vmatprep.subr.bf16.mxu0 0
    %5228 = vmatpush2.bf16.msra.mxu0 %v3863
    %5229 = vmatprep.subr.bf16.mxu0 0
    %5230 = vmatpush2.bf16.msra.mxu0 %v3862
    %5231 = vmatprep.mubr.bf16.mxu0 %v824
    %5232 = vmatmul.mubr.bf16.gmra.mxu0 %v823
    %v5233 = vpop.f32.mrf.mxu0
    %v5234 = vadd.f32 %v5194, %v5233
    %v5235 = vpop.f32.mrf.mxu0
    %v5236 = vpop.f32.mrf.mxu0
    %v5237 = vpop.f32.mrf.mxu0
    %5238 = vdwg.mxu0
    %5239 = vmatprep.subr.bf16.mxu0 0
    %5240 = vmatpush1.bf16.msra.mxu0 %v3877
    %5241 = vmatprep.subr.bf16.mxu0 0
    %5242 = vmatpush1.bf16.msra.mxu0 %v3876
    %5243 = vmatprep.subr.bf16.mxu0 0
    %5244 = vmatpush1.bf16.msra.mxu0 %v3875
    %5245 = vmatprep.subr.bf16.mxu0 0
    %5246 = vmatpush1.bf16.msra.mxu0 %v3874
    %5247 = vmatprep.subr.bf16.mxu0 0
    %5248 = vmatpush1.bf16.msra.mxu0 %v3873
    %5249 = vmatprep.subr.bf16.mxu0 0
    %5250 = vmatpush1.bf16.msra.mxu0 %v3872
    %5251 = vmatprep.subr.bf16.mxu0 0
    %5252 = vmatpush1.bf16.msra.mxu0 %v3871
    %5253 = vmatprep.subr.bf16.mxu0 0
    %5254 = vmatpush1.bf16.msra.mxu0 %v3870
    %5255 = vmatprep.subr.bf16.mxu0 0
    %5256 = vmatpush2.bf16.msra.mxu0 %v3885
    %5257 = vmatprep.subr.bf16.mxu0 0
    %5258 = vmatpush2.bf16.msra.mxu0 %v3884
    %5259 = vmatprep.subr.bf16.mxu0 0
    %5260 = vmatpush2.bf16.msra.mxu0 %v3883
    %5261 = vmatprep.subr.bf16.mxu0 0
    %5262 = vmatpush2.bf16.msra.mxu0 %v3882
    %5263 = vmatprep.subr.bf16.mxu0 0
    %5264 = vmatpush2.bf16.msra.mxu0 %v3881
    %5265 = vmatprep.subr.bf16.mxu0 0
    %5266 = vmatpush2.bf16.msra.mxu0 %v3880
    %5267 = vmatprep.subr.bf16.mxu0 0
    %5268 = vmatpush2.bf16.msra.mxu0 %v3879
    %5269 = vmatprep.subr.bf16.mxu0 0
    %5270 = vmatpush2.bf16.msra.mxu0 %v3878
    %5271 = vmatprep.mubr.bf16.mxu0 %v826
    %5272 = vmatmul.mubr.bf16.gmra.mxu0 %v825
    %v5273 = vpop.f32.mrf.mxu0
    %v5274 = vadd.f32 %v5234, %v5273
    %v5275 = vpop.f32.mrf.mxu0
    %v5276 = vpop.f32.mrf.mxu0
    %v5277 = vpop.f32.mrf.mxu0
    %5278 = vdwg.mxu0
    %5279 = vmatprep.subr.bf16.mxu0 0
    %5280 = vmatpush1.bf16.msra.mxu0 %v3893
    %5281 = vmatprep.subr.bf16.mxu0 0
    %5282 = vmatpush1.bf16.msra.mxu0 %v3892
    %5283 = vmatprep.subr.bf16.mxu0 0
    %5284 = vmatpush1.bf16.msra.mxu0 %v3891
    %5285 = vmatprep.subr.bf16.mxu0 0
    %5286 = vmatpush1.bf16.msra.mxu0 %v3890
    %5287 = vmatprep.subr.bf16.mxu0 0
    %5288 = vmatpush1.bf16.msra.mxu0 %v3889
    %5289 = vmatprep.subr.bf16.mxu0 0
    %5290 = vmatpush1.bf16.msra.mxu0 %v3888
    %5291 = vmatprep.subr.bf16.mxu0 0
    %5292 = vmatpush1.bf16.msra.mxu0 %v3887
    %5293 = vmatprep.subr.bf16.mxu0 0
    %5294 = vmatpush1.bf16.msra.mxu0 %v3886
    %5295 = vmatprep.subr.bf16.mxu0 0
    %5296 = vmatpush2.bf16.msra.mxu0 %v3901
    %5297 = vmatprep.subr.bf16.mxu0 0
    %5298 = vmatpush2.bf16.msra.mxu0 %v3900
    %5299 = vmatprep.subr.bf16.mxu0 0
    %5300 = vmatpush2.bf16.msra.mxu0 %v3899
    %5301 = vmatprep.subr.bf16.mxu0 0
    %5302 = vmatpush2.bf16.msra.mxu0 %v3898
    %5303 = vmatprep.subr.bf16.mxu0 0
    %5304 = vmatpush2.bf16.msra.mxu0 %v3897
    %5305 = vmatprep.subr.bf16.mxu0 0
    %5306 = vmatpush2.bf16.msra.mxu0 %v3896
    %5307 = vmatprep.subr.bf16.mxu0 0
    %5308 = vmatpush2.bf16.msra.mxu0 %v3895
    %5309 = vmatprep.subr.bf16.mxu0 0
    %5310 = vmatpush2.bf16.msra.mxu0 %v3894
    %5311 = vmatprep.mubr.bf16.mxu0 %v828
    %5312 = vmatmul.mubr.bf16.gmra.mxu0 %v827
    %v5313 = vpop.f32.mrf.mxu0
    %v5314 = vadd.f32 %v5274, %v5313
    %v5315 = vpop.f32.mrf.mxu0
    %v5316 = vpop.f32.mrf.mxu0
    %v5317 = vpop.f32.mrf.mxu0
    %5318 = vdwg.mxu0
    %5319 = vmatprep.subr.bf16.mxu0 0
    %5320 = vmatpush1.bf16.msra.mxu0 %v3909
    %5321 = vmatprep.subr.bf16.mxu0 0
    %5322 = vmatpush1.bf16.msra.mxu0 %v3908
    %5323 = vmatprep.subr.bf16.mxu0 0
    %5324 = vmatpush1.bf16.msra.mxu0 %v3907
    %5325 = vmatprep.subr.bf16.mxu0 0
    %5326 = vmatpush1.bf16.msra.mxu0 %v3906
    %5327 = vmatprep.subr.bf16.mxu0 0
    %5328 = vmatpush1.bf16.msra.mxu0 %v3905
    %5329 = vmatprep.subr.bf16.mxu0 0
    %5330 = vmatpush1.bf16.msra.mxu0 %v3904
    %5331 = vmatprep.subr.bf16.mxu0 0
    %5332 = vmatpush1.bf16.msra.mxu0 %v3903
    %5333 = vmatprep.subr.bf16.mxu0 0
    %5334 = vmatpush1.bf16.msra.mxu0 %v3902
    %5335 = vmatprep.subr.bf16.mxu0 0
    %5336 = vmatpush2.bf16.msra.mxu0 %v3917
    %5337 = vmatprep.subr.bf16.mxu0 0
    %5338 = vmatpush2.bf16.msra.mxu0 %v3916
    %5339 = vmatprep.subr.bf16.mxu0 0
    %5340 = vmatpush2.bf16.msra.mxu0 %v3915
    %5341 = vmatprep.subr.bf16.mxu0 0
    %5342 = vmatpush2.bf16.msra.mxu0 %v3914
    %5343 = vmatprep.subr.bf16.mxu0 0
    %5344 = vmatpush2.bf16.msra.mxu0 %v3913
    %5345 = vmatprep.subr.bf16.mxu0 0
    %5346 = vmatpush2.bf16.msra.mxu0 %v3912
    %5347 = vmatprep.subr.bf16.mxu0 0
    %5348 = vmatpush2.bf16.msra.mxu0 %v3911
    %5349 = vmatprep.subr.bf16.mxu0 0
    %5350 = vmatpush2.bf16.msra.mxu0 %v3910
    %5351 = vmatprep.mubr.bf16.mxu0 %v830
    %5352 = vmatmul.mubr.bf16.gmra.mxu0 %v829
    %v5353 = vpop.f32.mrf.mxu0
    %v5354 = vadd.f32 %v5314, %v5353
    %v5355 = vpop.f32.mrf.mxu0
    %v5356 = vpop.f32.mrf.mxu0
    %v5357 = vpop.f32.mrf.mxu0
    %5358 = vdwg.mxu0
    %5359 = vmatprep.subr.bf16.mxu0 0
    %5360 = vmatpush1.bf16.msra.mxu0 %v3925
    %5361 = vmatprep.subr.bf16.mxu0 0
    %5362 = vmatpush1.bf16.msra.mxu0 %v3924
    %5363 = vmatprep.subr.bf16.mxu0 0
    %5364 = vmatpush1.bf16.msra.mxu0 %v3923
    %5365 = vmatprep.subr.bf16.mxu0 0
    %5366 = vmatpush1.bf16.msra.mxu0 %v3922
    %5367 = vmatprep.subr.bf16.mxu0 0
    %5368 = vmatpush1.bf16.msra.mxu0 %v3921
    %5369 = vmatprep.subr.bf16.mxu0 0
    %5370 = vmatpush1.bf16.msra.mxu0 %v3920
    %5371 = vmatprep.subr.bf16.mxu0 0
    %5372 = vmatpush1.bf16.msra.mxu0 %v3919
    %5373 = vmatprep.subr.bf16.mxu0 0
    %5374 = vmatpush1.bf16.msra.mxu0 %v3918
    %5375 = vmatprep.subr.bf16.mxu0 0
    %5376 = vmatpush2.bf16.msra.mxu0 %v3933
    %5377 = vmatprep.subr.bf16.mxu0 0
    %5378 = vmatpush2.bf16.msra.mxu0 %v3932
    %5379 = vmatprep.subr.bf16.mxu0 0
    %5380 = vmatpush2.bf16.msra.mxu0 %v3931
    %5381 = vmatprep.subr.bf16.mxu0 0
    %5382 = vmatpush2.bf16.msra.mxu0 %v3930
    %5383 = vmatprep.subr.bf16.mxu0 0
    %5384 = vmatpush2.bf16.msra.mxu0 %v3929
    %5385 = vmatprep.subr.bf16.mxu0 0
    %5386 = vmatpush2.bf16.msra.mxu0 %v3928
    %5387 = vmatprep.subr.bf16.mxu0 0
    %5388 = vmatpush2.bf16.msra.mxu0 %v3927
    %5389 = vmatprep.subr.bf16.mxu0 0
    %5390 = vmatpush2.bf16.msra.mxu0 %v3926
    %5391 = vmatprep.mubr.bf16.mxu0 %v832
    %5392 = vmatmul.mubr.bf16.gmra.mxu0 %v831
    %v5393 = vpop.f32.mrf.mxu0
    %v5394 = vadd.f32 %v5354, %v5393
    %v5395 = vpop.f32.mrf.mxu0
    %v5396 = vpop.f32.mrf.mxu0
    %v5397 = vpop.f32.mrf.mxu0
    %5398 = vdwg.mxu0
    %5399 = vmatprep.subr.bf16.mxu0 0
    %5400 = vmatpush1.bf16.msra.mxu0 %v3941
    %5401 = vmatprep.subr.bf16.mxu0 0
    %5402 = vmatpush1.bf16.msra.mxu0 %v3940
    %5403 = vmatprep.subr.bf16.mxu0 0
    %5404 = vmatpush1.bf16.msra.mxu0 %v3939
    %5405 = vmatprep.subr.bf16.mxu0 0
    %5406 = vmatpush1.bf16.msra.mxu0 %v3938
    %5407 = vmatprep.subr.bf16.mxu0 0
    %5408 = vmatpush1.bf16.msra.mxu0 %v3937
    %5409 = vmatprep.subr.bf16.mxu0 0
    %5410 = vmatpush1.bf16.msra.mxu0 %v3936
    %5411 = vmatprep.subr.bf16.mxu0 0
    %5412 = vmatpush1.bf16.msra.mxu0 %v3935
    %5413 = vmatprep.subr.bf16.mxu0 0
    %5414 = vmatpush1.bf16.msra.mxu0 %v3934
    %5415 = vmatprep.subr.bf16.mxu0 0
    %5416 = vmatpush2.bf16.msra.mxu0 %v3949
    %5417 = vmatprep.subr.bf16.mxu0 0
    %5418 = vmatpush2.bf16.msra.mxu0 %v3948
    %5419 = vmatprep.subr.bf16.mxu0 0
    %5420 = vmatpush2.bf16.msra.mxu0 %v3947
    %5421 = vmatprep.subr.bf16.mxu0 0
    %5422 = vmatpush2.bf16.msra.mxu0 %v3946
    %5423 = vmatprep.subr.bf16.mxu0 0
    %5424 = vmatpush2.bf16.msra.mxu0 %v3945
    %5425 = vmatprep.subr.bf16.mxu0 0
    %5426 = vmatpush2.bf16.msra.mxu0 %v3944
    %5427 = vmatprep.subr.bf16.mxu0 0
    %5428 = vmatpush2.bf16.msra.mxu0 %v3943
    %5429 = vmatprep.subr.bf16.mxu0 0
    %5430 = vmatpush2.bf16.msra.mxu0 %v3942
    %5431 = vmatprep.mubr.bf16.mxu0 %v834
    %5432 = vmatmul.mubr.bf16.gmra.mxu0 %v833
    %v5433 = vpop.f32.mrf.mxu0
    %v5434 = vadd.f32 %v5394, %v5433
    %v5435 = vpop.f32.mrf.mxu0
    %v5436 = vpop.f32.mrf.mxu0
    %v5437 = vpop.f32.mrf.mxu0
    %5438 = vdwg.mxu0
    %5439 = vmatprep.subr.bf16.mxu0 0
    %5440 = vmatpush1.bf16.msra.mxu0 %v3957
    %5441 = vmatprep.subr.bf16.mxu0 0
    %5442 = vmatpush1.bf16.msra.mxu0 %v3956
    %5443 = vmatprep.subr.bf16.mxu0 0
    %5444 = vmatpush1.bf16.msra.mxu0 %v3955
    %5445 = vmatprep.subr.bf16.mxu0 0
    %5446 = vmatpush1.bf16.msra.mxu0 %v3954
    %5447 = vmatprep.subr.bf16.mxu0 0
    %5448 = vmatpush1.bf16.msra.mxu0 %v3953
    %5449 = vmatprep.subr.bf16.mxu0 0
    %5450 = vmatpush1.bf16.msra.mxu0 %v3952
    %5451 = vmatprep.subr.bf16.mxu0 0
    %5452 = vmatpush1.bf16.msra.mxu0 %v3951
    %5453 = vmatprep.subr.bf16.mxu0 0
    %5454 = vmatpush1.bf16.msra.mxu0 %v3950
    %5455 = vmatprep.subr.bf16.mxu0 0
    %5456 = vmatpush2.bf16.msra.mxu0 %v3965
    %5457 = vmatprep.subr.bf16.mxu0 0
    %5458 = vmatpush2.bf16.msra.mxu0 %v3964
    %5459 = vmatprep.subr.bf16.mxu0 0
    %5460 = vmatpush2.bf16.msra.mxu0 %v3963
    %5461 = vmatprep.subr.bf16.mxu0 0
    %5462 = vmatpush2.bf16.msra.mxu0 %v3962
    %5463 = vmatprep.subr.bf16.mxu0 0
    %5464 = vmatpush2.bf16.msra.mxu0 %v3961
    %5465 = vmatprep.subr.bf16.mxu0 0
    %5466 = vmatpush2.bf16.msra.mxu0 %v3960
    %5467 = vmatprep.subr.bf16.mxu0 0
    %5468 = vmatpush2.bf16.msra.mxu0 %v3959
    %5469 = vmatprep.subr.bf16.mxu0 0
    %5470 = vmatpush2.bf16.msra.mxu0 %v3958
    %5471 = vmatprep.mubr.bf16.mxu0 %v836
    %5472 = vmatmul.mubr.bf16.gmra.mxu0 %v835
    %v5473 = vpop.f32.mrf.mxu0
    %v5474 = vadd.f32 %v5434, %v5473
    %v5475 = vpop.f32.mrf.mxu0
    %v5476 = vpop.f32.mrf.mxu0
    %v5477 = vpop.f32.mrf.mxu0
    %5478 = vdwg.mxu0
    %5479 = vmatprep.subr.bf16.mxu0 0
    %5480 = vmatpush1.bf16.msra.mxu0 %v3973
    %5481 = vmatprep.subr.bf16.mxu0 0
    %5482 = vmatpush1.bf16.msra.mxu0 %v3972
    %5483 = vmatprep.subr.bf16.mxu0 0
    %5484 = vmatpush1.bf16.msra.mxu0 %v3971
    %5485 = vmatprep.subr.bf16.mxu0 0
    %5486 = vmatpush1.bf16.msra.mxu0 %v3970
    %5487 = vmatprep.subr.bf16.mxu0 0
    %5488 = vmatpush1.bf16.msra.mxu0 %v3969
    %5489 = vmatprep.subr.bf16.mxu0 0
    %5490 = vmatpush1.bf16.msra.mxu0 %v3968
    %5491 = vmatprep.subr.bf16.mxu0 0
    %5492 = vmatpush1.bf16.msra.mxu0 %v3967
    %5493 = vmatprep.subr.bf16.mxu0 0
    %5494 = vmatpush1.bf16.msra.mxu0 %v3966
    %5495 = vmatprep.subr.bf16.mxu0 0
    %5496 = vmatpush2.bf16.msra.mxu0 %v3981
    %5497 = vmatprep.subr.bf16.mxu0 0
    %5498 = vmatpush2.bf16.msra.mxu0 %v3980
    %5499 = vmatprep.subr.bf16.mxu0 0
    %5500 = vmatpush2.bf16.msra.mxu0 %v3979
    %5501 = vmatprep.subr.bf16.mxu0 0
    %5502 = vmatpush2.bf16.msra.mxu0 %v3978
    %5503 = vmatprep.subr.bf16.mxu0 0
    %5504 = vmatpush2.bf16.msra.mxu0 %v3977
    %5505 = vmatprep.subr.bf16.mxu0 0
    %5506 = vmatpush2.bf16.msra.mxu0 %v3976
    %5507 = vmatprep.subr.bf16.mxu0 0
    %5508 = vmatpush2.bf16.msra.mxu0 %v3975
    %5509 = vmatprep.subr.bf16.mxu0 0
    %5510 = vmatpush2.bf16.msra.mxu0 %v3974
    %5511 = vmatprep.mubr.bf16.mxu0 %v838
    %5512 = vmatmul.mubr.bf16.gmra.mxu0 %v837
    %v5513 = vpop.f32.mrf.mxu0
    %v5514 = vadd.f32 %v5474, %v5513
    %v5515 = vpop.f32.mrf.mxu0
    %v5516 = vpop.f32.mrf.mxu0
    %v5517 = vpop.f32.mrf.mxu0
    %5518 = vdwg.mxu0
    %5519 = vmatprep.subr.bf16.mxu0 0
    %5520 = vmatpush1.bf16.msra.mxu0 %v3989
    %5521 = vmatprep.subr.bf16.mxu0 0
    %5522 = vmatpush1.bf16.msra.mxu0 %v3988
    %5523 = vmatprep.subr.bf16.mxu0 0
    %5524 = vmatpush1.bf16.msra.mxu0 %v3987
    %5525 = vmatprep.subr.bf16.mxu0 0
    %5526 = vmatpush1.bf16.msra.mxu0 %v3986
    %5527 = vmatprep.subr.bf16.mxu0 0
    %5528 = vmatpush1.bf16.msra.mxu0 %v3985
    %5529 = vmatprep.subr.bf16.mxu0 0
    %5530 = vmatpush1.bf16.msra.mxu0 %v3984
    %5531 = vmatprep.subr.bf16.mxu0 0
    %5532 = vmatpush1.bf16.msra.mxu0 %v3983
    %5533 = vmatprep.subr.bf16.mxu0 0
    %5534 = vmatpush1.bf16.msra.mxu0 %v3982
    %5535 = vmatprep.subr.bf16.mxu0 0
    %5536 = vmatpush2.bf16.msra.mxu0 %v3997
    %5537 = vmatprep.subr.bf16.mxu0 0
    %5538 = vmatpush2.bf16.msra.mxu0 %v3996
    %5539 = vmatprep.subr.bf16.mxu0 0
    %5540 = vmatpush2.bf16.msra.mxu0 %v3995
    %5541 = vmatprep.subr.bf16.mxu0 0
    %5542 = vmatpush2.bf16.msra.mxu0 %v3994
    %5543 = vmatprep.subr.bf16.mxu0 0
    %5544 = vmatpush2.bf16.msra.mxu0 %v3993
    %5545 = vmatprep.subr.bf16.mxu0 0
    %5546 = vmatpush2.bf16.msra.mxu0 %v3992
    %5547 = vmatprep.subr.bf16.mxu0 0
    %5548 = vmatpush2.bf16.msra.mxu0 %v3991
    %5549 = vmatprep.subr.bf16.mxu0 0
    %5550 = vmatpush2.bf16.msra.mxu0 %v3990
    %5551 = vmatprep.mubr.bf16.mxu0 %v840
    %5552 = vmatmul.mubr.bf16.gmra.mxu0 %v839
    %v5553 = vpop.f32.mrf.mxu0
    %v5554 = vadd.f32 %v5514, %v5553
    %v5555 = vpop.f32.mrf.mxu0
    %v5556 = vpop.f32.mrf.mxu0
    %v5557 = vpop.f32.mrf.mxu0
    %5558 = vdwg.mxu0
    %5559 = vmatprep.subr.bf16.mxu0 0
    %5560 = vmatpush1.bf16.msra.mxu0 %v4005
    %5561 = vmatprep.subr.bf16.mxu0 0
    %5562 = vmatpush1.bf16.msra.mxu0 %v4004
    %5563 = vmatprep.subr.bf16.mxu0 0
    %5564 = vmatpush1.bf16.msra.mxu0 %v4003
    %5565 = vmatprep.subr.bf16.mxu0 0
    %5566 = vmatpush1.bf16.msra.mxu0 %v4002
    %5567 = vmatprep.subr.bf16.mxu0 0
    %5568 = vmatpush1.bf16.msra.mxu0 %v4001
    %5569 = vmatprep.subr.bf16.mxu0 0
    %5570 = vmatpush1.bf16.msra.mxu0 %v4000
    %5571 = vmatprep.subr.bf16.mxu0 0
    %5572 = vmatpush1.bf16.msra.mxu0 %v3999
    %5573 = vmatprep.subr.bf16.mxu0 0
    %5574 = vmatpush1.bf16.msra.mxu0 %v3998
    %5575 = vmatprep.subr.bf16.mxu0 0
    %5576 = vmatpush2.bf16.msra.mxu0 %v4013
    %5577 = vmatprep.subr.bf16.mxu0 0
    %5578 = vmatpush2.bf16.msra.mxu0 %v4012
    %5579 = vmatprep.subr.bf16.mxu0 0
    %5580 = vmatpush2.bf16.msra.mxu0 %v4011
    %5581 = vmatprep.subr.bf16.mxu0 0
    %5582 = vmatpush2.bf16.msra.mxu0 %v4010
    %5583 = vmatprep.subr.bf16.mxu0 0
    %5584 = vmatpush2.bf16.msra.mxu0 %v4009
    %5585 = vmatprep.subr.bf16.mxu0 0
    %5586 = vmatpush2.bf16.msra.mxu0 %v4008
    %5587 = vmatprep.subr.bf16.mxu0 0
    %5588 = vmatpush2.bf16.msra.mxu0 %v4007
    %5589 = vmatprep.subr.bf16.mxu0 0
    %5590 = vmatpush2.bf16.msra.mxu0 %v4006
    %5591 = vmatprep.mubr.bf16.mxu0 %v842
    %5592 = vmatmul.mubr.bf16.gmra.mxu0 %v841
    %v5593 = vpop.f32.mrf.mxu0
    %v5594 = vadd.f32 %v5554, %v5593
    %v5595 = vpop.f32.mrf.mxu0
    %v5596 = vpop.f32.mrf.mxu0
    %v5597 = vpop.f32.mrf.mxu0
    %5598 = vdwg.mxu0
    %5599 = vmatprep.subr.bf16.mxu0 0
    %5600 = vmatpush1.bf16.msra.mxu0 0
    %5601 = vmatprep.subr.bf16.mxu0 0
    %5602 = vmatpush1.bf16.msra.mxu0 0
    %5603 = vmatprep.subr.bf16.mxu0 0
    %5604 = vmatpush1.bf16.msra.mxu0 0
    %5605 = vmatprep.subr.bf16.mxu0 0
    %5606 = vmatpush1.bf16.msra.mxu0 %v4477
    %5607 = vmatprep.subr.bf16.mxu0 0
    %5608 = vmatpush1.bf16.msra.mxu0 %v4017
    %5609 = vmatprep.subr.bf16.mxu0 0
    %5610 = vmatpush1.bf16.msra.mxu0 %v4016
    %5611 = vmatprep.subr.bf16.mxu0 0
    %5612 = vmatpush1.bf16.msra.mxu0 %v4015
    %5613 = vmatprep.subr.bf16.mxu0 0
    %5614 = vmatpush1.bf16.msra.mxu0 %v4014
    %5615 = vmatprep.subr.bf16.mxu0 0
    %5616 = vmatpush2.bf16.msra.mxu0 0
    %5617 = vmatprep.subr.bf16.mxu0 0
    %5618 = vmatpush2.bf16.msra.mxu0 0
    %5619 = vmatprep.subr.bf16.mxu0 0
    %5620 = vmatpush2.bf16.msra.mxu0 0
    %5621 = vmatprep.subr.bf16.mxu0 0
    %5622 = vmatpush2.bf16.msra.mxu0 0
    %5623 = vmatprep.subr.bf16.mxu0 0
    %5624 = vmatpush2.bf16.msra.mxu0 0
    %5625 = vmatprep.subr.bf16.mxu0 0
    %5626 = vmatpush2.bf16.msra.mxu0 0
    %5627 = vmatprep.subr.bf16.mxu0 0
    %5628 = vmatpush2.bf16.msra.mxu0 0
    %5629 = vmatprep.subr.bf16.mxu0 0
    %5630 = vmatpush2.bf16.msra.mxu0 0
    %5631 = vmatprep.mubr.bf16.mxu0 0
    %5632 = vmatmul.mubr.bf16.gmra.mxu0 %v4473
    %v5633 = vpop.f32.mrf.mxu0
    %v5634 = vadd.f32 %v5594, %v5633
    %v5635 = vpop.f32.mrf.mxu0
    %v5636 = vpop.f32.mrf.mxu0
    %v5637 = vpop.f32.mrf.mxu0
    %5638 = vdwg.mxu0
    %v5639 = vmax.f32 %v5634, 0.0
    %v5640 = vld [vmem:[%s4] sm:$0xff]
    %v5641 = vld [vmem:[%s4 + $0x8] sm:$0xff]
    %v5642 = vld [vmem:[%s4 + $0x10] sm:$0xff]
    %v5643 = vld [vmem:[%s4 + $0x18] sm:$0xff]
    %v5644 = vld [vmem:[%s4 + $0x20] sm:$0xff]
    %v5645 = vld [vmem:[%s4 + $0x28] sm:$0xff]
    %v5646 = vld [vmem:[%s4 + $0x30] sm:$0xff]
    %v5647 = vld [vmem:[%s4 + $0x38] sm:$0xff]
    %v5648 = vld [vmem:[%s4 + $0x40] sm:$0xff]
    %v5649 = vld [vmem:[%s4 + $0x48] sm:$0xff]
    %v5650 = vld [vmem:[%s4 + $0x50] sm:$0xff]
    %v5651 = vld [vmem:[%s4 + $0x58] sm:$0xff]
    %v5652 = vld [vmem:[%s4 + $0x60] sm:$0xff]
    %v5653 = vld [vmem:[%s4 + $0x68] sm:$0xff]
    %v5654 = vld [vmem:[%s4 + $0x70] sm:$0xff]
    %v5655 = vld [vmem:[%s4 + $0x78] sm:$0xff]
    %v5656 = vld [vmem:[%s1] sm:$0xff]
    %v5657 = vld [vmem:[#allocation7] sm:$0x1]
    %5659 = vset.pattern.permute.xlu0 0
    %5660 = vperm.xlu0 %5659, %v5656
    %v5661 = vpop.permute.xlu0 %5660
    %v5664 = vlaneseq
    %v5665 = vshrl.u32 %v5664, 7
    %v5666 = vsub.s32 0, %v5665
    %v5667 = vrot.slane %v5657, %v5666
    %v5669 = vmul.f32 %v5661, %v5667
    %5670 = vmatprep.subr.mxu0 0.0
    %5671 = vmatpush1.msra.mxu0 %v5655
    %5672 = vmatprep.subr.mxu0 0.0
    %5673 = vmatpush1.msra.mxu0 %v5654
    %5674 = vmatprep.subr.mxu0 0.0
    %5675 = vmatpush1.msra.mxu0 %v5653
    %5676 = vmatprep.subr.mxu0 0.0
    %5677 = vmatpush1.msra.mxu0 %v5652
    %5678 = vmatprep.subr.mxu0 0.0
    %5679 = vmatpush1.msra.mxu0 %v5651
    %5680 = vmatprep.subr.mxu0 0.0
    %5681 = vmatpush1.msra.mxu0 %v5650
    %5682 = vmatprep.subr.mxu0 0.0
    %5683 = vmatpush1.msra.mxu0 %v5649
    %5684 = vmatprep.subr.mxu0 0.0
    %5685 = vmatpush1.msra.mxu0 %v5648
    %5686 = vmatprep.subr.mxu0 0.0
    %5687 = vmatpush1.msra.mxu0 %v5647
    %5688 = vmatprep.subr.mxu0 0.0
    %5689 = vmatpush1.msra.mxu0 %v5646
    %5690 = vmatprep.subr.mxu0 0.0
    %5691 = vmatpush1.msra.mxu0 %v5645
    %5692 = vmatprep.subr.mxu0 0.0
    %5693 = vmatpush1.msra.mxu0 %v5644
    %5694 = vmatprep.subr.mxu0 0.0
    %5695 = vmatpush1.msra.mxu0 %v5643
    %5696 = vmatprep.subr.mxu0 0.0
    %5697 = vmatpush1.msra.mxu0 %v5642
    %5698 = vmatprep.subr.mxu0 0.0
    %5699 = vmatpush1.msra.mxu0 %v5641
    %5700 = vmatprep.subr.mxu0 0.0
    %5701 = vmatpush1.msra.mxu0 %v5640
    %5702 = vmatprep.subr.mxu0 0.0
    %5703 = vmatpush2.msra.mxu0 0.0
    %5704 = vmatprep.subr.mxu0 0.0
    %5705 = vmatpush2.msra.mxu0 0.0
    %5706 = vmatprep.subr.mxu0 0.0
    %5707 = vmatpush2.msra.mxu0 0.0
    %5708 = vmatprep.subr.mxu0 0.0
    %5709 = vmatpush2.msra.mxu0 0.0
    %5710 = vmatprep.subr.mxu0 0.0
    %5711 = vmatpush2.msra.mxu0 0.0
    %5712 = vmatprep.subr.mxu0 0.0
    %5713 = vmatpush2.msra.mxu0 0.0
    %5714 = vmatprep.subr.mxu0 0.0
    %5715 = vmatpush2.msra.mxu0 0.0
    %5716 = vmatprep.subr.mxu0 0.0
    %5717 = vmatpush2.msra.mxu0 0.0
    %5718 = vmatprep.subr.mxu0 0.0
    %5719 = vmatpush2.msra.mxu0 0.0
    %5720 = vmatprep.subr.mxu0 0.0
    %5721 = vmatpush2.msra.mxu0 0.0
    %5722 = vmatprep.subr.mxu0 0.0
    %5723 = vmatpush2.msra.mxu0 0.0
    %5724 = vmatprep.subr.mxu0 0.0
    %5725 = vmatpush2.msra.mxu0 0.0
    %5726 = vmatprep.subr.mxu0 0.0
    %5727 = vmatpush2.msra.mxu0 0.0
    %5728 = vmatprep.subr.mxu0 0.0
    %5729 = vmatpush2.msra.mxu0 0.0
    %5730 = vmatprep.subr.mxu0 0.0
    %5731 = vmatpush2.msra.mxu0 0.0
    %5732 = vmatprep.subr.mxu0 0.0
    %5733 = vmatpush2.msra.mxu0 0.0
    %5734 = vmatprep.mubr.f32.mxu0 0.0
    %5735 = vmatmul.mubr.f32.gmra.mxu0 %v5639
    %v5736 = vpop.f32.mrf.mxu0
    %v5737 = vadd.f32 %v5669, %v5736
    %v5738 = vpop.f32.mrf.mxu0
    %5739 = vdwg.mxu0
    %v5740 = vld [vmem:[#allocation9] sm:$0x1]
    %v5742 = vlaneseq
    %v5743 = vshrl.u32 %v5742, 7
    %v5744 = vsub.s32 0, %v5743
    %v5745 = vrot.slane %v5740, %v5744
    %v5747 = vadd.f32 %v5737, %v5745
    %vm5748 = vcmask 72704
    %5749 = vst.msk [vmem:[#allocation10] sm:$0xff] %vm5748, %v5747
    // Predicated region
    $region50: #{multi_input_mlp.1} parent=1 // pred_check
      _
    $region51: #{multi_input_mlp.1} parent=1 // pred_check_branch
      %5751 = sbr.rel (0) target = $region53
    $region52: #{multi_input_mlp.1} parent=1 // pred_region
      // Predicated region
      $region54: #{multi_input_mlp.1} parent=52 // pred_check
        _
      $region55: #{multi_input_mlp.1} parent=52 // pred_check_branch
        %5753 = sbr.rel (0) target = $region57
      $region56: #{multi_input_mlp.1} parent=52 // pred_region
        // Predicated region
        $region58: #{multi_input_mlp.1} parent=56 // pred_check
          _
        $region59: #{multi_input_mlp.1} parent=56 // pred_check_branch
          %5755 = sbr.rel target = $region61
        $region60: #{multi_input_mlp.1} parent=56 // pred_region
          // Predicated region
          $region73: #{multi_input_mlp.1} parent=60 // pred_check
            _
          $region74: #{multi_input_mlp.1} parent=60 // pred_check_branch
            %5771 = sbr.rel (0) target = $region76
          $region75: #{multi_input_mlp.1} parent=60 // pred_region
            %s5773 = ssub.s32 4, 1
            loop: start=0, step=1, limit=1
            $region77: #{multi_input_mlp.1} parent=75 // loop_pre_header
              _
            $region78: #{multi_input_mlp.1} parent=75 // loop_header
              %s5775 = sphi 0, %s5779
              %p5776 = scmp.ge.s32.totalorder %s5775, 1
              %s5780 = sphi [#allocation10], [#allocation10]
              %s5781 = sphi %s7, %s7
            $region79: #{multi_input_mlp.1} parent=75 // loop_header_branch
              %5778 = sbr.rel (%p5776) target = $region83
            $region80: #{multi_input_mlp.1} parent=75 // loop_body
              %v5782 = vld [vmem:[%s5780] sm:%s5773]
              %5783 = vst [vmem:[%s5781] sm:%s5773] %v5782
            $region81: #{multi_input_mlp.1} parent=75 // loop_footer
              %s5779 = sadd.s32 1, %s5775
            $region82: #{multi_input_mlp.1} parent=75 // loop_footer_branch
              %5774 = sbr.rel target = $region78
            $region83: #{multi_input_mlp.1} parent=75 // loop_exit
              _
          $region76: #{multi_input_mlp.1} parent=60 // pred_fallthru
            _
        $region61: #{multi_input_mlp.1} parent=56 // pred_fallthru
          _
        // Predicated region
        $region62: #{multi_input_mlp.1} parent=56 // pred_check
          _
        $region63: #{multi_input_mlp.1} parent=56 // pred_check_branch
          %5757 = sbr.rel (0) target = $region65
        $region64: #{multi_input_mlp.1} parent=56 // pred_region
          %s5759 = ssub.s32 4, 1
          loop: start=0, step=1, limit=1
          $region66: #{multi_input_mlp.1} parent=64 // loop_pre_header
            _
          $region67: #{multi_input_mlp.1} parent=64 // loop_header
            %s5761 = sphi 0, %s5765
            %p5762 = scmp.ge.s32.totalorder %s5761, 1
            %s5766 = sphi [#allocation10], [#allocation10]
            %s5767 = sphi %s7, %s7
          $region68: #{multi_input_mlp.1} parent=64 // loop_header_branch
            %5764 = sbr.rel (%p5762) target = $region72
          $region69: #{multi_input_mlp.1} parent=64 // loop_body
            %v5768 = vld [vmem:[%s5766] sm:%s5759]
            %5769 = vst [vmem:[%s5767] sm:%s5759] %v5768
          $region70: #{multi_input_mlp.1} parent=64 // loop_footer
            %s5765 = sadd.s32 1, %s5761
          $region71: #{multi_input_mlp.1} parent=64 // loop_footer_branch
            %5760 = sbr.rel target = $region67
          $region72: #{multi_input_mlp.1} parent=64 // loop_exit
            _
        $region65: #{multi_input_mlp.1} parent=56 // pred_fallthru
          _
      $region57: #{multi_input_mlp.1} parent=52 // pred_fallthru
        _
      %5784 = vnop
    $region53: #{multi_input_mlp.1} parent=1 // pred_fallthru
      _
    // Predicated region
    $region84: #{multi_input_mlp.1} parent=1 // pred_check
      _
    $region85: #{multi_input_mlp.1} parent=1 // pred_check_branch
      %5786 = sbr.rel (0) target = $region87
    $region86: #{multi_input_mlp.1} parent=1 // pred_region
      _
    $region87: #{multi_input_mlp.1} parent=1 // pred_fallthru
      _
    %5787 = vsyncpa [#allocation3], 1
    %5788 = vsyncpa [#allocation5], 1
    %5789 = vsyncpa [#allocation8], 1

</llo_original>
